<compile_context>
chip_gen: v7x
topology: tpu7x:2x2x1
jax: 0.10.0
libtpu: 0.0.40
codegen_flags: <defaults>
</compile_context>

<pallas_src>
import math
import functools

import jax
import jax.numpy as jnp
from jax.experimental import pallas as pl
from jax.experimental.pallas import tpu as pltpu


def _round_up(x, m):
    return ((x + m - 1) // m) * m


# ----------------------------- in-kernel helpers ---------------------------- #

def _layernorm_rows(x_f32, g, b, eps=1e-5):
    """LayerNorm over the last dim; statistics always in f32."""
    mu = jnp.mean(x_f32, axis=-1, keepdims=True)
    var = jnp.mean(jnp.square(x_f32 - mu), axis=-1, keepdims=True)
    return (x_f32 - mu) * jax.lax.rsqrt(var + eps) * g + b


def _mha_proj(q2, k2, v2, wo, B, Sq, Sk, H, causal):
    """Multi-head attention + fused output projection (no bias).

    q2: (B*Sq, D) bf16, k2/v2: (B*Sk, D) bf16, wo: (D, D) bf16.
    Returns (B*Sq, D) f32 =  concat_heads(attn) @ wo
                          =  sum_h  o_h @ wo[h*Dh:(h+1)*Dh, :]   (no concat).
    """
    D = q2.shape[-1]
    Dh = D // H
    scale = 1.0 / math.sqrt(Dh)
    q = q2.reshape(B, Sq, D)
    k = k2.reshape(B, Sk, D)
    v = v2.reshape(B, Sk, D)

    keep = None
    if causal:
        row = jax.lax.broadcasted_iota(jnp.int32, (Sq, Sk), 0)
        col = jax.lax.broadcasted_iota(jnp.int32, (Sq, Sk), 1)
        keep = (row >= col)[None]          # (1, Sq, Sk): head/batch-invariant

    y = None
    for h in range(H):                     # static unroll over heads
        sl = slice(h * Dh, (h + 1) * Dh)
        s = jnp.einsum('bqd,bkd->bqk', q[..., sl], k[..., sl],
                       preferred_element_type=jnp.float32) * scale
        if causal:
            s = jnp.where(keep, s, -1e30)
        mx = jnp.max(s, axis=-1, keepdims=True)
        p = jnp.exp(s - mx)
        p = p * pl.reciprocal(jnp.sum(p, axis=-1, keepdims=True), approx=True)
        oh = jnp.einsum('bqk,bkd->bqd', p.astype(v.dtype), v[..., sl],
                        preferred_element_type=jnp.float32)       # (B, Sq, Dh)
        contrib = jnp.dot(oh.reshape(B * Sq, Dh).astype(jnp.bfloat16),
                          wo[sl, :], preferred_element_type=jnp.float32)
        y = contrib if y is None else y + contrib
    return y


# ------------------------------ fused kernels ------------------------------- #

def _self_attn_block_kernel(x_ref, wqkv_ref, bqkv_ref, wo_ref, bo_ref,
                            g_ref, b_ref, o_ref, *, B, S, H, causal):
    """LayerNorm(x + SelfAttention(x)) in one kernel (fused QKV + out-proj)."""
    D = x_ref.shape[1]
    x = x_ref[...]                                              # (B*S, D) bf16
    qkv = (jnp.dot(x, wqkv_ref[...], preferred_element_type=jnp.float32)
           + bqkv_ref[...]).astype(jnp.bfloat16)                # (B*S, 3D)
    q2, k2, v2 = qkv[:, :D], qkv[:, D:2 * D], qkv[:, 2 * D:]
    y = _mha_proj(q2, k2, v2, wo_ref[...], B, S, S, H, causal) + bo_ref[...]
    r = x.astype(jnp.float32) + y                               # residual (f32)
    o_ref[...] = _layernorm_rows(r, g_ref[...], b_ref[...]).astype(o_ref.dtype)


def _cross_attn_block_kernel(x_ref, enc_ref, wq_ref, bq_ref, wkv_ref, bkv_ref,
                             wo_ref, bo_ref, g_ref, b_ref, o_ref,
                             *, B, Sq, Sk, H):
    """LayerNorm(x + CrossAttention(x, enc)) in one kernel (fused KV proj)."""
    D = x_ref.shape[1]
    x = x_ref[...]                                              # (B*Sq, D) bf16
    e = enc_ref[...]                                            # (B*Sk, D) bf16
    q2 = (jnp.dot(x, wq_ref[...], preferred_element_type=jnp.float32)
          + bq_ref[...]).astype(jnp.bfloat16)
    kv = (jnp.dot(e, wkv_ref[...], preferred_element_type=jnp.float32)
          + bkv_ref[...]).astype(jnp.bfloat16)                  # (B*Sk, 2D)
    k2, v2 = kv[:, :D], kv[:, D:]
    y = _mha_proj(q2, k2, v2, wo_ref[...], B, Sq, Sk, H,
                  causal=False) + bo_ref[...]
    r = x.astype(jnp.float32) + y
    o_ref[...] = _layernorm_rows(r, g_ref[...], b_ref[...]).astype(o_ref.dtype)


def _ffn_block_kernel(x_ref, w1_ref, b1_ref, w2_ref, b2_ref,
                      g_ref, b_ref, o_ref):
    """LayerNorm(x + relu(x@w1+b1)@w2+b2) in one kernel; hidden h never hits HBM."""
    x = x_ref[...]                                              # (M, D) bf16
    h = jnp.maximum(
        jnp.dot(x, w1_ref[...], preferred_element_type=jnp.float32)
        + b1_ref[...], 0.0)                                     # (M, F) f32
    y = jnp.dot(h.astype(jnp.bfloat16), w2_ref[...],
                preferred_element_type=jnp.float32) + b2_ref[...]
    r = x.astype(jnp.float32) + y
    o_ref[...] = _layernorm_rows(r, g_ref[...], b_ref[...]).astype(o_ref.dtype)


def _linear_kernel(x_ref, w_ref, b_ref, o_ref, *, activation):
    """Full-K linear: no grid reduction axis, no accumulator scratch."""
    y = jnp.dot(x_ref[...], w_ref[...],
                preferred_element_type=jnp.float32) + b_ref[...]
    if activation == "relu":
        y = jnp.maximum(y, 0.0)
    o_ref[...] = y.astype(o_ref.dtype)


def _linear_kernel_ktiled(x_ref, w_ref, b_ref, o_ref, acc_ref, *, activation):
    """Fallback for large K (not used at toy sizes): tiled-K accumulation."""
    @pl.when(pl.program_id(2) == 0)
    def _init():
        acc_ref[...] = jnp.zeros_like(acc_ref)

    acc_ref[...] += jnp.dot(x_ref[...], w_ref[...],
                            preferred_element_type=jnp.float32)

    @pl.when(pl.program_id(2) == pl.num_programs(2) - 1)
    def _finalize():
        y = acc_ref[...] + b_ref[...]
        if activation == "relu":
            y = jnp.maximum(y, 0.0)
        o_ref[...] = y.astype(o_ref.dtype)


# ------------------------------ kernel wrappers ------------------------------ #

def _full_spec(shape):
    nd = len(shape)
    return pl.BlockSpec(tuple(shape), lambda i, _nd=nd: (0,) * _nd)


def _fused_block_call(kernel, out_shape, *args):
    """Single-step pallas_call; every operand is one full VMEM block."""
    return pl.pallas_call(
        kernel,
        out_shape=out_shape,
        grid=(1,),
        in_specs=[_full_spec(a.shape) for a in args],
        out_specs=_full_spec(out_shape.shape),
        compiler_params=pltpu.CompilerParams(
            dimension_semantics=("arbitrary",)),
    )(*args)


def pallas_self_attn_block(x2d, ap, g, b, B, S, H, causal):
    M, D = x2d.shape
    kern = functools.partial(_self_attn_block_kernel,
                             B=B, S=S, H=H, causal=causal)
    return _fused_block_call(
        kern, jax.ShapeDtypeStruct((M, D), jnp.bfloat16),
        x2d, ap["wqkv"], ap["bqkv"], ap["wo"], ap["bo"], g, b)


def pallas_cross_attn_block(x2d, enc2d, ap, g, b, B, Sq, Sk, H):
    M, D = x2d.shape
    kern = functools.partial(_cross_attn_block_kernel, B=B, Sq=Sq, Sk=Sk, H=H)
    return _fused_block_call(
        kern, jax.ShapeDtypeStruct((M, D), jnp.bfloat16),
        x2d, enc2d, ap["wq"], ap["bq"], ap["wkv"], ap["bkv"],
        ap["wo"], ap["bo"], g, b)


def pallas_ffn_block(x2d, fp, g, b):
    M, D = x2d.shape
    return _fused_block_call(
        _ffn_block_kernel, jax.ShapeDtypeStruct((M, D), jnp.bfloat16),
        x2d, fp["w1"], fp["b1"], fp["w2"], fp["b2"], g, b)


def pallas_linear(x2d, w, b2d, activation=None, out_dtype=jnp.float32,
                  tm_max=256, tn_max=256, tk_max=512):
    """y = act(x2d @ w + b). Weights are expected pre-cast/pre-padded (init)."""
    M, K = x2d.shape
    N = w.shape[1]

    tm = min(tm_max, _round_up(M, 8))
    Mp = _round_up(M, tm)
    xp = x2d if Mp == M else jnp.pad(x2d, ((0, Mp - M), (0, 0)))

    if N <= tn_max:
        tn = N                      # full-dim N block (no padding)
    else:
        assert N % tn_max == 0, "pre-pad weights to a tile multiple at init"
        tn = tn_max
    Np = _round_up(N, tn)

    if K <= tk_max:
        # Full-K block: no K grid axis, no accumulator, no pl.when.
        out = pl.pallas_call(
            functools.partial(_linear_kernel, activation=activation),
            out_shape=jax.ShapeDtypeStruct((Mp, Np), out_dtype),
            grid=(Mp // tm, Np // tn),
            in_specs=[pl.BlockSpec((tm, K), lambda i, j: (i, 0)),
                      pl.BlockSpec((K, tn), lambda i, j: (0, j)),
                      pl.BlockSpec((1, tn), lambda i, j: (0, j))],
            out_specs=pl.BlockSpec((tm, tn), lambda i, j: (i, j)),
            compiler_params=pltpu.CompilerParams(
                dimension_semantics=("parallel", "parallel")),
        )(xp, w, b2d)
    else:
        assert K % tk_max == 0, "pre-pad weights to a tile multiple at init"
        tk = tk_max
        out = pl.pallas_call(
            functools.partial(_linear_kernel_ktiled, activation=activation),
            out_shape=jax.ShapeDtypeStruct((Mp, Np), out_dtype),
            grid=(Mp // tm, Np // tn, K // tk),
            in_specs=[pl.BlockSpec((tm, tk), lambda i, j, k: (i, k)),
                      pl.BlockSpec((tk, tn), lambda i, j, k: (k, j)),
                      pl.BlockSpec((1, tn), lambda i, j, k: (0, j))],
            out_specs=pl.BlockSpec((tm, tn), lambda i, j, k: (i, j)),
            scratch_shapes=[pltpu.VMEM((tm, tn), jnp.float32)],
            compiler_params=pltpu.CompilerParams(
                dimension_semantics=("parallel", "parallel", "arbitrary")),
        )(xp, w, b2d)

    return out[:M] if Mp != M else out


# --------------------------------- forward ----------------------------------- #

def transformer_forward(params, src, tgt, *, num_heads, tgt_vocab):
    B, Ss = src.shape
    _, St = tgt.shape
    D = params["src_emb"].shape[1]

    # src_mask is all-False (no masking); tgt causal mask is built in-kernel.
    # TODO(synk): embedding lookup (token-id gather) stays in plain JAX.
    x = (jnp.take(params["src_emb"], src, axis=0)
         + params["pe"][:Ss][None]).astype(jnp.bfloat16).reshape(B * Ss, D)
    for lp in params["enc_layers"]:
        x = pallas_self_attn_block(x, lp["attn"], lp["ln1_g"], lp["ln1_b"],
                                   B, Ss, num_heads, causal=False)
        x = pallas_ffn_block(x, lp["ffn"], lp["ln2_g"], lp["ln2_b"])
    enc = x                                                    # (B*Ss, D) bf16

    y = (jnp.take(params["tgt_emb"], tgt, axis=0)
         + params["pe"][:St][None]).astype(jnp.bfloat16).reshape(B * St, D)
    for lp in params["dec_layers"]:
        y = pallas_self_attn_block(y, lp["self_attn"], lp["ln1_g"], lp["ln1_b"],
                                   B, St, num_heads, causal=True)
        y = pallas_cross_attn_block(y, enc, lp["cross_attn"],
                                    lp["ln2_g"], lp["ln2_b"],
                                    B, St, Ss, num_heads)
        y = pallas_ffn_block(y, lp["ffn"], lp["ln3_g"], lp["ln3_b"])

    logits = pallas_linear(y, params["fc_w"], params["fc_b"],
                           out_dtype=jnp.float32)              # vocab pre-padded
    return logits[:, :tgt_vocab].reshape(B, St, tgt_vocab)


# ------------------------------ parameter init ------------------------------- #

def sinusoidal_pe(max_len, d):
    pos = jnp.arange(max_len, dtype=jnp.float32)[:, None]
    i = jnp.arange(0, d, 2, dtype=jnp.float32)
    div = jnp.exp(-math.log(10000.0) * i / d)
    pe = jnp.zeros((max_len, d), jnp.float32)
    pe = pe.at[:, 0::2].set(jnp.sin(pos * div))
    pe = pe.at[:, 1::2].set(jnp.cos(pos * div))
    return pe


def init_params(key, src_vocab, tgt_vocab, D, max_len, num_layers, ff_dim):
    """Weights are fused / padded / cast to bf16 ONCE here (not per forward)."""
    keys = iter(jax.random.split(key, 512))

    def dense(din, dout):
        w = jax.random.normal(next(keys), (din, dout), jnp.float32) * 0.02
        return w, jnp.zeros((1, dout), jnp.float32)

    def self_attn_params():
        wq, bq = dense(D, D); wk, bk = dense(D, D)
        wv, bv = dense(D, D); wo, bo = dense(D, D)
        return dict(
            wqkv=jnp.concatenate([wq, wk, wv], axis=1).astype(jnp.bfloat16),
            bqkv=jnp.concatenate([bq, bk, bv], axis=1),
            wo=wo.astype(jnp.bfloat16), bo=bo)

    def cross_attn_params():
        wq, bq = dense(D, D); wk, bk = dense(D, D)
        wv, bv = dense(D, D); wo, bo = dense(D, D)
        return dict(
            wq=wq.astype(jnp.bfloat16), bq=bq,
            wkv=jnp.concatenate([wk, wv], axis=1).astype(jnp.bfloat16),
            bkv=jnp.concatenate([bk, bv], axis=1),
            wo=wo.astype(jnp.bfloat16), bo=bo)

    def ffn_params():
        w1, b1 = dense(D, ff_dim); w2, b2 = dense(ff_dim, D)
        return dict(w1=w1.astype(jnp.bfloat16), b1=b1,
                    w2=w2.astype(jnp.bfloat16), b2=b2)

    def ln():
        return jnp.ones((1, D), jnp.float32), jnp.zeros((1, D), jnp.float32)

    enc_layers, dec_layers = [], []
    for _ in range(num_layers):
        g1, b1 = ln(); g2, b2 = ln()
        enc_layers.append(dict(attn=self_attn_params(), ffn=ffn_params(),
                               ln1_g=g1, ln1_b=b1, ln2_g=g2, ln2_b=b2))
    for _ in range(num_layers):
        g1, b1 = ln(); g2, b2 = ln(); g3, b3 = ln()
        dec_layers.append(dict(self_attn=self_attn_params(),
                               cross_attn=cross_attn_params(),
                               ffn=ffn_params(),
                               ln1_g=g1, ln1_b=b1, ln2_g=g2, ln2_b=b2,
                               ln3_g=g3, ln3_b=b3))

    fc_w, fc_b = dense(D, tgt_vocab)
    Vp = _round_up(tgt_vocab, 128)                 # lane-dense output tile
    fc_w = jnp.pad(fc_w, ((0, 0), (0, Vp - tgt_vocab))).astype(jnp.bfloat16)
    fc_b = jnp.pad(fc_b, ((0, 0), (0, Vp - tgt_vocab)))

    return dict(
        src_emb=jax.random.normal(next(keys), (src_vocab, D), jnp.float32) * 0.02,
        tgt_emb=jax.random.normal(next(keys), (tgt_vocab, D), jnp.float32) * 0.02,
        pe=sinusoidal_pe(max_len, D),
        enc_layers=enc_layers, dec_layers=dec_layers,
        fc_w=fc_w, fc_b=fc_b)


# ----------------------------------- main ------------------------------------ #

if __name__ == "__main__":
    src_vocab, tgt_vocab = 50, 60
    embed_dim, max_len = 32, 16
    num_layers, num_heads, ff_dim = 2, 4, 64
    B, S = 2, 8

    key = jax.random.PRNGKey(0)
    kp, ks, kt = jax.random.split(key, 3)
    params = init_params(kp, src_vocab, tgt_vocab, embed_dim, max_len,
                         num_layers, ff_dim)
    src = jax.random.randint(ks, (B, S), 0, src_vocab, dtype=jnp.int32)
    tgt = jax.random.randint(kt, (B, S), 0, tgt_vocab, dtype=jnp.int32)

    fwd = jax.jit(functools.partial(transformer_forward,
                                    num_heads=num_heads, tgt_vocab=tgt_vocab))
    out = jax.block_until_ready(fwd(params, src, tgt))

    assert out.shape == (B, S, tgt_vocab), out.shape
    assert bool(jnp.all(jnp.isfinite(out)))
    print("KERNEL_OK")
</pallas_src>

<mosaic_0001>
module attributes {stable_mosaic.version = 11 : i64} {
  func.func @_self_attn_block_kernel(%arg0: i32, %arg1: memref<16x32xbf16, #tpu.memory_space<vmem>>, %arg2: memref<32x96xbf16, #tpu.memory_space<vmem>>, %arg3: memref<1x96xf32, #tpu.memory_space<vmem>>, %arg4: memref<32x32xbf16, #tpu.memory_space<vmem>>, %arg5: memref<1x32xf32, #tpu.memory_space<vmem>>, %arg6: memref<1x32xf32, #tpu.memory_space<vmem>>, %arg7: memref<1x32xf32, #tpu.memory_space<vmem>>, %arg8: memref<16x32xbf16, #tpu.memory_space<vmem>>) attributes {dimension_semantics = [#tpu.dimension_semantics<arbitrary>], iteration_bounds = array<i64: 1>, scalar_prefetch = 0 : i64, scratch_operands = 0 : i64, tpu.core_type = #tpu.core_type<tc>, window_params = [{pipeline_mode = #tpu.pipeline_mode<synchronous>, transform_indices = @transform_0, window_bounds = array<i64: 16, 32>}, {pipeline_mode = #tpu.pipeline_mode<synchronous>, transform_indices = @transform_1, window_bounds = array<i64: 32, 96>}, {pipeline_mode = #tpu.pipeline_mode<synchronous>, transform_indices = @transform_2, window_bounds = array<i64: 1, 96>}, {pipeline_mode = #tpu.pipeline_mode<synchronous>, transform_indices = @transform_3, window_bounds = array<i64: 32, 32>}, {pipeline_mode = #tpu.pipeline_mode<synchronous>, transform_indices = @transform_4, window_bounds = array<i64: 1, 32>}, {pipeline_mode = #tpu.pipeline_mode<synchronous>, transform_indices = @transform_5, window_bounds = array<i64: 1, 32>}, {pipeline_mode = #tpu.pipeline_mode<synchronous>, transform_indices = @transform_6, window_bounds = array<i64: 1, 32>}, {pipeline_mode = #tpu.pipeline_mode<synchronous>, transform_indices = @transform_7, window_bounds = array<i64: 16, 32>}]} {
    %c0 = arith.constant 0 : index
    %c0_0 = arith.constant 0 : index
    %0 = vector.load %arg1[%c0, %c0_0] : memref<16x32xbf16, #tpu.memory_space<vmem>>, vector<16x32xbf16>
    %c0_1 = arith.constant 0 : index
    %c0_2 = arith.constant 0 : index
    %1 = vector.load %arg2[%c0_1, %c0_2] : memref<32x96xbf16, #tpu.memory_space<vmem>>, vector<32x96xbf16>
    %cst = arith.constant dense<0.000000e+00> : vector<16x96xf32>
    %2 = tpu.matmul %0, %1, %cst {dimension_numbers = #tpu.dot_dimension_numbers<[1], [0], [0], [1], [0, 0, 1, 1], [], []>} : vector<16x32xbf16>, vector<32x96xbf16>, vector<16x96xf32> -> vector<16x96xf32>
    %c0_3 = arith.constant 0 : index
    %c0_4 = arith.constant 0 : index
    %3 = vector.load %arg3[%c0_3, %c0_4] : memref<1x96xf32, #tpu.memory_space<vmem>>, vector<1x96xf32>
    %4 = vector.broadcast %3 : vector<1x96xf32> to vector<16x96xf32>
    %5 = arith.addf %2, %4 : vector<16x96xf32>
    %6 = arith.truncf %5 : vector<16x96xf32> to vector<16x96xbf16>
    %7 = vector.extract_strided_slice %6 {offsets = [0, 0], sizes = [16, 32], strides = [1, 1]} : vector<16x96xbf16> to vector<16x32xbf16>
    %8 = vector.extract_strided_slice %6 {offsets = [0, 32], sizes = [16, 32], strides = [1, 1]} : vector<16x96xbf16> to vector<16x32xbf16>
    %9 = vector.extract_strided_slice %6 {offsets = [0, 64], sizes = [16, 32], strides = [1, 1]} : vector<16x96xbf16> to vector<16x32xbf16>
    %c0_5 = arith.constant 0 : index
    %c0_6 = arith.constant 0 : index
    %10 = vector.load %arg4[%c0_5, %c0_6] : memref<32x32xbf16, #tpu.memory_space<vmem>>, vector<32x32xbf16>
    %11 = vector.shape_cast %7 : vector<16x32xbf16> to vector<2x8x32xbf16>
    %12 = vector.shape_cast %8 : vector<16x32xbf16> to vector<2x8x32xbf16>
    %13 = vector.shape_cast %9 : vector<16x32xbf16> to vector<2x8x32xbf16>
    %14 = vector.extract_strided_slice %11 {offsets = [0, 0, 0], sizes = [2, 8, 8], strides = [1, 1, 1]} : vector<2x8x32xbf16> to vector<2x8x8xbf16>
    %15 = vector.extract_strided_slice %12 {offsets = [0, 0, 0], sizes = [2, 8, 8], strides = [1, 1, 1]} : vector<2x8x32xbf16> to vector<2x8x8xbf16>
    "tpu.trace_start"() <{level = 10 : i32, message = "bqd,bkd->bqk"}> : () -> ()
    %cst_7 = arith.constant dense<0.000000e+00> : vector<2x8x8xf32>
    %16 = tpu.matmul %14, %15, %cst_7 {dimension_numbers = #tpu.dot_dimension_numbers<[2], [2], [1], [1], [0, 0, 0, 1, 1, 1], [0], [0]>} : vector<2x8x8xbf16>, vector<2x8x8xbf16>, vector<2x8x8xf32> -> vector<2x8x8xf32>
    "tpu.trace_stop"() : () -> ()
    %cst_8 = arith.constant 0.353553385 : f32
    %17 = vector.broadcast %cst_8 : f32 to vector<2x8x8xf32>
    %18 = arith.mulf %16, %17 : vector<2x8x8xf32>
    %cst_9 = arith.constant dense<0xFF800000> : vector<2x8xf32>
    %19 = vector.multi_reduction <maximumf>, %18, %cst_9 [2] : vector<2x8x8xf32> to vector<2x8xf32>
    %20 = vector.shape_cast %19 : vector<2x8xf32> to vector<2x8x1xf32>
    %21 = vector.broadcast %20 : vector<2x8x1xf32> to vector<2x8x8xf32>
    %22 = arith.subf %18, %21 : vector<2x8x8xf32>
    %23 = math.exp %22 : vector<2x8x8xf32>
    %cst_10 = arith.constant dense<0.000000e+00> : vector<2x8xf32>
    %24 = vector.multi_reduction <add>, %23, %cst_10 [2] : vector<2x8x8xf32> to vector<2x8xf32>
    %25 = vector.shape_cast %24 : vector<2x8xf32> to vector<2x8x1xf32>
    %26 = tpu.reciprocal %25 {approx = true} : vector<2x8x1xf32> -> vector<2x8x1xf32>
    %27 = vector.broadcast %26 : vector<2x8x1xf32> to vector<2x8x8xf32>
    %28 = arith.mulf %23, %27 : vector<2x8x8xf32>
    %29 = arith.truncf %28 : vector<2x8x8xf32> to vector<2x8x8xbf16>
    %30 = vector.extract_strided_slice %13 {offsets = [0, 0, 0], sizes = [2, 8, 8], strides = [1, 1, 1]} : vector<2x8x32xbf16> to vector<2x8x8xbf16>
    "tpu.trace_start"() <{level = 10 : i32, message = "bqk,bkd->bqd"}> : () -> ()
    %cst_11 = arith.constant dense<0.000000e+00> : vector<2x8x8xf32>
    %31 = tpu.matmul %29, %30, %cst_11 {dimension_numbers = #tpu.dot_dimension_numbers<[2], [1], [1], [2], [0, 0, 0, 1, 1, 2], [0], [0]>} : vector<2x8x8xbf16>, vector<2x8x8xbf16>, vector<2x8x8xf32> -> vector<2x8x8xf32>
    "tpu.trace_stop"() : () -> ()
    %32 = vector.shape_cast %31 : vector<2x8x8xf32> to vector<16x8xf32>
    %33 = arith.truncf %32 : vector<16x8xf32> to vector<16x8xbf16>
    %34 = vector.extract_strided_slice %10 {offsets = [0, 0], sizes = [8, 32], strides = [1, 1]} : vector<32x32xbf16> to vector<8x32xbf16>
    %cst_12 = arith.constant dense<0.000000e+00> : vector<16x32xf32>
    %35 = tpu.matmul %33, %34, %cst_12 {dimension_numbers = #tpu.dot_dimension_numbers<[1], [0], [0], [1], [0, 0, 1, 1], [], []>} : vector<16x8xbf16>, vector<8x32xbf16>, vector<16x32xf32> -> vector<16x32xf32>
    %36 = vector.extract_strided_slice %11 {offsets = [0, 0, 8], sizes = [2, 8, 8], strides = [1, 1, 1]} : vector<2x8x32xbf16> to vector<2x8x8xbf16>
    %37 = vector.extract_strided_slice %12 {offsets = [0, 0, 8], sizes = [2, 8, 8], strides = [1, 1, 1]} : vector<2x8x32xbf16> to vector<2x8x8xbf16>
    "tpu.trace_start"() <{level = 10 : i32, message = "bqd,bkd->bqk"}> : () -> ()
    %cst_13 = arith.constant dense<0.000000e+00> : vector<2x8x8xf32>
    %38 = tpu.matmul %36, %37, %cst_13 {dimension_numbers = #tpu.dot_dimension_numbers<[2], [2], [1], [1], [0, 0, 0, 1, 1, 1], [0], [0]>} : vector<2x8x8xbf16>, vector<2x8x8xbf16>, vector<2x8x8xf32> -> vector<2x8x8xf32>
    "tpu.trace_stop"() : () -> ()
    %cst_14 = arith.constant 0.353553385 : f32
    %39 = vector.broadcast %cst_14 : f32 to vector<2x8x8xf32>
    %40 = arith.mulf %38, %39 : vector<2x8x8xf32>
    %cst_15 = arith.constant dense<0xFF800000> : vector<2x8xf32>
    %41 = vector.multi_reduction <maximumf>, %40, %cst_15 [2] : vector<2x8x8xf32> to vector<2x8xf32>
    %42 = vector.shape_cast %41 : vector<2x8xf32> to vector<2x8x1xf32>
    %43 = vector.broadcast %42 : vector<2x8x1xf32> to vector<2x8x8xf32>
    %44 = arith.subf %40, %43 : vector<2x8x8xf32>
    %45 = math.exp %44 : vector<2x8x8xf32>
    %cst_16 = arith.constant dense<0.000000e+00> : vector<2x8xf32>
    %46 = vector.multi_reduction <add>, %45, %cst_16 [2] : vector<2x8x8xf32> to vector<2x8xf32>
    %47 = vector.shape_cast %46 : vector<2x8xf32> to vector<2x8x1xf32>
    %48 = tpu.reciprocal %47 {approx = true} : vector<2x8x1xf32> -> vector<2x8x1xf32>
    %49 = vector.broadcast %48 : vector<2x8x1xf32> to vector<2x8x8xf32>
    %50 = arith.mulf %45, %49 : vector<2x8x8xf32>
    %51 = arith.truncf %50 : vector<2x8x8xf32> to vector<2x8x8xbf16>
    %52 = vector.extract_strided_slice %13 {offsets = [0, 0, 8], sizes = [2, 8, 8], strides = [1, 1, 1]} : vector<2x8x32xbf16> to vector<2x8x8xbf16>
    "tpu.trace_start"() <{level = 10 : i32, message = "bqk,bkd->bqd"}> : () -> ()
    %cst_17 = arith.constant dense<0.000000e+00> : vector<2x8x8xf32>
    %53 = tpu.matmul %51, %52, %cst_17 {dimension_numbers = #tpu.dot_dimension_numbers<[2], [1], [1], [2], [0, 0, 0, 1, 1, 2], [0], [0]>} : vector<2x8x8xbf16>, vector<2x8x8xbf16>, vector<2x8x8xf32> -> vector<2x8x8xf32>
    "tpu.trace_stop"() : () -> ()
    %54 = vector.shape_cast %53 : vector<2x8x8xf32> to vector<16x8xf32>
    %55 = arith.truncf %54 : vector<16x8xf32> to vector<16x8xbf16>
    %56 = vector.extract_strided_slice %10 {offsets = [8, 0], sizes = [8, 32], strides = [1, 1]} : vector<32x32xbf16> to vector<8x32xbf16>
    %cst_18 = arith.constant dense<0.000000e+00> : vector<16x32xf32>
    %57 = tpu.matmul %55, %56, %cst_18 {dimension_numbers = #tpu.dot_dimension_numbers<[1], [0], [0], [1], [0, 0, 1, 1], [], []>} : vector<16x8xbf16>, vector<8x32xbf16>, vector<16x32xf32> -> vector<16x32xf32>
    %58 = arith.addf %35, %57 : vector<16x32xf32>
    %59 = vector.extract_strided_slice %11 {offsets = [0, 0, 16], sizes = [2, 8, 8], strides = [1, 1, 1]} : vector<2x8x32xbf16> to vector<2x8x8xbf16>
    %60 = vector.extract_strided_slice %12 {offsets = [0, 0, 16], sizes = [2, 8, 8], strides = [1, 1, 1]} : vector<2x8x32xbf16> to vector<2x8x8xbf16>
    "tpu.trace_start"() <{level = 10 : i32, message = "bqd,bkd->bqk"}> : () -> ()
    %cst_19 = arith.constant dense<0.000000e+00> : vector<2x8x8xf32>
    %61 = tpu.matmul %59, %60, %cst_19 {dimension_numbers = #tpu.dot_dimension_numbers<[2], [2], [1], [1], [0, 0, 0, 1, 1, 1], [0], [0]>} : vector<2x8x8xbf16>, vector<2x8x8xbf16>, vector<2x8x8xf32> -> vector<2x8x8xf32>
    "tpu.trace_stop"() : () -> ()
    %cst_20 = arith.constant 0.353553385 : f32
    %62 = vector.broadcast %cst_20 : f32 to vector<2x8x8xf32>
    %63 = arith.mulf %61, %62 : vector<2x8x8xf32>
    %cst_21 = arith.constant dense<0xFF800000> : vector<2x8xf32>
    %64 = vector.multi_reduction <maximumf>, %63, %cst_21 [2] : vector<2x8x8xf32> to vector<2x8xf32>
    %65 = vector.shape_cast %64 : vector<2x8xf32> to vector<2x8x1xf32>
    %66 = vector.broadcast %65 : vector<2x8x1xf32> to vector<2x8x8xf32>
    %67 = arith.subf %63, %66 : vector<2x8x8xf32>
    %68 = math.exp %67 : vector<2x8x8xf32>
    %cst_22 = arith.constant dense<0.000000e+00> : vector<2x8xf32>
    %69 = vector.multi_reduction <add>, %68, %cst_22 [2] : vector<2x8x8xf32> to vector<2x8xf32>
    %70 = vector.shape_cast %69 : vector<2x8xf32> to vector<2x8x1xf32>
    %71 = tpu.reciprocal %70 {approx = true} : vector<2x8x1xf32> -> vector<2x8x1xf32>
    %72 = vector.broadcast %71 : vector<2x8x1xf32> to vector<2x8x8xf32>
    %73 = arith.mulf %68, %72 : vector<2x8x8xf32>
    %74 = arith.truncf %73 : vector<2x8x8xf32> to vector<2x8x8xbf16>
    %75 = vector.extract_strided_slice %13 {offsets = [0, 0, 16], sizes = [2, 8, 8], strides = [1, 1, 1]} : vector<2x8x32xbf16> to vector<2x8x8xbf16>
    "tpu.trace_start"() <{level = 10 : i32, message = "bqk,bkd->bqd"}> : () -> ()
    %cst_23 = arith.constant dense<0.000000e+00> : vector<2x8x8xf32>
    %76 = tpu.matmul %74, %75, %cst_23 {dimension_numbers = #tpu.dot_dimension_numbers<[2], [1], [1], [2], [0, 0, 0, 1, 1, 2], [0], [0]>} : vector<2x8x8xbf16>, vector<2x8x8xbf16>, vector<2x8x8xf32> -> vector<2x8x8xf32>
    "tpu.trace_stop"() : () -> ()
    %77 = vector.shape_cast %76 : vector<2x8x8xf32> to vector<16x8xf32>
    %78 = arith.truncf %77 : vector<16x8xf32> to vector<16x8xbf16>
    %79 = vector.extract_strided_slice %10 {offsets = [16, 0], sizes = [8, 32], strides = [1, 1]} : vector<32x32xbf16> to vector<8x32xbf16>
    %cst_24 = arith.constant dense<0.000000e+00> : vector<16x32xf32>
    %80 = tpu.matmul %78, %79, %cst_24 {dimension_numbers = #tpu.dot_dimension_numbers<[1], [0], [0], [1], [0, 0, 1, 1], [], []>} : vector<16x8xbf16>, vector<8x32xbf16>, vector<16x32xf32> -> vector<16x32xf32>
    %81 = arith.addf %58, %80 : vector<16x32xf32>
    %82 = vector.extract_strided_slice %11 {offsets = [0, 0, 24], sizes = [2, 8, 8], strides = [1, 1, 1]} : vector<2x8x32xbf16> to vector<2x8x8xbf16>
    %83 = vector.extract_strided_slice %12 {offsets = [0, 0, 24], sizes = [2, 8, 8], strides = [1, 1, 1]} : vector<2x8x32xbf16> to vector<2x8x8xbf16>
    "tpu.trace_start"() <{level = 10 : i32, message = "bqd,bkd->bqk"}> : () -> ()
    %cst_25 = arith.constant dense<0.000000e+00> : vector<2x8x8xf32>
    %84 = tpu.matmul %82, %83, %cst_25 {dimension_numbers = #tpu.dot_dimension_numbers<[2], [2], [1], [1], [0, 0, 0, 1, 1, 1], [0], [0]>} : vector<2x8x8xbf16>, vector<2x8x8xbf16>, vector<2x8x8xf32> -> vector<2x8x8xf32>
    "tpu.trace_stop"() : () -> ()
    %cst_26 = arith.constant 0.353553385 : f32
    %85 = vector.broadcast %cst_26 : f32 to vector<2x8x8xf32>
    %86 = arith.mulf %84, %85 : vector<2x8x8xf32>
    %cst_27 = arith.constant dense<0xFF800000> : vector<2x8xf32>
    %87 = vector.multi_reduction <maximumf>, %86, %cst_27 [2] : vector<2x8x8xf32> to vector<2x8xf32>
    %88 = vector.shape_cast %87 : vector<2x8xf32> to vector<2x8x1xf32>
    %89 = vector.broadcast %88 : vector<2x8x1xf32> to vector<2x8x8xf32>
    %90 = arith.subf %86, %89 : vector<2x8x8xf32>
    %91 = math.exp %90 : vector<2x8x8xf32>
    %cst_28 = arith.constant dense<0.000000e+00> : vector<2x8xf32>
    %92 = vector.multi_reduction <add>, %91, %cst_28 [2] : vector<2x8x8xf32> to vector<2x8xf32>
    %93 = vector.shape_cast %92 : vector<2x8xf32> to vector<2x8x1xf32>
    %94 = tpu.reciprocal %93 {approx = true} : vector<2x8x1xf32> -> vector<2x8x1xf32>
    %95 = vector.broadcast %94 : vector<2x8x1xf32> to vector<2x8x8xf32>
    %96 = arith.mulf %91, %95 : vector<2x8x8xf32>
    %97 = arith.truncf %96 : vector<2x8x8xf32> to vector<2x8x8xbf16>
    %98 = vector.extract_strided_slice %13 {offsets = [0, 0, 24], sizes = [2, 8, 8], strides = [1, 1, 1]} : vector<2x8x32xbf16> to vector<2x8x8xbf16>
    "tpu.trace_start"() <{level = 10 : i32, message = "bqk,bkd->bqd"}> : () -> ()
    %cst_29 = arith.constant dense<0.000000e+00> : vector<2x8x8xf32>
    %99 = tpu.matmul %97, %98, %cst_29 {dimension_numbers = #tpu.dot_dimension_numbers<[2], [1], [1], [2], [0, 0, 0, 1, 1, 2], [0], [0]>} : vector<2x8x8xbf16>, vector<2x8x8xbf16>, vector<2x8x8xf32> -> vector<2x8x8xf32>
    "tpu.trace_stop"() : () -> ()
    %100 = vector.shape_cast %99 : vector<2x8x8xf32> to vector<16x8xf32>
    %101 = arith.truncf %100 : vector<16x8xf32> to vector<16x8xbf16>
    %102 = vector.extract_strided_slice %10 {offsets = [24, 0], sizes = [8, 32], strides = [1, 1]} : vector<32x32xbf16> to vector<8x32xbf16>
    %cst_30 = arith.constant dense<0.000000e+00> : vector<16x32xf32>
    %103 = tpu.matmul %101, %102, %cst_30 {dimension_numbers = #tpu.dot_dimension_numbers<[1], [0], [0], [1], [0, 0, 1, 1], [], []>} : vector<16x8xbf16>, vector<8x32xbf16>, vector<16x32xf32> -> vector<16x32xf32>
    %104 = arith.addf %81, %103 : vector<16x32xf32>
    %c0_31 = arith.constant 0 : index
    %c0_32 = arith.constant 0 : index
    %105 = vector.load %arg5[%c0_31, %c0_32] : memref<1x32xf32, #tpu.memory_space<vmem>>, vector<1x32xf32>
    %106 = vector.broadcast %105 : vector<1x32xf32> to vector<16x32xf32>
    %107 = arith.addf %104, %106 : vector<16x32xf32>
    %108 = arith.extf %0 : vector<16x32xbf16> to vector<16x32xf32>
    %109 = arith.addf %108, %107 : vector<16x32xf32>
    %c0_33 = arith.constant 0 : index
    %c0_34 = arith.constant 0 : index
    %110 = vector.load %arg6[%c0_33, %c0_34] : memref<1x32xf32, #tpu.memory_space<vmem>>, vector<1x32xf32>
    %c0_35 = arith.constant 0 : index
    %c0_36 = arith.constant 0 : index
    %111 = vector.load %arg7[%c0_35, %c0_36] : memref<1x32xf32, #tpu.memory_space<vmem>>, vector<1x32xf32>
    %cst_37 = arith.constant dense<0.000000e+00> : vector<16xf32>
    %112 = vector.multi_reduction <add>, %109, %cst_37 [1] : vector<16x32xf32> to vector<16xf32>
    %113 = vector.shape_cast %112 : vector<16xf32> to vector<16x1xf32>
    %cst_38 = arith.constant 3.200000e+01 : f32
    %114 = vector.broadcast %cst_38 : f32 to vector<16x1xf32>
    %115 = arith.divf %113, %114 : vector<16x1xf32>
    %116 = vector.broadcast %115 : vector<16x1xf32> to vector<16x32xf32>
    %117 = arith.subf %109, %116 : vector<16x32xf32>
    %118 = arith.mulf %117, %117 : vector<16x32xf32>
    %cst_39 = arith.constant dense<0.000000e+00> : vector<16xf32>
    %119 = vector.multi_reduction <add>, %118, %cst_39 [1] : vector<16x32xf32> to vector<16xf32>
    %120 = vector.shape_cast %119 : vector<16xf32> to vector<16x1xf32>
    %cst_40 = arith.constant 3.200000e+01 : f32
    %121 = vector.broadcast %cst_40 : f32 to vector<16x1xf32>
    %122 = arith.divf %120, %121 : vector<16x1xf32>
    %123 = vector.broadcast %115 : vector<16x1xf32> to vector<16x32xf32>
    %124 = arith.subf %109, %123 : vector<16x32xf32>
    %cst_41 = arith.constant 9.99999974E-6 : f32
    %125 = vector.broadcast %cst_41 : f32 to vector<16x1xf32>
    %126 = arith.addf %122, %125 : vector<16x1xf32>
    %127 = math.rsqrt %126 : vector<16x1xf32>
    %128 = vector.broadcast %127 : vector<16x1xf32> to vector<16x32xf32>
    %129 = arith.mulf %124, %128 : vector<16x32xf32>
    %130 = vector.broadcast %110 : vector<1x32xf32> to vector<16x32xf32>
    %131 = arith.mulf %129, %130 : vector<16x32xf32>
    %132 = vector.broadcast %111 : vector<1x32xf32> to vector<16x32xf32>
    %133 = arith.addf %131, %132 : vector<16x32xf32>
    %134 = arith.truncf %133 : vector<16x32xf32> to vector<16x32xbf16>
    %c0_42 = arith.constant 0 : index
    %c0_43 = arith.constant 0 : index
    %135 = vector.load %arg8[%c0_42, %c0_43] : memref<16x32xbf16, #tpu.memory_space<vmem>>, vector<16x32xbf16>
    tpu.vector_store %arg8[%c0_42, %c0_43], %134 {strides = array<i32>} : memref<16x32xbf16, #tpu.memory_space<vmem>>, vector<16x32xbf16>,
    return
  }
  func.func @transform_0(%arg0: i32) -> (i32, i32) {
    %c0_i32 = arith.constant 0 : i32
    %c0_i32_0 = arith.constant 0 : i32
    %c0_i32_1 = arith.constant 0 : i32
    return %c0_i32, %c0_i32_0 : i32, i32
  }
  func.func @transform_1(%arg0: i32) -> (i32, i32) {
    %c0_i32 = arith.constant 0 : i32
    %c0_i32_0 = arith.constant 0 : i32
    %c0_i32_1 = arith.constant 0 : i32
    return %c0_i32, %c0_i32_0 : i32, i32
  }
  func.func @transform_2(%arg0: i32) -> (i32, i32) {
    %c0_i32 = arith.constant 0 : i32
    %c0_i32_0 = arith.constant 0 : i32
    %c0_i32_1 = arith.constant 0 : i32
    return %c0_i32, %c0_i32_0 : i32, i32
  }
  func.func @transform_3(%arg0: i32) -> (i32, i32) {
    %c0_i32 = arith.constant 0 : i32
    %c0_i32_0 = arith.constant 0 : i32
    %c0_i32_1 = arith.constant 0 : i32
    return %c0_i32, %c0_i32_0 : i32, i32
  }
  func.func @transform_4(%arg0: i32) -> (i32, i32) {
    %c0_i32 = arith.constant 0 : i32
    %c0_i32_0 = arith.constant 0 : i32
    %c0_i32_1 = arith.constant 0 : i32
    return %c0_i32, %c0_i32_0 : i32, i32
  }
  func.func @transform_5(%arg0: i32) -> (i32, i32) {
    %c0_i32 = arith.constant 0 : i32
    %c0_i32_0 = arith.constant 0 : i32
    %c0_i32_1 = arith.constant 0 : i32
    return %c0_i32, %c0_i32_0 : i32, i32
  }
  func.func @transform_6(%arg0: i32) -> (i32, i32) {
    %c0_i32 = arith.constant 0 : i32
    %c0_i32_0 = arith.constant 0 : i32
    %c0_i32_1 = arith.constant 0 : i32
    return %c0_i32, %c0_i32_0 : i32, i32
  }
  func.func @transform_7(%arg0: i32) -> (i32, i32) {
    %c0_i32 = arith.constant 0 : i32
    %c0_i32_0 = arith.constant 0 : i32
    %c0_i32_1 = arith.constant 0 : i32
    return %c0_i32, %c0_i32_0 : i32, i32
  }
}

module attributes {stable_mosaic.version = 11 : i64} {
  func.func @_self_attn_block_kernel(%arg0: i32, %arg1: memref<16x32xbf16, #tpu.memory_space<vmem>>, %arg2: memref<32x96xbf16, #tpu.memory_space<vmem>>, %arg3: memref<1x96xf32, #tpu.memory_space<vmem>>, %arg4: memref<32x32xbf16, #tpu.memory_space<vmem>>, %arg5: memref<1x32xf32, #tpu.memory_space<vmem>>, %arg6: memref<1x32xf32, #tpu.memory_space<vmem>>, %arg7: memref<1x32xf32, #tpu.memory_space<vmem>>, %arg8: memref<16x32xbf16, #tpu.memory_space<vmem>>) attributes {dimension_semantics = [#tpu.dimension_semantics<arbitrary>], iteration_bounds = array<i64: 1>, scalar_prefetch = 0 : i64, scratch_operands = 0 : i64, tpu.core_type = #tpu.core_type<tc>, window_params = [{pipeline_mode = #tpu.pipeline_mode<synchronous>, transform_indices = @transform_0, window_bounds = array<i64: 16, 32>}, {pipeline_mode = #tpu.pipeline_mode<synchronous>, transform_indices = @transform_1, window_bounds = array<i64: 32, 96>}, {pipeline_mode = #tpu.pipeline_mode<synchronous>, transform_indices = @transform_2, window_bounds = array<i64: 1, 96>}, {pipeline_mode = #tpu.pipeline_mode<synchronous>, transform_indices = @transform_3, window_bounds = array<i64: 32, 32>}, {pipeline_mode = #tpu.pipeline_mode<synchronous>, transform_indices = @transform_4, window_bounds = array<i64: 1, 32>}, {pipeline_mode = #tpu.pipeline_mode<synchronous>, transform_indices = @transform_5, window_bounds = array<i64: 1, 32>}, {pipeline_mode = #tpu.pipeline_mode<synchronous>, transform_indices = @transform_6, window_bounds = array<i64: 1, 32>}, {pipeline_mode = #tpu.pipeline_mode<synchronous>, transform_indices = @transform_7, window_bounds = array<i64: 16, 32>}]} {
    %c0 = arith.constant 0 : index
    %c0_0 = arith.constant 0 : index
    %0 = vector.load %arg1[%c0, %c0_0] : memref<16x32xbf16, #tpu.memory_space<vmem>>, vector<16x32xbf16>
    %c0_1 = arith.constant 0 : index
    %c0_2 = arith.constant 0 : index
    %1 = vector.load %arg2[%c0_1, %c0_2] : memref<32x96xbf16, #tpu.memory_space<vmem>>, vector<32x96xbf16>
    %cst = arith.constant dense<0.000000e+00> : vector<16x96xf32>
    %2 = tpu.matmul %0, %1, %cst {dimension_numbers = #tpu.dot_dimension_numbers<[1], [0], [0], [1], [0, 0, 1, 1], [], []>} : vector<16x32xbf16>, vector<32x96xbf16>, vector<16x96xf32> -> vector<16x96xf32>
    %c0_3 = arith.constant 0 : index
    %c0_4 = arith.constant 0 : index
    %3 = vector.load %arg3[%c0_3, %c0_4] : memref<1x96xf32, #tpu.memory_space<vmem>>, vector<1x96xf32>
    %4 = vector.broadcast %3 : vector<1x96xf32> to vector<16x96xf32>
    %5 = arith.addf %2, %4 : vector<16x96xf32>
    %6 = arith.truncf %5 : vector<16x96xf32> to vector<16x96xbf16>
    %7 = vector.extract_strided_slice %6 {offsets = [0, 0], sizes = [16, 32], strides = [1, 1]} : vector<16x96xbf16> to vector<16x32xbf16>
    %8 = vector.extract_strided_slice %6 {offsets = [0, 32], sizes = [16, 32], strides = [1, 1]} : vector<16x96xbf16> to vector<16x32xbf16>
    %9 = vector.extract_strided_slice %6 {offsets = [0, 64], sizes = [16, 32], strides = [1, 1]} : vector<16x96xbf16> to vector<16x32xbf16>
    %c0_5 = arith.constant 0 : index
    %c0_6 = arith.constant 0 : index
    %10 = vector.load %arg4[%c0_5, %c0_6] : memref<32x32xbf16, #tpu.memory_space<vmem>>, vector<32x32xbf16>
    %11 = vector.shape_cast %7 : vector<16x32xbf16> to vector<2x8x32xbf16>
    %12 = vector.shape_cast %8 : vector<16x32xbf16> to vector<2x8x32xbf16>
    %13 = vector.shape_cast %9 : vector<16x32xbf16> to vector<2x8x32xbf16>
    %14 = tpu.iota {dimensions = array<i32: 0>} : vector<8x8xi32>
    %15 = tpu.iota {dimensions = array<i32: 1>} : vector<8x8xi32>
    %16 = arith.cmpi sge, %14, %15 : vector<8x8xi32>
    %17 = vector.shape_cast %16 : vector<8x8xi1> to vector<1x8x8xi1>
    %18 = vector.extract_strided_slice %11 {offsets = [0, 0, 0], sizes = [2, 8, 8], strides = [1, 1, 1]} : vector<2x8x32xbf16> to vector<2x8x8xbf16>
    %19 = vector.extract_strided_slice %12 {offsets = [0, 0, 0], sizes = [2, 8, 8], strides = [1, 1, 1]} : vector<2x8x32xbf16> to vector<2x8x8xbf16>
    "tpu.trace_start"() <{level = 10 : i32, message = "bqd,bkd->bqk"}> : () -> ()
    %cst_7 = arith.constant dense<0.000000e+00> : vector<2x8x8xf32>
    %20 = tpu.matmul %18, %19, %cst_7 {dimension_numbers = #tpu.dot_dimension_numbers<[2], [2], [1], [1], [0, 0, 0, 1, 1, 1], [0], [0]>} : vector<2x8x8xbf16>, vector<2x8x8xbf16>, vector<2x8x8xf32> -> vector<2x8x8xf32>
    "tpu.trace_stop"() : () -> ()
    %cst_8 = arith.constant 0.353553385 : f32
    %21 = vector.broadcast %cst_8 : f32 to vector<2x8x8xf32>
    %22 = arith.mulf %20, %21 : vector<2x8x8xf32>
    %cst_9 = arith.constant -1.000000e+30 : f32
    %23 = vector.shape_cast %17 : vector<1x8x8xi1> to vector<1x8x8xi1>
    %24 = vector.broadcast %23 : vector<1x8x8xi1> to vector<2x8x8xi1>
    %25 = vector.broadcast %cst_9 : f32 to vector<2x8x8xf32>
    %26 = arith.select %24, %22, %25 : vector<2x8x8xi1>, vector<2x8x8xf32>
    %cst_10 = arith.constant dense<0xFF800000> : vector<2x8xf32>
    %27 = vector.multi_reduction <maximumf>, %26, %cst_10 [2] : vector<2x8x8xf32> to vector<2x8xf32>
    %28 = vector.shape_cast %27 : vector<2x8xf32> to vector<2x8x1xf32>
    %29 = vector.broadcast %28 : vector<2x8x1xf32> to vector<2x8x8xf32>
    %30 = arith.subf %26, %29 : vector<2x8x8xf32>
    %31 = math.exp %30 : vector<2x8x8xf32>
    %cst_11 = arith.constant dense<0.000000e+00> : vector<2x8xf32>
    %32 = vector.multi_reduction <add>, %31, %cst_11 [2] : vector<2x8x8xf32> to vector<2x8xf32>
    %33 = vector.shape_cast %32 : vector<2x8xf32> to vector<2x8x1xf32>
    %34 = tpu.reciprocal %33 {approx = true} : vector<2x8x1xf32> -> vector<2x8x1xf32>
    %35 = vector.broadcast %34 : vector<2x8x1xf32> to vector<2x8x8xf32>
    %36 = arith.mulf %31, %35 : vector<2x8x8xf32>
    %37 = arith.truncf %36 : vector<2x8x8xf32> to vector<2x8x8xbf16>
    %38 = vector.extract_strided_slice %13 {offsets = [0, 0, 0], sizes = [2, 8, 8], strides = [1, 1, 1]} : vector<2x8x32xbf16> to vector<2x8x8xbf16>
    "tpu.trace_start"() <{level = 10 : i32, message = "bqk,bkd->bqd"}> : () -> ()
    %cst_12 = arith.constant dense<0.000000e+00> : vector<2x8x8xf32>
    %39 = tpu.matmul %37, %38, %cst_12 {dimension_numbers = #tpu.dot_dimension_numbers<[2], [1], [1], [2], [0, 0, 0, 1, 1, 2], [0], [0]>} : vector<2x8x8xbf16>, vector<2x8x8xbf16>, vector<2x8x8xf32> -> vector<2x8x8xf32>
    "tpu.trace_stop"() : () -> ()
    %40 = vector.shape_cast %39 : vector<2x8x8xf32> to vector<16x8xf32>
    %41 = arith.truncf %40 : vector<16x8xf32> to vector<16x8xbf16>
    %42 = vector.extract_strided_slice %10 {offsets = [0, 0], sizes = [8, 32], strides = [1, 1]} : vector<32x32xbf16> to vector<8x32xbf16>
    %cst_13 = arith.constant dense<0.000000e+00> : vector<16x32xf32>
    %43 = tpu.matmul %41, %42, %cst_13 {dimension_numbers = #tpu.dot_dimension_numbers<[1], [0], [0], [1], [0, 0, 1, 1], [], []>} : vector<16x8xbf16>, vector<8x32xbf16>, vector<16x32xf32> -> vector<16x32xf32>
    %44 = vector.extract_strided_slice %11 {offsets = [0, 0, 8], sizes = [2, 8, 8], strides = [1, 1, 1]} : vector<2x8x32xbf16> to vector<2x8x8xbf16>
    %45 = vector.extract_strided_slice %12 {offsets = [0, 0, 8], sizes = [2, 8, 8], strides = [1, 1, 1]} : vector<2x8x32xbf16> to vector<2x8x8xbf16>
    "tpu.trace_start"() <{level = 10 : i32, message = "bqd,bkd->bqk"}> : () -> ()
    %cst_14 = arith.constant dense<0.000000e+00> : vector<2x8x8xf32>
    %46 = tpu.matmul %44, %45, %cst_14 {dimension_numbers = #tpu.dot_dimension_numbers<[2], [2], [1], [1], [0, 0, 0, 1, 1, 1], [0], [0]>} : vector<2x8x8xbf16>, vector<2x8x8xbf16>, vector<2x8x8xf32> -> vector<2x8x8xf32>
    "tpu.trace_stop"() : () -> ()
    %cst_15 = arith.constant 0.353553385 : f32
    %47 = vector.broadcast %cst_15 : f32 to vector<2x8x8xf32>
    %48 = arith.mulf %46, %47 : vector<2x8x8xf32>
    %cst_16 = arith.constant -1.000000e+30 : f32
    %49 = vector.shape_cast %17 : vector<1x8x8xi1> to vector<1x8x8xi1>
    %50 = vector.broadcast %49 : vector<1x8x8xi1> to vector<2x8x8xi1>
    %51 = vector.broadcast %cst_16 : f32 to vector<2x8x8xf32>
    %52 = arith.select %50, %48, %51 : vector<2x8x8xi1>, vector<2x8x8xf32>
    %cst_17 = arith.constant dense<0xFF800000> : vector<2x8xf32>
    %53 = vector.multi_reduction <maximumf>, %52, %cst_17 [2] : vector<2x8x8xf32> to vector<2x8xf32>
    %54 = vector.shape_cast %53 : vector<2x8xf32> to vector<2x8x1xf32>
    %55 = vector.broadcast %54 : vector<2x8x1xf32> to vector<2x8x8xf32>
    %56 = arith.subf %52, %55 : vector<2x8x8xf32>
    %57 = math.exp %56 : vector<2x8x8xf32>
    %cst_18 = arith.constant dense<0.000000e+00> : vector<2x8xf32>
    %58 = vector.multi_reduction <add>, %57, %cst_18 [2] : vector<2x8x8xf32> to vector<2x8xf32>
    %59 = vector.shape_cast %58 : vector<2x8xf32> to vector<2x8x1xf32>
    %60 = tpu.reciprocal %59 {approx = true} : vector<2x8x1xf32> -> vector<2x8x1xf32>
    %61 = vector.broadcast %60 : vector<2x8x1xf32> to vector<2x8x8xf32>
    %62 = arith.mulf %57, %61 : vector<2x8x8xf32>
    %63 = arith.truncf %62 : vector<2x8x8xf32> to vector<2x8x8xbf16>
    %64 = vector.extract_strided_slice %13 {offsets = [0, 0, 8], sizes = [2, 8, 8], strides = [1, 1, 1]} : vector<2x8x32xbf16> to vector<2x8x8xbf16>
    "tpu.trace_start"() <{level = 10 : i32, message = "bqk,bkd->bqd"}> : () -> ()
    %cst_19 = arith.constant dense<0.000000e+00> : vector<2x8x8xf32>
    %65 = tpu.matmul %63, %64, %cst_19 {dimension_numbers = #tpu.dot_dimension_numbers<[2], [1], [1], [2], [0, 0, 0, 1, 1, 2], [0], [0]>} : vector<2x8x8xbf16>, vector<2x8x8xbf16>, vector<2x8x8xf32> -> vector<2x8x8xf32>
    "tpu.trace_stop"() : () -> ()
    %66 = vector.shape_cast %65 : vector<2x8x8xf32> to vector<16x8xf32>
    %67 = arith.truncf %66 : vector<16x8xf32> to vector<16x8xbf16>
    %68 = vector.extract_strided_slice %10 {offsets = [8, 0], sizes = [8, 32], strides = [1, 1]} : vector<32x32xbf16> to vector<8x32xbf16>
    %cst_20 = arith.constant dense<0.000000e+00> : vector<16x32xf32>
    %69 = tpu.matmul %67, %68, %cst_20 {dimension_numbers = #tpu.dot_dimension_numbers<[1], [0], [0], [1], [0, 0, 1, 1], [], []>} : vector<16x8xbf16>, vector<8x32xbf16>, vector<16x32xf32> -> vector<16x32xf32>
    %70 = arith.addf %43, %69 : vector<16x32xf32>
    %71 = vector.extract_strided_slice %11 {offsets = [0, 0, 16], sizes = [2, 8, 8], strides = [1, 1, 1]} : vector<2x8x32xbf16> to vector<2x8x8xbf16>
    %72 = vector.extract_strided_slice %12 {offsets = [0, 0, 16], sizes = [2, 8, 8], strides = [1, 1, 1]} : vector<2x8x32xbf16> to vector<2x8x8xbf16>
    "tpu.trace_start"() <{level = 10 : i32, message = "bqd,bkd->bqk"}> : () -> ()
    %cst_21 = arith.constant dense<0.000000e+00> : vector<2x8x8xf32>
    %73 = tpu.matmul %71, %72, %cst_21 {dimension_numbers = #tpu.dot_dimension_numbers<[2], [2], [1], [1], [0, 0, 0, 1, 1, 1], [0], [0]>} : vector<2x8x8xbf16>, vector<2x8x8xbf16>, vector<2x8x8xf32> -> vector<2x8x8xf32>
    "tpu.trace_stop"() : () -> ()
    %cst_22 = arith.constant 0.353553385 : f32
    %74 = vector.broadcast %cst_22 : f32 to vector<2x8x8xf32>
    %75 = arith.mulf %73, %74 : vector<2x8x8xf32>
    %cst_23 = arith.constant -1.000000e+30 : f32
    %76 = vector.shape_cast %17 : vector<1x8x8xi1> to vector<1x8x8xi1>
    %77 = vector.broadcast %76 : vector<1x8x8xi1> to vector<2x8x8xi1>
    %78 = vector.broadcast %cst_23 : f32 to vector<2x8x8xf32>
    %79 = arith.select %77, %75, %78 : vector<2x8x8xi1>, vector<2x8x8xf32>
    %cst_24 = arith.constant dense<0xFF800000> : vector<2x8xf32>
    %80 = vector.multi_reduction <maximumf>, %79, %cst_24 [2] : vector<2x8x8xf32> to vector<2x8xf32>
    %81 = vector.shape_cast %80 : vector<2x8xf32> to vector<2x8x1xf32>
    %82 = vector.broadcast %81 : vector<2x8x1xf32> to vector<2x8x8xf32>
    %83 = arith.subf %79, %82 : vector<2x8x8xf32>
    %84 = math.exp %83 : vector<2x8x8xf32>
    %cst_25 = arith.constant dense<0.000000e+00> : vector<2x8xf32>
    %85 = vector.multi_reduction <add>, %84, %cst_25 [2] : vector<2x8x8xf32> to vector<2x8xf32>
    %86 = vector.shape_cast %85 : vector<2x8xf32> to vector<2x8x1xf32>
    %87 = tpu.reciprocal %86 {approx = true} : vector<2x8x1xf32> -> vector<2x8x1xf32>
    %88 = vector.broadcast %87 : vector<2x8x1xf32> to vector<2x8x8xf32>
    %89 = arith.mulf %84, %88 : vector<2x8x8xf32>
    %90 = arith.truncf %89 : vector<2x8x8xf32> to vector<2x8x8xbf16>
    %91 = vector.extract_strided_slice %13 {offsets = [0, 0, 16], sizes = [2, 8, 8], strides = [1, 1, 1]} : vector<2x8x32xbf16> to vector<2x8x8xbf16>
    "tpu.trace_start"() <{level = 10 : i32, message = "bqk,bkd->bqd"}> : () -> ()
    %cst_26 = arith.constant dense<0.000000e+00> : vector<2x8x8xf32>
    %92 = tpu.matmul %90, %91, %cst_26 {dimension_numbers = #tpu.dot_dimension_numbers<[2], [1], [1], [2], [0, 0, 0, 1, 1, 2], [0], [0]>} : vector<2x8x8xbf16>, vector<2x8x8xbf16>, vector<2x8x8xf32> -> vector<2x8x8xf32>
    "tpu.trace_stop"() : () -> ()
    %93 = vector.shape_cast %92 : vector<2x8x8xf32> to vector<16x8xf32>
    %94 = arith.truncf %93 : vector<16x8xf32> to vector<16x8xbf16>
    %95 = vector.extract_strided_slice %10 {offsets = [16, 0], sizes = [8, 32], strides = [1, 1]} : vector<32x32xbf16> to vector<8x32xbf16>
    %cst_27 = arith.constant dense<0.000000e+00> : vector<16x32xf32>
    %96 = tpu.matmul %94, %95, %cst_27 {dimension_numbers = #tpu.dot_dimension_numbers<[1], [0], [0], [1], [0, 0, 1, 1], [], []>} : vector<16x8xbf16>, vector<8x32xbf16>, vector<16x32xf32> -> vector<16x32xf32>
    %97 = arith.addf %70, %96 : vector<16x32xf32>
    %98 = vector.extract_strided_slice %11 {offsets = [0, 0, 24], sizes = [2, 8, 8], strides = [1, 1, 1]} : vector<2x8x32xbf16> to vector<2x8x8xbf16>
    %99 = vector.extract_strided_slice %12 {offsets = [0, 0, 24], sizes = [2, 8, 8], strides = [1, 1, 1]} : vector<2x8x32xbf16> to vector<2x8x8xbf16>
    "tpu.trace_start"() <{level = 10 : i32, message = "bqd,bkd->bqk"}> : () -> ()
    %cst_28 = arith.constant dense<0.000000e+00> : vector<2x8x8xf32>
    %100 = tpu.matmul %98, %99, %cst_28 {dimension_numbers = #tpu.dot_dimension_numbers<[2], [2], [1], [1], [0, 0, 0, 1, 1, 1], [0], [0]>} : vector<2x8x8xbf16>, vector<2x8x8xbf16>, vector<2x8x8xf32> -> vector<2x8x8xf32>
    "tpu.trace_stop"() : () -> ()
    %cst_29 = arith.constant 0.353553385 : f32
    %101 = vector.broadcast %cst_29 : f32 to vector<2x8x8xf32>
    %102 = arith.mulf %100, %101 : vector<2x8x8xf32>
    %cst_30 = arith.constant -1.000000e+30 : f32
    %103 = vector.shape_cast %17 : vector<1x8x8xi1> to vector<1x8x8xi1>
    %104 = vector.broadcast %103 : vector<1x8x8xi1> to vector<2x8x8xi1>
    %105 = vector.broadcast %cst_30 : f32 to vector<2x8x8xf32>
    %106 = arith.select %104, %102, %105 : vector<2x8x8xi1>, vector<2x8x8xf32>
    %cst_31 = arith.constant dense<0xFF800000> : vector<2x8xf32>
    %107 = vector.multi_reduction <maximumf>, %106, %cst_31 [2] : vector<2x8x8xf32> to vector<2x8xf32>
    %108 = vector.shape_cast %107 : vector<2x8xf32> to vector<2x8x1xf32>
    %109 = vector.broadcast %108 : vector<2x8x1xf32> to vector<2x8x8xf32>
    %110 = arith.subf %106, %109 : vector<2x8x8xf32>
    %111 = math.exp %110 : vector<2x8x8xf32>
    %cst_32 = arith.constant dense<0.000000e+00> : vector<2x8xf32>
    %112 = vector.multi_reduction <add>, %111, %cst_32 [2] : vector<2x8x8xf32> to vector<2x8xf32>
    %113 = vector.shape_cast %112 : vector<2x8xf32> to vector<2x8x1xf32>
    %114 = tpu.reciprocal %113 {approx = true} : vector<2x8x1xf32> -> vector<2x8x1xf32>
    %115 = vector.broadcast %114 : vector<2x8x1xf32> to vector<2x8x8xf32>
    %116 = arith.mulf %111, %115 : vector<2x8x8xf32>
    %117 = arith.truncf %116 : vector<2x8x8xf32> to vector<2x8x8xbf16>
    %118 = vector.extract_strided_slice %13 {offsets = [0, 0, 24], sizes = [2, 8, 8], strides = [1, 1, 1]} : vector<2x8x32xbf16> to vector<2x8x8xbf16>
    "tpu.trace_start"() <{level = 10 : i32, message = "bqk,bkd->bqd"}> : () -> ()
    %cst_33 = arith.constant dense<0.000000e+00> : vector<2x8x8xf32>
    %119 = tpu.matmul %117, %118, %cst_33 {dimension_numbers = #tpu.dot_dimension_numbers<[2], [1], [1], [2], [0, 0, 0, 1, 1, 2], [0], [0]>} : vector<2x8x8xbf16>, vector<2x8x8xbf16>, vector<2x8x8xf32> -> vector<2x8x8xf32>
    "tpu.trace_stop"() : () -> ()
    %120 = vector.shape_cast %119 : vector<2x8x8xf32> to vector<16x8xf32>
    %121 = arith.truncf %120 : vector<16x8xf32> to vector<16x8xbf16>
    %122 = vector.extract_strided_slice %10 {offsets = [24, 0], sizes = [8, 32], strides = [1, 1]} : vector<32x32xbf16> to vector<8x32xbf16>
    %cst_34 = arith.constant dense<0.000000e+00> : vector<16x32xf32>
    %123 = tpu.matmul %121, %122, %cst_34 {dimension_numbers = #tpu.dot_dimension_numbers<[1], [0], [0], [1], [0, 0, 1, 1], [], []>} : vector<16x8xbf16>, vector<8x32xbf16>, vector<16x32xf32> -> vector<16x32xf32>
    %124 = arith.addf %97, %123 : vector<16x32xf32>
    %c0_35 = arith.constant 0 : index
    %c0_36 = arith.constant 0 : index
    %125 = vector.load %arg5[%c0_35, %c0_36] : memref<1x32xf32, #tpu.memory_space<vmem>>, vector<1x32xf32>
    %126 = vector.broadcast %125 : vector<1x32xf32> to vector<16x32xf32>
    %127 = arith.addf %124, %126 : vector<16x32xf32>
    %128 = arith.extf %0 : vector<16x32xbf16> to vector<16x32xf32>
    %129 = arith.addf %128, %127 : vector<16x32xf32>
    %c0_37 = arith.constant 0 : index
    %c0_38 = arith.constant 0 : index
    %130 = vector.load %arg6[%c0_37, %c0_38] : memref<1x32xf32, #tpu.memory_space<vmem>>, vector<1x32xf32>
    %c0_39 = arith.constant 0 : index
    %c0_40 = arith.constant 0 : index
    %131 = vector.load %arg7[%c0_39, %c0_40] : memref<1x32xf32, #tpu.memory_space<vmem>>, vector<1x32xf32>
    %cst_41 = arith.constant dense<0.000000e+00> : vector<16xf32>
    %132 = vector.multi_reduction <add>, %129, %cst_41 [1] : vector<16x32xf32> to vector<16xf32>
    %133 = vector.shape_cast %132 : vector<16xf32> to vector<16x1xf32>
    %cst_42 = arith.constant 3.200000e+01 : f32
    %134 = vector.broadcast %cst_42 : f32 to vector<16x1xf32>
    %135 = arith.divf %133, %134 : vector<16x1xf32>
    %136 = vector.broadcast %135 : vector<16x1xf32> to vector<16x32xf32>
    %137 = arith.subf %129, %136 : vector<16x32xf32>
    %138 = arith.mulf %137, %137 : vector<16x32xf32>
    %cst_43 = arith.constant dense<0.000000e+00> : vector<16xf32>
    %139 = vector.multi_reduction <add>, %138, %cst_43 [1] : vector<16x32xf32> to vector<16xf32>
    %140 = vector.shape_cast %139 : vector<16xf32> to vector<16x1xf32>
    %cst_44 = arith.constant 3.200000e+01 : f32
    %141 = vector.broadcast %cst_44 : f32 to vector<16x1xf32>
    %142 = arith.divf %140, %141 : vector<16x1xf32>
    %143 = vector.broadcast %135 : vector<16x1xf32> to vector<16x32xf32>
    %144 = arith.subf %129, %143 : vector<16x32xf32>
    %cst_45 = arith.constant 9.99999974E-6 : f32
    %145 = vector.broadcast %cst_45 : f32 to vector<16x1xf32>
    %146 = arith.addf %142, %145 : vector<16x1xf32>
    %147 = math.rsqrt %146 : vector<16x1xf32>
    %148 = vector.broadcast %147 : vector<16x1xf32> to vector<16x32xf32>
    %149 = arith.mulf %144, %148 : vector<16x32xf32>
    %150 = vector.broadcast %130 : vector<1x32xf32> to vector<16x32xf32>
    %151 = arith.mulf %149, %150 : vector<16x32xf32>
    %152 = vector.broadcast %131 : vector<1x32xf32> to vector<16x32xf32>
    %153 = arith.addf %151, %152 : vector<16x32xf32>
    %154 = arith.truncf %153 : vector<16x32xf32> to vector<16x32xbf16>
    %c0_46 = arith.constant 0 : index
    %c0_47 = arith.constant 0 : index
    %155 = vector.load %arg8[%c0_46, %c0_47] : memref<16x32xbf16, #tpu.memory_space<vmem>>, vector<16x32xbf16>
    tpu.vector_store %arg8[%c0_46, %c0_47], %154 {strides = array<i32>} : memref<16x32xbf16, #tpu.memory_space<vmem>>, vector<16x32xbf16>,
    return
  }
  func.func @transform_0(%arg0: i32) -> (i32, i32) {
    %c0_i32 = arith.constant 0 : i32
    %c0_i32_0 = arith.constant 0 : i32
    %c0_i32_1 = arith.constant 0 : i32
    return %c0_i32, %c0_i32_0 : i32, i32
  }
  func.func @transform_1(%arg0: i32) -> (i32, i32) {
    %c0_i32 = arith.constant 0 : i32
    %c0_i32_0 = arith.constant 0 : i32
    %c0_i32_1 = arith.constant 0 : i32
    return %c0_i32, %c0_i32_0 : i32, i32
  }
  func.func @transform_2(%arg0: i32) -> (i32, i32) {
    %c0_i32 = arith.constant 0 : i32
    %c0_i32_0 = arith.constant 0 : i32
    %c0_i32_1 = arith.constant 0 : i32
    return %c0_i32, %c0_i32_0 : i32, i32
  }
  func.func @transform_3(%arg0: i32) -> (i32, i32) {
    %c0_i32 = arith.constant 0 : i32
    %c0_i32_0 = arith.constant 0 : i32
    %c0_i32_1 = arith.constant 0 : i32
    return %c0_i32, %c0_i32_0 : i32, i32
  }
  func.func @transform_4(%arg0: i32) -> (i32, i32) {
    %c0_i32 = arith.constant 0 : i32
    %c0_i32_0 = arith.constant 0 : i32
    %c0_i32_1 = arith.constant 0 : i32
    return %c0_i32, %c0_i32_0 : i32, i32
  }
  func.func @transform_5(%arg0: i32) -> (i32, i32) {
    %c0_i32 = arith.constant 0 : i32
    %c0_i32_0 = arith.constant 0 : i32
    %c0_i32_1 = arith.constant 0 : i32
    return %c0_i32, %c0_i32_0 : i32, i32
  }
  func.func @transform_6(%arg0: i32) -> (i32, i32) {
    %c0_i32 = arith.constant 0 : i32
    %c0_i32_0 = arith.constant 0 : i32
    %c0_i32_1 = arith.constant 0 : i32
    return %c0_i32, %c0_i32_0 : i32, i32
  }
  func.func @transform_7(%arg0: i32) -> (i32, i32) {
    %c0_i32 = arith.constant 0 : i32
    %c0_i32_0 = arith.constant 0 : i32
    %c0_i32_1 = arith.constant 0 : i32
    return %c0_i32, %c0_i32_0 : i32, i32
  }
}

module attributes {stable_mosaic.version = 11 : i64} {
  func.func @_cross_attn_block_kernel(%arg0: i32, %arg1: memref<16x32xbf16, #tpu.memory_space<vmem>>, %arg2: memref<16x32xbf16, #tpu.memory_space<vmem>>, %arg3: memref<32x32xbf16, #tpu.memory_space<vmem>>, %arg4: memref<1x32xf32, #tpu.memory_space<vmem>>, %arg5: memref<32x64xbf16, #tpu.memory_space<vmem>>, %arg6: memref<1x64xf32, #tpu.memory_space<vmem>>, %arg7: memref<32x32xbf16, #tpu.memory_space<vmem>>, %arg8: memref<1x32xf32, #tpu.memory_space<vmem>>, %arg9: memref<1x32xf32, #tpu.memory_space<vmem>>, %arg10: memref<1x32xf32, #tpu.memory_space<vmem>>, %arg11: memref<16x32xbf16, #tpu.memory_space<vmem>>) attributes {dimension_semantics = [#tpu.dimension_semantics<arbitrary>], iteration_bounds = array<i64: 1>, scalar_prefetch = 0 : i64, scratch_operands = 0 : i64, tpu.core_type = #tpu.core_type<tc>, window_params = [{pipeline_mode = #tpu.pipeline_mode<synchronous>, transform_indices = @transform_0, window_bounds = array<i64: 16, 32>}, {pipeline_mode = #tpu.pipeline_mode<synchronous>, transform_indices = @transform_1, window_bounds = array<i64: 16, 32>}, {pipeline_mode = #tpu.pipeline_mode<synchronous>, transform_indices = @transform_2, window_bounds = array<i64: 32, 32>}, {pipeline_mode = #tpu.pipeline_mode<synchronous>, transform_indices = @transform_3, window_bounds = array<i64: 1, 32>}, {pipeline_mode = #tpu.pipeline_mode<synchronous>, transform_indices = @transform_4, window_bounds = array<i64: 32, 64>}, {pipeline_mode = #tpu.pipeline_mode<synchronous>, transform_indices = @transform_5, window_bounds = array<i64: 1, 64>}, {pipeline_mode = #tpu.pipeline_mode<synchronous>, transform_indices = @transform_6, window_bounds = array<i64: 32, 32>}, {pipeline_mode = #tpu.pipeline_mode<synchronous>, transform_indices = @transform_7, window_bounds = array<i64: 1, 32>}, {pipeline_mode = #tpu.pipeline_mode<synchronous>, transform_indices = @transform_8, window_bounds = array<i64: 1, 32>}, {pipeline_mode = #tpu.pipeline_mode<synchronous>, transform_indices = @transform_9, window_bounds = array<i64: 1, 32>}, {pipeline_mode = #tpu.pipeline_mode<synchronous>, transform_indices = @transform_10, window_bounds = array<i64: 16, 32>}]} {
    %c0 = arith.constant 0 : index
    %c0_0 = arith.constant 0 : index
    %0 = vector.load %arg1[%c0, %c0_0] : memref<16x32xbf16, #tpu.memory_space<vmem>>, vector<16x32xbf16>
    %c0_1 = arith.constant 0 : index
    %c0_2 = arith.constant 0 : index
    %1 = vector.load %arg2[%c0_1, %c0_2] : memref<16x32xbf16, #tpu.memory_space<vmem>>, vector<16x32xbf16>
    %c0_3 = arith.constant 0 : index
    %c0_4 = arith.constant 0 : index
    %2 = vector.load %arg3[%c0_3, %c0_4] : memref<32x32xbf16, #tpu.memory_space<vmem>>, vector<32x32xbf16>
    %cst = arith.constant dense<0.000000e+00> : vector<16x32xf32>
    %3 = tpu.matmul %0, %2, %cst {dimension_numbers = #tpu.dot_dimension_numbers<[1], [0], [0], [1], [0, 0, 1, 1], [], []>} : vector<16x32xbf16>, vector<32x32xbf16>, vector<16x32xf32> -> vector<16x32xf32>
    %c0_5 = arith.constant 0 : index
    %c0_6 = arith.constant 0 : index
    %4 = vector.load %arg4[%c0_5, %c0_6] : memref<1x32xf32, #tpu.memory_space<vmem>>, vector<1x32xf32>
    %5 = vector.broadcast %4 : vector<1x32xf32> to vector<16x32xf32>
    %6 = arith.addf %3, %5 : vector<16x32xf32>
    %7 = arith.truncf %6 : vector<16x32xf32> to vector<16x32xbf16>
    %c0_7 = arith.constant 0 : index
    %c0_8 = arith.constant 0 : index
    %8 = vector.load %arg5[%c0_7, %c0_8] : memref<32x64xbf16, #tpu.memory_space<vmem>>, vector<32x64xbf16>
    %cst_9 = arith.constant dense<0.000000e+00> : vector<16x64xf32>
    %9 = tpu.matmul %1, %8, %cst_9 {dimension_numbers = #tpu.dot_dimension_numbers<[1], [0], [0], [1], [0, 0, 1, 1], [], []>} : vector<16x32xbf16>, vector<32x64xbf16>, vector<16x64xf32> -> vector<16x64xf32>
    %c0_10 = arith.constant 0 : index
    %c0_11 = arith.constant 0 : index
    %10 = vector.load %arg6[%c0_10, %c0_11] : memref<1x64xf32, #tpu.memory_space<vmem>>, vector<1x64xf32>
    %11 = vector.broadcast %10 : vector<1x64xf32> to vector<16x64xf32>
    %12 = arith.addf %9, %11 : vector<16x64xf32>
    %13 = arith.truncf %12 : vector<16x64xf32> to vector<16x64xbf16>
    %14 = vector.extract_strided_slice %13 {offsets = [0, 0], sizes = [16, 32], strides = [1, 1]} : vector<16x64xbf16> to vector<16x32xbf16>
    %15 = vector.extract_strided_slice %13 {offsets = [0, 32], sizes = [16, 32], strides = [1, 1]} : vector<16x64xbf16> to vector<16x32xbf16>
    %c0_12 = arith.constant 0 : index
    %c0_13 = arith.constant 0 : index
    %16 = vector.load %arg7[%c0_12, %c0_13] : memref<32x32xbf16, #tpu.memory_space<vmem>>, vector<32x32xbf16>
    %17 = vector.shape_cast %7 : vector<16x32xbf16> to vector<2x8x32xbf16>
    %18 = vector.shape_cast %14 : vector<16x32xbf16> to vector<2x8x32xbf16>
    %19 = vector.shape_cast %15 : vector<16x32xbf16> to vector<2x8x32xbf16>
    %20 = vector.extract_strided_slice %17 {offsets = [0, 0, 0], sizes = [2, 8, 8], strides = [1, 1, 1]} : vector<2x8x32xbf16> to vector<2x8x8xbf16>
    %21 = vector.extract_strided_slice %18 {offsets = [0, 0, 0], sizes = [2, 8, 8], strides = [1, 1, 1]} : vector<2x8x32xbf16> to vector<2x8x8xbf16>
    "tpu.trace_start"() <{level = 10 : i32, message = "bqd,bkd->bqk"}> : () -> ()
    %cst_14 = arith.constant dense<0.000000e+00> : vector<2x8x8xf32>
    %22 = tpu.matmul %20, %21, %cst_14 {dimension_numbers = #tpu.dot_dimension_numbers<[2], [2], [1], [1], [0, 0, 0, 1, 1, 1], [0], [0]>} : vector<2x8x8xbf16>, vector<2x8x8xbf16>, vector<2x8x8xf32> -> vector<2x8x8xf32>
    "tpu.trace_stop"() : () -> ()
    %cst_15 = arith.constant 0.353553385 : f32
    %23 = vector.broadcast %cst_15 : f32 to vector<2x8x8xf32>
    %24 = arith.mulf %22, %23 : vector<2x8x8xf32>
    %cst_16 = arith.constant dense<0xFF800000> : vector<2x8xf32>
    %25 = vector.multi_reduction <maximumf>, %24, %cst_16 [2] : vector<2x8x8xf32> to vector<2x8xf32>
    %26 = vector.shape_cast %25 : vector<2x8xf32> to vector<2x8x1xf32>
    %27 = vector.broadcast %26 : vector<2x8x1xf32> to vector<2x8x8xf32>
    %28 = arith.subf %24, %27 : vector<2x8x8xf32>
    %29 = math.exp %28 : vector<2x8x8xf32>
    %cst_17 = arith.constant dense<0.000000e+00> : vector<2x8xf32>
    %30 = vector.multi_reduction <add>, %29, %cst_17 [2] : vector<2x8x8xf32> to vector<2x8xf32>
    %31 = vector.shape_cast %30 : vector<2x8xf32> to vector<2x8x1xf32>
    %32 = tpu.reciprocal %31 {approx = true} : vector<2x8x1xf32> -> vector<2x8x1xf32>
    %33 = vector.broadcast %32 : vector<2x8x1xf32> to vector<2x8x8xf32>
    %34 = arith.mulf %29, %33 : vector<2x8x8xf32>
    %35 = arith.truncf %34 : vector<2x8x8xf32> to vector<2x8x8xbf16>
    %36 = vector.extract_strided_slice %19 {offsets = [0, 0, 0], sizes = [2, 8, 8], strides = [1, 1, 1]} : vector<2x8x32xbf16> to vector<2x8x8xbf16>
    "tpu.trace_start"() <{level = 10 : i32, message = "bqk,bkd->bqd"}> : () -> ()
    %cst_18 = arith.constant dense<0.000000e+00> : vector<2x8x8xf32>
    %37 = tpu.matmul %35, %36, %cst_18 {dimension_numbers = #tpu.dot_dimension_numbers<[2], [1], [1], [2], [0, 0, 0, 1, 1, 2], [0], [0]>} : vector<2x8x8xbf16>, vector<2x8x8xbf16>, vector<2x8x8xf32> -> vector<2x8x8xf32>
    "tpu.trace_stop"() : () -> ()
    %38 = vector.shape_cast %37 : vector<2x8x8xf32> to vector<16x8xf32>
    %39 = arith.truncf %38 : vector<16x8xf32> to vector<16x8xbf16>
    %40 = vector.extract_strided_slice %16 {offsets = [0, 0], sizes = [8, 32], strides = [1, 1]} : vector<32x32xbf16> to vector<8x32xbf16>
    %cst_19 = arith.constant dense<0.000000e+00> : vector<16x32xf32>
    %41 = tpu.matmul %39, %40, %cst_19 {dimension_numbers = #tpu.dot_dimension_numbers<[1], [0], [0], [1], [0, 0, 1, 1], [], []>} : vector<16x8xbf16>, vector<8x32xbf16>, vector<16x32xf32> -> vector<16x32xf32>
    %42 = vector.extract_strided_slice %17 {offsets = [0, 0, 8], sizes = [2, 8, 8], strides = [1, 1, 1]} : vector<2x8x32xbf16> to vector<2x8x8xbf16>
    %43 = vector.extract_strided_slice %18 {offsets = [0, 0, 8], sizes = [2, 8, 8], strides = [1, 1, 1]} : vector<2x8x32xbf16> to vector<2x8x8xbf16>
    "tpu.trace_start"() <{level = 10 : i32, message = "bqd,bkd->bqk"}> : () -> ()
    %cst_20 = arith.constant dense<0.000000e+00> : vector<2x8x8xf32>
    %44 = tpu.matmul %42, %43, %cst_20 {dimension_numbers = #tpu.dot_dimension_numbers<[2], [2], [1], [1], [0, 0, 0, 1, 1, 1], [0], [0]>} : vector<2x8x8xbf16>, vector<2x8x8xbf16>, vector<2x8x8xf32> -> vector<2x8x8xf32>
    "tpu.trace_stop"() : () -> ()
    %cst_21 = arith.constant 0.353553385 : f32
    %45 = vector.broadcast %cst_21 : f32 to vector<2x8x8xf32>
    %46 = arith.mulf %44, %45 : vector<2x8x8xf32>
    %cst_22 = arith.constant dense<0xFF800000> : vector<2x8xf32>
    %47 = vector.multi_reduction <maximumf>, %46, %cst_22 [2] : vector<2x8x8xf32> to vector<2x8xf32>
    %48 = vector.shape_cast %47 : vector<2x8xf32> to vector<2x8x1xf32>
    %49 = vector.broadcast %48 : vector<2x8x1xf32> to vector<2x8x8xf32>
    %50 = arith.subf %46, %49 : vector<2x8x8xf32>
    %51 = math.exp %50 : vector<2x8x8xf32>
    %cst_23 = arith.constant dense<0.000000e+00> : vector<2x8xf32>
    %52 = vector.multi_reduction <add>, %51, %cst_23 [2] : vector<2x8x8xf32> to vector<2x8xf32>
    %53 = vector.shape_cast %52 : vector<2x8xf32> to vector<2x8x1xf32>
    %54 = tpu.reciprocal %53 {approx = true} : vector<2x8x1xf32> -> vector<2x8x1xf32>
    %55 = vector.broadcast %54 : vector<2x8x1xf32> to vector<2x8x8xf32>
    %56 = arith.mulf %51, %55 : vector<2x8x8xf32>
    %57 = arith.truncf %56 : vector<2x8x8xf32> to vector<2x8x8xbf16>
    %58 = vector.extract_strided_slice %19 {offsets = [0, 0, 8], sizes = [2, 8, 8], strides = [1, 1, 1]} : vector<2x8x32xbf16> to vector<2x8x8xbf16>
    "tpu.trace_start"() <{level = 10 : i32, message = "bqk,bkd->bqd"}> : () -> ()
    %cst_24 = arith.constant dense<0.000000e+00> : vector<2x8x8xf32>
    %59 = tpu.matmul %57, %58, %cst_24 {dimension_numbers = #tpu.dot_dimension_numbers<[2], [1], [1], [2], [0, 0, 0, 1, 1, 2], [0], [0]>} : vector<2x8x8xbf16>, vector<2x8x8xbf16>, vector<2x8x8xf32> -> vector<2x8x8xf32>
    "tpu.trace_stop"() : () -> ()
    %60 = vector.shape_cast %59 : vector<2x8x8xf32> to vector<16x8xf32>
    %61 = arith.truncf %60 : vector<16x8xf32> to vector<16x8xbf16>
    %62 = vector.extract_strided_slice %16 {offsets = [8, 0], sizes = [8, 32], strides = [1, 1]} : vector<32x32xbf16> to vector<8x32xbf16>
    %cst_25 = arith.constant dense<0.000000e+00> : vector<16x32xf32>
    %63 = tpu.matmul %61, %62, %cst_25 {dimension_numbers = #tpu.dot_dimension_numbers<[1], [0], [0], [1], [0, 0, 1, 1], [], []>} : vector<16x8xbf16>, vector<8x32xbf16>, vector<16x32xf32> -> vector<16x32xf32>
    %64 = arith.addf %41, %63 : vector<16x32xf32>
    %65 = vector.extract_strided_slice %17 {offsets = [0, 0, 16], sizes = [2, 8, 8], strides = [1, 1, 1]} : vector<2x8x32xbf16> to vector<2x8x8xbf16>
    %66 = vector.extract_strided_slice %18 {offsets = [0, 0, 16], sizes = [2, 8, 8], strides = [1, 1, 1]} : vector<2x8x32xbf16> to vector<2x8x8xbf16>
    "tpu.trace_start"() <{level = 10 : i32, message = "bqd,bkd->bqk"}> : () -> ()
    %cst_26 = arith.constant dense<0.000000e+00> : vector<2x8x8xf32>
    %67 = tpu.matmul %65, %66, %cst_26 {dimension_numbers = #tpu.dot_dimension_numbers<[2], [2], [1], [1], [0, 0, 0, 1, 1, 1], [0], [0]>} : vector<2x8x8xbf16>, vector<2x8x8xbf16>, vector<2x8x8xf32> -> vector<2x8x8xf32>
    "tpu.trace_stop"() : () -> ()
    %cst_27 = arith.constant 0.353553385 : f32
    %68 = vector.broadcast %cst_27 : f32 to vector<2x8x8xf32>
    %69 = arith.mulf %67, %68 : vector<2x8x8xf32>
    %cst_28 = arith.constant dense<0xFF800000> : vector<2x8xf32>
    %70 = vector.multi_reduction <maximumf>, %69, %cst_28 [2] : vector<2x8x8xf32> to vector<2x8xf32>
    %71 = vector.shape_cast %70 : vector<2x8xf32> to vector<2x8x1xf32>
    %72 = vector.broadcast %71 : vector<2x8x1xf32> to vector<2x8x8xf32>
    %73 = arith.subf %69, %72 : vector<2x8x8xf32>
    %74 = math.exp %73 : vector<2x8x8xf32>
    %cst_29 = arith.constant dense<0.000000e+00> : vector<2x8xf32>
    %75 = vector.multi_reduction <add>, %74, %cst_29 [2] : vector<2x8x8xf32> to vector<2x8xf32>
    %76 = vector.shape_cast %75 : vector<2x8xf32> to vector<2x8x1xf32>
    %77 = tpu.reciprocal %76 {approx = true} : vector<2x8x1xf32> -> vector<2x8x1xf32>
    %78 = vector.broadcast %77 : vector<2x8x1xf32> to vector<2x8x8xf32>
    %79 = arith.mulf %74, %78 : vector<2x8x8xf32>
    %80 = arith.truncf %79 : vector<2x8x8xf32> to vector<2x8x8xbf16>
    %81 = vector.extract_strided_slice %19 {offsets = [0, 0, 16], sizes = [2, 8, 8], strides = [1, 1, 1]} : vector<2x8x32xbf16> to vector<2x8x8xbf16>
    "tpu.trace_start"() <{level = 10 : i32, message = "bqk,bkd->bqd"}> : () -> ()
    %cst_30 = arith.constant dense<0.000000e+00> : vector<2x8x8xf32>
    %82 = tpu.matmul %80, %81, %cst_30 {dimension_numbers = #tpu.dot_dimension_numbers<[2], [1], [1], [2], [0, 0, 0, 1, 1, 2], [0], [0]>} : vector<2x8x8xbf16>, vector<2x8x8xbf16>, vector<2x8x8xf32> -> vector<2x8x8xf32>
    "tpu.trace_stop"() : () -> ()
    %83 = vector.shape_cast %82 : vector<2x8x8xf32> to vector<16x8xf32>
    %84 = arith.truncf %83 : vector<16x8xf32> to vector<16x8xbf16>
    %85 = vector.extract_strided_slice %16 {offsets = [16, 0], sizes = [8, 32], strides = [1, 1]} : vector<32x32xbf16> to vector<8x32xbf16>
    %cst_31 = arith.constant dense<0.000000e+00> : vector<16x32xf32>
    %86 = tpu.matmul %84, %85, %cst_31 {dimension_numbers = #tpu.dot_dimension_numbers<[1], [0], [0], [1], [0, 0, 1, 1], [], []>} : vector<16x8xbf16>, vector<8x32xbf16>, vector<16x32xf32> -> vector<16x32xf32>
    %87 = arith.addf %64, %86 : vector<16x32xf32>
    %88 = vector.extract_strided_slice %17 {offsets = [0, 0, 24], sizes = [2, 8, 8], strides = [1, 1, 1]} : vector<2x8x32xbf16> to vector<2x8x8xbf16>
    %89 = vector.extract_strided_slice %18 {offsets = [0, 0, 24], sizes = [2, 8, 8], strides = [1, 1, 1]} : vector<2x8x32xbf16> to vector<2x8x8xbf16>
    "tpu.trace_start"() <{level = 10 : i32, message = "bqd,bkd->bqk"}> : () -> ()
    %cst_32 = arith.constant dense<0.000000e+00> : vector<2x8x8xf32>
    %90 = tpu.matmul %88, %89, %cst_32 {dimension_numbers = #tpu.dot_dimension_numbers<[2], [2], [1], [1], [0, 0, 0, 1, 1, 1], [0], [0]>} : vector<2x8x8xbf16>, vector<2x8x8xbf16>, vector<2x8x8xf32> -> vector<2x8x8xf32>
    "tpu.trace_stop"() : () -> ()
    %cst_33 = arith.constant 0.353553385 : f32
    %91 = vector.broadcast %cst_33 : f32 to vector<2x8x8xf32>
    %92 = arith.mulf %90, %91 : vector<2x8x8xf32>
    %cst_34 = arith.constant dense<0xFF800000> : vector<2x8xf32>
    %93 = vector.multi_reduction <maximumf>, %92, %cst_34 [2] : vector<2x8x8xf32> to vector<2x8xf32>
    %94 = vector.shape_cast %93 : vector<2x8xf32> to vector<2x8x1xf32>
    %95 = vector.broadcast %94 : vector<2x8x1xf32> to vector<2x8x8xf32>
    %96 = arith.subf %92, %95 : vector<2x8x8xf32>
    %97 = math.exp %96 : vector<2x8x8xf32>
    %cst_35 = arith.constant dense<0.000000e+00> : vector<2x8xf32>
    %98 = vector.multi_reduction <add>, %97, %cst_35 [2] : vector<2x8x8xf32> to vector<2x8xf32>
    %99 = vector.shape_cast %98 : vector<2x8xf32> to vector<2x8x1xf32>
    %100 = tpu.reciprocal %99 {approx = true} : vector<2x8x1xf32> -> vector<2x8x1xf32>
    %101 = vector.broadcast %100 : vector<2x8x1xf32> to vector<2x8x8xf32>
    %102 = arith.mulf %97, %101 : vector<2x8x8xf32>
    %103 = arith.truncf %102 : vector<2x8x8xf32> to vector<2x8x8xbf16>
    %104 = vector.extract_strided_slice %19 {offsets = [0, 0, 24], sizes = [2, 8, 8], strides = [1, 1, 1]} : vector<2x8x32xbf16> to vector<2x8x8xbf16>
    "tpu.trace_start"() <{level = 10 : i32, message = "bqk,bkd->bqd"}> : () -> ()
    %cst_36 = arith.constant dense<0.000000e+00> : vector<2x8x8xf32>
    %105 = tpu.matmul %103, %104, %cst_36 {dimension_numbers = #tpu.dot_dimension_numbers<[2], [1], [1], [2], [0, 0, 0, 1, 1, 2], [0], [0]>} : vector<2x8x8xbf16>, vector<2x8x8xbf16>, vector<2x8x8xf32> -> vector<2x8x8xf32>
    "tpu.trace_stop"() : () -> ()
    %106 = vector.shape_cast %105 : vector<2x8x8xf32> to vector<16x8xf32>
    %107 = arith.truncf %106 : vector<16x8xf32> to vector<16x8xbf16>
    %108 = vector.extract_strided_slice %16 {offsets = [24, 0], sizes = [8, 32], strides = [1, 1]} : vector<32x32xbf16> to vector<8x32xbf16>
    %cst_37 = arith.constant dense<0.000000e+00> : vector<16x32xf32>
    %109 = tpu.matmul %107, %108, %cst_37 {dimension_numbers = #tpu.dot_dimension_numbers<[1], [0], [0], [1], [0, 0, 1, 1], [], []>} : vector<16x8xbf16>, vector<8x32xbf16>, vector<16x32xf32> -> vector<16x32xf32>
    %110 = arith.addf %87, %109 : vector<16x32xf32>
    %c0_38 = arith.constant 0 : index
    %c0_39 = arith.constant 0 : index
    %111 = vector.load %arg8[%c0_38, %c0_39] : memref<1x32xf32, #tpu.memory_space<vmem>>, vector<1x32xf32>
    %112 = vector.broadcast %111 : vector<1x32xf32> to vector<16x32xf32>
    %113 = arith.addf %110, %112 : vector<16x32xf32>
    %114 = arith.extf %0 : vector<16x32xbf16> to vector<16x32xf32>
    %115 = arith.addf %114, %113 : vector<16x32xf32>
    %c0_40 = arith.constant 0 : index
    %c0_41 = arith.constant 0 : index
    %116 = vector.load %arg9[%c0_40, %c0_41] : memref<1x32xf32, #tpu.memory_space<vmem>>, vector<1x32xf32>
    %c0_42 = arith.constant 0 : index
    %c0_43 = arith.constant 0 : index
    %117 = vector.load %arg10[%c0_42, %c0_43] : memref<1x32xf32, #tpu.memory_space<vmem>>, vector<1x32xf32>
    %cst_44 = arith.constant dense<0.000000e+00> : vector<16xf32>
    %118 = vector.multi_reduction <add>, %115, %cst_44 [1] : vector<16x32xf32> to vector<16xf32>
    %119 = vector.shape_cast %118 : vector<16xf32> to vector<16x1xf32>
    %cst_45 = arith.constant 3.200000e+01 : f32
    %120 = vector.broadcast %cst_45 : f32 to vector<16x1xf32>
    %121 = arith.divf %119, %120 : vector<16x1xf32>
    %122 = vector.broadcast %121 : vector<16x1xf32> to vector<16x32xf32>
    %123 = arith.subf %115, %122 : vector<16x32xf32>
    %124 = arith.mulf %123, %123 : vector<16x32xf32>
    %cst_46 = arith.constant dense<0.000000e+00> : vector<16xf32>
    %125 = vector.multi_reduction <add>, %124, %cst_46 [1] : vector<16x32xf32> to vector<16xf32>
    %126 = vector.shape_cast %125 : vector<16xf32> to vector<16x1xf32>
    %cst_47 = arith.constant 3.200000e+01 : f32
    %127 = vector.broadcast %cst_47 : f32 to vector<16x1xf32>
    %128 = arith.divf %126, %127 : vector<16x1xf32>
    %129 = vector.broadcast %121 : vector<16x1xf32> to vector<16x32xf32>
    %130 = arith.subf %115, %129 : vector<16x32xf32>
    %cst_48 = arith.constant 9.99999974E-6 : f32
    %131 = vector.broadcast %cst_48 : f32 to vector<16x1xf32>
    %132 = arith.addf %128, %131 : vector<16x1xf32>
    %133 = math.rsqrt %132 : vector<16x1xf32>
    %134 = vector.broadcast %133 : vector<16x1xf32> to vector<16x32xf32>
    %135 = arith.mulf %130, %134 : vector<16x32xf32>
    %136 = vector.broadcast %116 : vector<1x32xf32> to vector<16x32xf32>
    %137 = arith.mulf %135, %136 : vector<16x32xf32>
    %138 = vector.broadcast %117 : vector<1x32xf32> to vector<16x32xf32>
    %139 = arith.addf %137, %138 : vector<16x32xf32>
    %140 = arith.truncf %139 : vector<16x32xf32> to vector<16x32xbf16>
    %c0_49 = arith.constant 0 : index
    %c0_50 = arith.constant 0 : index
    %141 = vector.load %arg11[%c0_49, %c0_50] : memref<16x32xbf16, #tpu.memory_space<vmem>>, vector<16x32xbf16>
    tpu.vector_store %arg11[%c0_49, %c0_50], %140 {strides = array<i32>} : memref<16x32xbf16, #tpu.memory_space<vmem>>, vector<16x32xbf16>,
    return
  }
  func.func @transform_0(%arg0: i32) -> (i32, i32) {
    %c0_i32 = arith.constant 0 : i32
    %c0_i32_0 = arith.constant 0 : i32
    %c0_i32_1 = arith.constant 0 : i32
    return %c0_i32, %c0_i32_0 : i32, i32
  }
  func.func @transform_1(%arg0: i32) -> (i32, i32) {
    %c0_i32 = arith.constant 0 : i32
    %c0_i32_0 = arith.constant 0 : i32
    %c0_i32_1 = arith.constant 0 : i32
    return %c0_i32, %c0_i32_0 : i32, i32
  }
  func.func @transform_2(%arg0: i32) -> (i32, i32) {
    %c0_i32 = arith.constant 0 : i32
    %c0_i32_0 = arith.constant 0 : i32
    %c0_i32_1 = arith.constant 0 : i32
    return %c0_i32, %c0_i32_0 : i32, i32
  }
  func.func @transform_3(%arg0: i32) -> (i32, i32) {
    %c0_i32 = arith.constant 0 : i32
    %c0_i32_0 = arith.constant 0 : i32
    %c0_i32_1 = arith.constant 0 : i32
    return %c0_i32, %c0_i32_0 : i32, i32
  }
  func.func @transform_4(%arg0: i32) -> (i32, i32) {
    %c0_i32 = arith.constant 0 : i32
    %c0_i32_0 = arith.constant 0 : i32
    %c0_i32_1 = arith.constant 0 : i32
    return %c0_i32, %c0_i32_0 : i32, i32
  }
  func.func @transform_5(%arg0: i32) -> (i32, i32) {
    %c0_i32 = arith.constant 0 : i32
    %c0_i32_0 = arith.constant 0 : i32
    %c0_i32_1 = arith.constant 0 : i32
    return %c0_i32, %c0_i32_0 : i32, i32
  }
  func.func @transform_6(%arg0: i32) -> (i32, i32) {
    %c0_i32 = arith.constant 0 : i32
    %c0_i32_0 = arith.constant 0 : i32
    %c0_i32_1 = arith.constant 0 : i32
    return %c0_i32, %c0_i32_0 : i32, i32
  }
  func.func @transform_7(%arg0: i32) -> (i32, i32) {
    %c0_i32 = arith.constant 0 : i32
    %c0_i32_0 = arith.constant 0 : i32
    %c0_i32_1 = arith.constant 0 : i32
    return %c0_i32, %c0_i32_0 : i32, i32
  }
  func.func @transform_8(%arg0: i32) -> (i32, i32) {
    %c0_i32 = arith.constant 0 : i32
    %c0_i32_0 = arith.constant 0 : i32
    %c0_i32_1 = arith.constant 0 : i32
    return %c0_i32, %c0_i32_0 : i32, i32
  }
  func.func @transform_9(%arg0: i32) -> (i32, i32) {
    %c0_i32 = arith.constant 0 : i32
    %c0_i32_0 = arith.constant 0 : i32
    %c0_i32_1 = arith.constant 0 : i32
    return %c0_i32, %c0_i32_0 : i32, i32
  }
  func.func @transform_10(%arg0: i32) -> (i32, i32) {
    %c0_i32 = arith.constant 0 : i32
    %c0_i32_0 = arith.constant 0 : i32
    %c0_i32_1 = arith.constant 0 : i32
    return %c0_i32, %c0_i32_0 : i32, i32
  }
}

module attributes {stable_mosaic.version = 11 : i64} {
  func.func @_ffn_block_kernel(%arg0: i32, %arg1: memref<16x32xbf16, #tpu.memory_space<vmem>>, %arg2: memref<32x64xbf16, #tpu.memory_space<vmem>>, %arg3: memref<1x64xf32, #tpu.memory_space<vmem>>, %arg4: memref<64x32xbf16, #tpu.memory_space<vmem>>, %arg5: memref<1x32xf32, #tpu.memory_space<vmem>>, %arg6: memref<1x32xf32, #tpu.memory_space<vmem>>, %arg7: memref<1x32xf32, #tpu.memory_space<vmem>>, %arg8: memref<16x32xbf16, #tpu.memory_space<vmem>>) attributes {dimension_semantics = [#tpu.dimension_semantics<arbitrary>], iteration_bounds = array<i64: 1>, scalar_prefetch = 0 : i64, scratch_operands = 0 : i64, tpu.core_type = #tpu.core_type<tc>, window_params = [{pipeline_mode = #tpu.pipeline_mode<synchronous>, transform_indices = @transform_0, window_bounds = array<i64: 16, 32>}, {pipeline_mode = #tpu.pipeline_mode<synchronous>, transform_indices = @transform_1, window_bounds = array<i64: 32, 64>}, {pipeline_mode = #tpu.pipeline_mode<synchronous>, transform_indices = @transform_2, window_bounds = array<i64: 1, 64>}, {pipeline_mode = #tpu.pipeline_mode<synchronous>, transform_indices = @transform_3, window_bounds = array<i64: 64, 32>}, {pipeline_mode = #tpu.pipeline_mode<synchronous>, transform_indices = @transform_4, window_bounds = array<i64: 1, 32>}, {pipeline_mode = #tpu.pipeline_mode<synchronous>, transform_indices = @transform_5, window_bounds = array<i64: 1, 32>}, {pipeline_mode = #tpu.pipeline_mode<synchronous>, transform_indices = @transform_6, window_bounds = array<i64: 1, 32>}, {pipeline_mode = #tpu.pipeline_mode<synchronous>, transform_indices = @transform_7, window_bounds = array<i64: 16, 32>}]} {
    %c0 = arith.constant 0 : index
    %c0_0 = arith.constant 0 : index
    %0 = vector.load %arg1[%c0, %c0_0] : memref<16x32xbf16, #tpu.memory_space<vmem>>, vector<16x32xbf16>
    %c0_1 = arith.constant 0 : index
    %c0_2 = arith.constant 0 : index
    %1 = vector.load %arg2[%c0_1, %c0_2] : memref<32x64xbf16, #tpu.memory_space<vmem>>, vector<32x64xbf16>
    %cst = arith.constant dense<0.000000e+00> : vector<16x64xf32>
    %2 = tpu.matmul %0, %1, %cst {dimension_numbers = #tpu.dot_dimension_numbers<[1], [0], [0], [1], [0, 0, 1, 1], [], []>} : vector<16x32xbf16>, vector<32x64xbf16>, vector<16x64xf32> -> vector<16x64xf32>
    %c0_3 = arith.constant 0 : index
    %c0_4 = arith.constant 0 : index
    %3 = vector.load %arg3[%c0_3, %c0_4] : memref<1x64xf32, #tpu.memory_space<vmem>>, vector<1x64xf32>
    %4 = vector.broadcast %3 : vector<1x64xf32> to vector<16x64xf32>
    %5 = arith.addf %2, %4 : vector<16x64xf32>
    %cst_5 = arith.constant 0.000000e+00 : f32
    %6 = vector.broadcast %cst_5 : f32 to vector<16x64xf32>
    %7 = arith.maximumf %5, %6 : vector<16x64xf32>
    %8 = arith.truncf %7 : vector<16x64xf32> to vector<16x64xbf16>
    %c0_6 = arith.constant 0 : index
    %c0_7 = arith.constant 0 : index
    %9 = vector.load %arg4[%c0_6, %c0_7] : memref<64x32xbf16, #tpu.memory_space<vmem>>, vector<64x32xbf16>
    %cst_8 = arith.constant dense<0.000000e+00> : vector<16x32xf32>
    %10 = tpu.matmul %8, %9, %cst_8 {dimension_numbers = #tpu.dot_dimension_numbers<[1], [0], [0], [1], [0, 0, 1, 1], [], []>} : vector<16x64xbf16>, vector<64x32xbf16>, vector<16x32xf32> -> vector<16x32xf32>
    %c0_9 = arith.constant 0 : index
    %c0_10 = arith.constant 0 : index
    %11 = vector.load %arg5[%c0_9, %c0_10] : memref<1x32xf32, #tpu.memory_space<vmem>>, vector<1x32xf32>
    %12 = vector.broadcast %11 : vector<1x32xf32> to vector<16x32xf32>
    %13 = arith.addf %10, %12 : vector<16x32xf32>
    %14 = arith.extf %0 : vector<16x32xbf16> to vector<16x32xf32>
    %15 = arith.addf %14, %13 : vector<16x32xf32>
    %c0_11 = arith.constant 0 : index
    %c0_12 = arith.constant 0 : index
    %16 = vector.load %arg6[%c0_11, %c0_12] : memref<1x32xf32, #tpu.memory_space<vmem>>, vector<1x32xf32>
    %c0_13 = arith.constant 0 : index
    %c0_14 = arith.constant 0 : index
    %17 = vector.load %arg7[%c0_13, %c0_14] : memref<1x32xf32, #tpu.memory_space<vmem>>, vector<1x32xf32>
    %cst_15 = arith.constant dense<0.000000e+00> : vector<16xf32>
    %18 = vector.multi_reduction <add>, %15, %cst_15 [1] : vector<16x32xf32> to vector<16xf32>
    %19 = vector.shape_cast %18 : vector<16xf32> to vector<16x1xf32>
    %cst_16 = arith.constant 3.200000e+01 : f32
    %20 = vector.broadcast %cst_16 : f32 to vector<16x1xf32>
    %21 = arith.divf %19, %20 : vector<16x1xf32>
    %22 = vector.broadcast %21 : vector<16x1xf32> to vector<16x32xf32>
    %23 = arith.subf %15, %22 : vector<16x32xf32>
    %24 = arith.mulf %23, %23 : vector<16x32xf32>
    %cst_17 = arith.constant dense<0.000000e+00> : vector<16xf32>
    %25 = vector.multi_reduction <add>, %24, %cst_17 [1] : vector<16x32xf32> to vector<16xf32>
    %26 = vector.shape_cast %25 : vector<16xf32> to vector<16x1xf32>
    %cst_18 = arith.constant 3.200000e+01 : f32
    %27 = vector.broadcast %cst_18 : f32 to vector<16x1xf32>
    %28 = arith.divf %26, %27 : vector<16x1xf32>
    %29 = vector.broadcast %21 : vector<16x1xf32> to vector<16x32xf32>
    %30 = arith.subf %15, %29 : vector<16x32xf32>
    %cst_19 = arith.constant 9.99999974E-6 : f32
    %31 = vector.broadcast %cst_19 : f32 to vector<16x1xf32>
    %32 = arith.addf %28, %31 : vector<16x1xf32>
    %33 = math.rsqrt %32 : vector<16x1xf32>
    %34 = vector.broadcast %33 : vector<16x1xf32> to vector<16x32xf32>
    %35 = arith.mulf %30, %34 : vector<16x32xf32>
    %36 = vector.broadcast %16 : vector<1x32xf32> to vector<16x32xf32>
    %37 = arith.mulf %35, %36 : vector<16x32xf32>
    %38 = vector.broadcast %17 : vector<1x32xf32> to vector<16x32xf32>
    %39 = arith.addf %37, %38 : vector<16x32xf32>
    %40 = arith.truncf %39 : vector<16x32xf32> to vector<16x32xbf16>
    %c0_20 = arith.constant 0 : index
    %c0_21 = arith.constant 0 : index
    %41 = vector.load %arg8[%c0_20, %c0_21] : memref<16x32xbf16, #tpu.memory_space<vmem>>, vector<16x32xbf16>
    tpu.vector_store %arg8[%c0_20, %c0_21], %40 {strides = array<i32>} : memref<16x32xbf16, #tpu.memory_space<vmem>>, vector<16x32xbf16>,
    return
  }
  func.func @transform_0(%arg0: i32) -> (i32, i32) {
    %c0_i32 = arith.constant 0 : i32
    %c0_i32_0 = arith.constant 0 : i32
    %c0_i32_1 = arith.constant 0 : i32
    return %c0_i32, %c0_i32_0 : i32, i32
  }
  func.func @transform_1(%arg0: i32) -> (i32, i32) {
    %c0_i32 = arith.constant 0 : i32
    %c0_i32_0 = arith.constant 0 : i32
    %c0_i32_1 = arith.constant 0 : i32
    return %c0_i32, %c0_i32_0 : i32, i32
  }
  func.func @transform_2(%arg0: i32) -> (i32, i32) {
    %c0_i32 = arith.constant 0 : i32
    %c0_i32_0 = arith.constant 0 : i32
    %c0_i32_1 = arith.constant 0 : i32
    return %c0_i32, %c0_i32_0 : i32, i32
  }
  func.func @transform_3(%arg0: i32) -> (i32, i32) {
    %c0_i32 = arith.constant 0 : i32
    %c0_i32_0 = arith.constant 0 : i32
    %c0_i32_1 = arith.constant 0 : i32
    return %c0_i32, %c0_i32_0 : i32, i32
  }
  func.func @transform_4(%arg0: i32) -> (i32, i32) {
    %c0_i32 = arith.constant 0 : i32
    %c0_i32_0 = arith.constant 0 : i32
    %c0_i32_1 = arith.constant 0 : i32
    return %c0_i32, %c0_i32_0 : i32, i32
  }
  func.func @transform_5(%arg0: i32) -> (i32, i32) {
    %c0_i32 = arith.constant 0 : i32
    %c0_i32_0 = arith.constant 0 : i32
    %c0_i32_1 = arith.constant 0 : i32
    return %c0_i32, %c0_i32_0 : i32, i32
  }
  func.func @transform_6(%arg0: i32) -> (i32, i32) {
    %c0_i32 = arith.constant 0 : i32
    %c0_i32_0 = arith.constant 0 : i32
    %c0_i32_1 = arith.constant 0 : i32
    return %c0_i32, %c0_i32_0 : i32, i32
  }
  func.func @transform_7(%arg0: i32) -> (i32, i32) {
    %c0_i32 = arith.constant 0 : i32
    %c0_i32_0 = arith.constant 0 : i32
    %c0_i32_1 = arith.constant 0 : i32
    return %c0_i32, %c0_i32_0 : i32, i32
  }
}

module attributes {stable_mosaic.version = 11 : i64} {
  func.func @_linear_kernel(%arg0: i32, %arg1: i32, %arg2: memref<16x32xbf16, #tpu.memory_space<vmem>>, %arg3: memref<32x128xbf16, #tpu.memory_space<vmem>>, %arg4: memref<1x128xf32, #tpu.memory_space<vmem>>, %arg5: memref<16x128xf32, #tpu.memory_space<vmem>>) attributes {dimension_semantics = [#tpu.dimension_semantics<parallel>, #tpu.dimension_semantics<parallel>], iteration_bounds = array<i64: 1, 1>, scalar_prefetch = 0 : i64, scratch_operands = 0 : i64, tpu.core_type = #tpu.core_type<tc>, window_params = [{transform_indices = @transform_0, window_bounds = array<i64: 16, 32>}, {transform_indices = @transform_1, window_bounds = array<i64: 32, 128>}, {transform_indices = @transform_2, window_bounds = array<i64: 1, 128>}, {transform_indices = @transform_3, window_bounds = array<i64: 16, 128>}]} {
    %c0 = arith.constant 0 : index
    %c0_0 = arith.constant 0 : index
    %0 = vector.load %arg2[%c0, %c0_0] : memref<16x32xbf16, #tpu.memory_space<vmem>>, vector<16x32xbf16>
    %c0_1 = arith.constant 0 : index
    %c0_2 = arith.constant 0 : index
    %1 = vector.load %arg3[%c0_1, %c0_2] : memref<32x128xbf16, #tpu.memory_space<vmem>>, vector<32x128xbf16>
    %cst = arith.constant dense<0.000000e+00> : vector<16x128xf32>
    %2 = tpu.matmul %0, %1, %cst {dimension_numbers = #tpu.dot_dimension_numbers<[1], [0], [0], [1], [0, 0, 1, 1], [], []>} : vector<16x32xbf16>, vector<32x128xbf16>, vector<16x128xf32> -> vector<16x128xf32>
    %c0_3 = arith.constant 0 : index
    %c0_4 = arith.constant 0 : index
    %3 = vector.load %arg4[%c0_3, %c0_4] : memref<1x128xf32, #tpu.memory_space<vmem>>, vector<1x128xf32>
    %4 = vector.broadcast %3 : vector<1x128xf32> to vector<16x128xf32>
    %5 = arith.addf %2, %4 : vector<16x128xf32>
    %c0_5 = arith.constant 0 : index
    %c0_6 = arith.constant 0 : index
    %6 = vector.load %arg5[%c0_5, %c0_6] : memref<16x128xf32, #tpu.memory_space<vmem>>, vector<16x128xf32>
    tpu.vector_store %arg5[%c0_5, %c0_6], %5 {strides = array<i32>} : memref<16x128xf32, #tpu.memory_space<vmem>>, vector<16x128xf32>,
    return
  }
  func.func @transform_0(%arg0: i32, %arg1: i32) -> (i32, i32) {
    %c0_i32 = arith.constant 0 : i32
    %c0_i32_0 = arith.constant 0 : i32
    return %arg0, %c0_i32 : i32, i32
  }
  func.func @transform_1(%arg0: i32, %arg1: i32) -> (i32, i32) {
    %c0_i32 = arith.constant 0 : i32
    %c0_i32_0 = arith.constant 0 : i32
    return %c0_i32, %arg1 : i32, i32
  }
  func.func @transform_2(%arg0: i32, %arg1: i32) -> (i32, i32) {
    %c0_i32 = arith.constant 0 : i32
    %c0_i32_0 = arith.constant 0 : i32
    return %c0_i32, %arg1 : i32, i32
  }
  func.func @transform_3(%arg0: i32, %arg1: i32) -> (i32, i32) {
    %c0_i32 = arith.constant 0 : i32
    return %arg0, %arg1 : i32, i32
  }
}

</mosaic_0001>

<llo_original>
// kernel: transformer_forward.12
$region0: #{transformer_forward.12}
  #allocation0 [shape = 'u32[]', space=smem, size = 0x4, offset = 0x4, fixed_abs, tag = 'smem constant byte address 0x4 - core index']
  #allocation1 [shape = 'u32[144,128]{1,0:T(1,128)}', space=vmem, size = 0x12000, scoped, tag = 'internal scratch']
  %s0 = inlined_call_operand.vmem [shape: bf16[16,32], index: 0, kind: input, shape index: {}]
  %s1 = inlined_call_operand.vmem [shape: bf16[32,64], index: 1, kind: input, shape index: {}]
  %s2 = inlined_call_operand.vmem [shape: f32[1,64], index: 2, kind: input, shape index: {}]
  %s3 = inlined_call_operand.vmem [shape: bf16[64,32], index: 3, kind: input, shape index: {}]
  %s4 = inlined_call_operand.vmem [shape: f32[1,32], index: 4, kind: input, shape index: {}]
  %s5 = inlined_call_operand.vmem [shape: f32[1,32], index: 5, kind: input, shape index: {}]
  %s6 = inlined_call_operand.vmem [shape: f32[1,32], index: 6, kind: input, shape index: {}]
  %s7 = inlined_call_operand.vmem [shape: bf16[16,32], index: 7, kind: output, shape index: {}]
  %s8 = sld [smem:[#allocation0]]
  $region38: #{transformer_forward.12} parent=0
    _
  %s10 = ssub.s32 1, %s8
  %s11 = scalar_select 0, %s10, %s8
  // Predicated region
  $region2: #{transformer_forward.12} parent=0 // pred_check
    _
  $region3: #{transformer_forward.12} parent=0 // pred_check_branch
    %13 = sbr.rel (0) target = $region5
  $region4: #{transformer_forward.12} parent=0 // pred_region
    _
  $region5: #{transformer_forward.12} parent=0 // pred_fallthru
    _
  // Predicated region
  $region6: #{transformer_forward.12} parent=0 // pred_check
    _
  $region7: #{transformer_forward.12} parent=0 // pred_check_branch
    %15 = sbr.rel (0) target = $region9
  $region8: #{transformer_forward.12} parent=0 // pred_region
    _
  $region9: #{transformer_forward.12} parent=0 // pred_fallthru
    _
  // Predicated region
  $region10: #{transformer_forward.12} parent=0 // pred_check
    _
  $region11: #{transformer_forward.12} parent=0 // pred_check_branch
    %17 = sbr.rel (0) target = $region13
  $region12: #{transformer_forward.12} parent=0 // pred_region
    _
  $region13: #{transformer_forward.12} parent=0 // pred_fallthru
    _
  // Predicated region
  $region14: #{transformer_forward.12} parent=0 // pred_check
    _
  $region15: #{transformer_forward.12} parent=0 // pred_check_branch
    %19 = sbr.rel (0) target = $region17
  $region16: #{transformer_forward.12} parent=0 // pred_region
    _
  $region17: #{transformer_forward.12} parent=0 // pred_fallthru
    _
  // Predicated region
  $region18: #{transformer_forward.12} parent=0 // pred_check
    _
  $region19: #{transformer_forward.12} parent=0 // pred_check_branch
    %21 = sbr.rel (0) target = $region21
  $region20: #{transformer_forward.12} parent=0 // pred_region
    _
  $region21: #{transformer_forward.12} parent=0 // pred_fallthru
    _
  // Predicated region
  $region22: #{transformer_forward.12} parent=0 // pred_check
    _
  $region23: #{transformer_forward.12} parent=0 // pred_check_branch
    %23 = sbr.rel (0) target = $region25
  $region24: #{transformer_forward.12} parent=0 // pred_region
    _
  $region25: #{transformer_forward.12} parent=0 // pred_fallthru
    _
  // Predicated region
  $region26: #{transformer_forward.12} parent=0 // pred_check
    _
  $region27: #{transformer_forward.12} parent=0 // pred_check_branch
    %25 = sbr.rel (0) target = $region29
  $region28: #{transformer_forward.12} parent=0 // pred_region
    _
  $region29: #{transformer_forward.12} parent=0 // pred_fallthru
    _
  %v27 = vld [vmem:[%s0] sm:$0xf]
  %v28 = vld [vmem:[%s0 + $0x4] sm:$0xf]
  %v29 = vld [vmem:[%s1] sm:$0xf]
  %v30 = vld [vmem:[%s1 + $0x4] sm:$0xf]
  %v31 = vld [vmem:[%s1 + $0x8] sm:$0xf]
  %v32 = vld [vmem:[%s1 + $0xc] sm:$0xf]
  %v33 = vld [vmem:[%s2] sm:$0x1]
  %v35 = vlaneseq
  %v36 = vshrl.u32 %v35, 7
  %v37 = vsub.s32 0, %v36
  %v38 = vrot.slane %v33, %v37
  %v42 = vunpack.c.l.b16 %v27
  %v43 = vunpack.c.l.b16 %v28
  %v44 = vpack.c.b16 %v43, %v42
  %v49 = vunpack.c.l.b16 %v29
  %v50 = vunpack.c.l.b16 %v30
  %v51 = vunpack.c.l.b16 %v31
  %v52 = vunpack.c.l.b16 %v32
  %v53 = vpack.c.b16 %v50, %v49
  %v54 = vpack.c.b16 %v52, %v51
  %vm57 = vcmask 261120
  %v59 = vsel %vm57, %v44, 0
  %61 = vmatprep.subr.bf16.mxu0 0
  %62 = vmatpush1.bf16.msra.mxu0 %v53
  %63 = vmatprep.subr.bf16.mxu0 0
  %64 = vmatpush1.bf16.msra.mxu0 %v54
  %65 = vmatprep.subr.bf16.mxu0 0
  %66 = vmatpush1.bf16.msra.mxu0 0
  %67 = vmatprep.subr.bf16.mxu0 0
  %68 = vmatpush1.bf16.msra.mxu0 0
  %69 = vmatprep.subr.bf16.mxu0 0
  %70 = vmatpush1.bf16.msra.mxu0 0
  %71 = vmatprep.subr.bf16.mxu0 0
  %72 = vmatpush1.bf16.msra.mxu0 0
  %73 = vmatprep.subr.bf16.mxu0 0
  %74 = vmatpush1.bf16.msra.mxu0 0
  %75 = vmatprep.subr.bf16.mxu0 0
  %76 = vmatpush1.bf16.msra.mxu0 0
  %77 = vmatprep.subr.bf16.mxu0 0
  %78 = vmatpush1.bf16.msra.mxu0 0
  %79 = vmatprep.subr.bf16.mxu0 0
  %80 = vmatpush1.bf16.msra.mxu0 0
  %81 = vmatprep.subr.bf16.mxu0 0
  %82 = vmatpush1.bf16.msra.mxu0 0
  %83 = vmatprep.subr.bf16.mxu0 0
  %84 = vmatpush1.bf16.msra.mxu0 0
  %85 = vmatprep.subr.bf16.mxu0 0
  %86 = vmatpush1.bf16.msra.mxu0 0
  %87 = vmatprep.subr.bf16.mxu0 0
  %88 = vmatpush1.bf16.msra.mxu0 0
  %89 = vmatprep.subr.bf16.mxu0 0
  %90 = vmatpush1.bf16.msra.mxu0 0
  %91 = vmatprep.subr.bf16.mxu0 0
  %92 = vmatpush1.bf16.msra.mxu0 0
  %93 = vmatprep.mubr.bf16.mxu0 0
  %94 = vmatmul.mubr.bf16.gmra.mrb[0].mxu0 %v59
  %v95 = vpop.f32.mrb[0].mxu0
  %v96 = vadd.f32 %v38, %v95
  %v97 = vpop.f32.mrb[0].mxu0
  %v98 = vpop.f32.mrb[0].mxu0
  %v99 = vadd.f32 %v38, %v98
  %v100 = vpop.f32.mrb[0].mxu0
  %101 = vdwg.mxu0
  %v102 = vmax.f32 %v96, 0.0
  %v103 = vmax.f32 %v99, 0.0
  %v104 = vpack.c.bf16 %v103, %v102
  %v105 = vld [vmem:[%s3] sm:$0xf]
  %v106 = vld [vmem:[%s3 + $0x4] sm:$0xf]
  %v107 = vld [vmem:[%s3 + $0x8] sm:$0xf]
  %v108 = vld [vmem:[%s3 + $0xc] sm:$0xf]
  %v109 = vld [vmem:[%s3 + $0x10] sm:$0xf]
  %v110 = vld [vmem:[%s3 + $0x14] sm:$0xf]
  %v111 = vld [vmem:[%s3 + $0x18] sm:$0xf]
  %v112 = vld [vmem:[%s3 + $0x1c] sm:$0xf]
  %v113 = vld [vmem:[%s4] sm:$0x1]
  %v115 = vlaneseq
  %v116 = vshrl.u32 %v115, 7
  %v117 = vsub.s32 0, %v116
  %v118 = vrot.slane %v113, %v117
  %v128 = vunpack.c.l.b16 %v105
  %v129 = vunpack.c.l.b16 %v106
  %v130 = vunpack.c.l.b16 %v107
  %v131 = vunpack.c.l.b16 %v108
  %v132 = vunpack.c.l.b16 %v109
  %v133 = vunpack.c.l.b16 %v110
  %v134 = vunpack.c.l.b16 %v111
  %v135 = vunpack.c.l.b16 %v112
  %v136 = vpack.c.b16 %v129, %v128
  %v137 = vpack.c.b16 %v131, %v130
  %v138 = vpack.c.b16 %v133, %v132
  %v139 = vpack.c.b16 %v135, %v134
  %vm144 = vcmask 523264
  %v146 = vsel %vm144, %v104, 0
  %148 = vmatprep.subr.bf16.mxu0 0
  %149 = vmatpush1.bf16.msra.mxu0 %v136
  %150 = vmatprep.subr.bf16.mxu0 0
  %151 = vmatpush1.bf16.msra.mxu0 %v137
  %152 = vmatprep.subr.bf16.mxu0 0
  %153 = vmatpush1.bf16.msra.mxu0 %v138
  %154 = vmatprep.subr.bf16.mxu0 0
  %155 = vmatpush1.bf16.msra.mxu0 %v139
  %156 = vmatprep.subr.bf16.mxu0 0
  %157 = vmatpush1.bf16.msra.mxu0 0
  %158 = vmatprep.subr.bf16.mxu0 0
  %159 = vmatpush1.bf16.msra.mxu0 0
  %160 = vmatprep.subr.bf16.mxu0 0
  %161 = vmatpush1.bf16.msra.mxu0 0
  %162 = vmatprep.subr.bf16.mxu0 0
  %163 = vmatpush1.bf16.msra.mxu0 0
  %164 = vmatprep.subr.bf16.mxu0 0
  %165 = vmatpush1.bf16.msra.mxu0 0
  %166 = vmatprep.subr.bf16.mxu0 0
  %167 = vmatpush1.bf16.msra.mxu0 0
  %168 = vmatprep.subr.bf16.mxu0 0
  %169 = vmatpush1.bf16.msra.mxu0 0
  %170 = vmatprep.subr.bf16.mxu0 0
  %171 = vmatpush1.bf16.msra.mxu0 0
  %172 = vmatprep.subr.bf16.mxu0 0
  %173 = vmatpush1.bf16.msra.mxu0 0
  %174 = vmatprep.subr.bf16.mxu0 0
  %175 = vmatpush1.bf16.msra.mxu0 0
  %176 = vmatprep.subr.bf16.mxu0 0
  %177 = vmatpush1.bf16.msra.mxu0 0
  %178 = vmatprep.subr.bf16.mxu0 0
  %179 = vmatpush1.bf16.msra.mxu0 0
  %180 = vmatprep.mubr.bf16.mxu0 0
  %181 = vmatmul.mubr.bf16.gmra.mrb[0].mxu0 %v146
  %v182 = vpop.f32.mrb[0].mxu0
  %v183 = vadd.f32 %v118, %v182
  %v184 = vpop.f32.mrb[0].mxu0
  %v185 = vpop.f32.mrb[0].mxu0
  %v186 = vadd.f32 %v118, %v185
  %v187 = vpop.f32.mrb[0].mxu0
  %188 = vdwg.mxu0
  %v189 = vunpack.c.l.bf16 %v27
  %v190 = vunpack.c.l.bf16 %v28
  %v191 = vadd.f32 %v189, %v183
  %v192 = vadd.f32 %v190, %v186
  %v193 = vld [vmem:[%s5] sm:$0x1]
  %v194 = vld [vmem:[%s6] sm:$0x1]
  %v195 = vsel %vm57, %v191, 0.0
  %196 = vadd.xlane.f32.xlu0 %v195
  %v197 = vpop.xlane.xlu0 %196
  %v198 = vsel %vm57, %v192, 0.0
  %199 = vadd.xlane.f32.xlu0 %v198
  %v200 = vpop.xlane.xlu0 %199
  %v201 = vrcp.pop 32.0
  %v202 = vmul.f32 %v197, %v201
  %v203 = vmul.f32 %v200, %v201
  %v204 = vsub.f32 %v191, %v202
  %v205 = vsub.f32 %v192, %v203
  %v206 = vmul.f32 %v204, %v204
  %v207 = vmul.f32 %v205, %v205
  %v208 = vsel %vm57, %v206, 0.0
  %209 = vadd.xlane.f32.xlu0 %v208
  %v210 = vpop.xlane.xlu0 %209
  %v211 = vsel %vm57, %v207, 0.0
  %212 = vadd.xlane.f32.xlu0 %v211
  %v213 = vpop.xlane.xlu0 %212
  %v214 = vmul.f32 %v210, %v201
  %v215 = vmul.f32 %v213, %v201
  %v216 = vadd.f32 %v214, 1e-05
  %v217 = vadd.f32 %v215, 1e-05
  %v218 = vrsqrt.pop %v216
  %v219 = vrsqrt.pop %v217
  %v220 = vmul.f32 %v204, %v218
  %v221 = vmul.f32 %v205, %v219
  %v223 = vlaneseq
  %v224 = vshrl.u32 %v223, 7
  %v225 = vsub.s32 0, %v224
  %v226 = vrot.slane %v193, %v225
  %v228 = vmul.f32 %v220, %v226
  %v229 = vmul.f32 %v221, %v226
  %v231 = vlaneseq
  %v232 = vshrl.u32 %v231, 7
  %v233 = vsub.s32 0, %v232
  %v234 = vrot.slane %v194, %v233
  %v236 = vadd.f32 %v228, %v234
  %v237 = vadd.f32 %v229, %v234
  %v238 = vpack.c.bf16 %v237, %v236
  %v240 = vunpack.c.l.b16 %v238
  %v241 = vunpack.c.h.b16 %v238
  %v242 = vpack.c.b16 %v240, %v240
  %v243 = vpack.c.b16 %v241, %v241
  %vm246 = vcmask 257024
  %247 = vst.msk [vmem:[%s7] sm:$0xf] %vm246, %v242
  %248 = vst.msk [vmem:[%s7 + $0x4] sm:$0xf] %vm246, %v243
  // Predicated region
  $region30: #{transformer_forward.12} parent=0 // pred_check
    _
  $region31: #{transformer_forward.12} parent=0 // pred_check_branch
    %250 = sbr.rel (0) target = $region33
  $region32: #{transformer_forward.12} parent=0 // pred_region
    _
  $region33: #{transformer_forward.12} parent=0 // pred_fallthru
    _
  // Predicated region
  $region34: #{transformer_forward.12} parent=0 // pred_check
    _
  $region35: #{transformer_forward.12} parent=0 // pred_check_branch
    %252 = sbr.rel (0) target = $region37
  $region36: #{transformer_forward.12} parent=0 // pred_region
    _
  $region37: #{transformer_forward.12} parent=0 // pred_fallthru
    _

// kernel: transformer_forward.11
$region0: #{transformer_forward.11}
  #allocation0 [shape = 'u32[]', space=smem, size = 0x4, offset = 0x4, fixed_abs, tag = 'smem constant byte address 0x4 - core index']
  #allocation1 [shape = 'u32[144,128]{1,0:T(1,128)}', space=vmem, size = 0x12000, scoped, tag = 'internal scratch']
  %s0 = inlined_call_operand.vmem [shape: bf16[16,32], index: 0, kind: input, shape index: {}]
  %s1 = inlined_call_operand.vmem [shape: bf16[32,96], index: 1, kind: input, shape index: {}]
  %s2 = inlined_call_operand.vmem [shape: f32[1,96], index: 2, kind: input, shape index: {}]
  %s3 = inlined_call_operand.vmem [shape: bf16[32,32], index: 3, kind: input, shape index: {}]
  %s4 = inlined_call_operand.vmem [shape: f32[1,32], index: 4, kind: input, shape index: {}]
  %s5 = inlined_call_operand.vmem [shape: f32[1,32], index: 5, kind: input, shape index: {}]
  %s6 = inlined_call_operand.vmem [shape: f32[1,32], index: 6, kind: input, shape index: {}]
  %s7 = inlined_call_operand.vmem [shape: bf16[16,32], index: 7, kind: output, shape index: {}]
  %s8 = sld [smem:[#allocation0]]
  $region38: #{transformer_forward.11} parent=0
    _
  %s10 = ssub.s32 1, %s8
  %s11 = scalar_select 0, %s10, %s8
  // Predicated region
  $region2: #{transformer_forward.11} parent=0 // pred_check
    _
  $region3: #{transformer_forward.11} parent=0 // pred_check_branch
    %13 = sbr.rel (0) target = $region5
  $region4: #{transformer_forward.11} parent=0 // pred_region
    _
  $region5: #{transformer_forward.11} parent=0 // pred_fallthru
    _
  // Predicated region
  $region6: #{transformer_forward.11} parent=0 // pred_check
    _
  $region7: #{transformer_forward.11} parent=0 // pred_check_branch
    %15 = sbr.rel (0) target = $region9
  $region8: #{transformer_forward.11} parent=0 // pred_region
    _
  $region9: #{transformer_forward.11} parent=0 // pred_fallthru
    _
  // Predicated region
  $region10: #{transformer_forward.11} parent=0 // pred_check
    _
  $region11: #{transformer_forward.11} parent=0 // pred_check_branch
    %17 = sbr.rel (0) target = $region13
  $region12: #{transformer_forward.11} parent=0 // pred_region
    _
  $region13: #{transformer_forward.11} parent=0 // pred_fallthru
    _
  // Predicated region
  $region14: #{transformer_forward.11} parent=0 // pred_check
    _
  $region15: #{transformer_forward.11} parent=0 // pred_check_branch
    %19 = sbr.rel (0) target = $region17
  $region16: #{transformer_forward.11} parent=0 // pred_region
    _
  $region17: #{transformer_forward.11} parent=0 // pred_fallthru
    _
  // Predicated region
  $region18: #{transformer_forward.11} parent=0 // pred_check
    _
  $region19: #{transformer_forward.11} parent=0 // pred_check_branch
    %21 = sbr.rel (0) target = $region21
  $region20: #{transformer_forward.11} parent=0 // pred_region
    _
  $region21: #{transformer_forward.11} parent=0 // pred_fallthru
    _
  // Predicated region
  $region22: #{transformer_forward.11} parent=0 // pred_check
    _
  $region23: #{transformer_forward.11} parent=0 // pred_check_branch
    %23 = sbr.rel (0) target = $region25
  $region24: #{transformer_forward.11} parent=0 // pred_region
    _
  $region25: #{transformer_forward.11} parent=0 // pred_fallthru
    _
  // Predicated region
  $region26: #{transformer_forward.11} parent=0 // pred_check
    _
  $region27: #{transformer_forward.11} parent=0 // pred_check_branch
    %25 = sbr.rel (0) target = $region29
  $region28: #{transformer_forward.11} parent=0 // pred_region
    _
  $region29: #{transformer_forward.11} parent=0 // pred_fallthru
    _
  %v27 = vld [vmem:[%s0] sm:$0xf]
  %v28 = vld [vmem:[%s0 + $0x4] sm:$0xf]
  %v29 = vld [vmem:[%s1] sm:$0xf]
  %v30 = vld [vmem:[%s1 + $0x4] sm:$0xf]
  %v31 = vld [vmem:[%s1 + $0x8] sm:$0xf]
  %v32 = vld [vmem:[%s1 + $0xc] sm:$0xf]
  %v33 = vld [vmem:[%s2] sm:$0x1]
  %v35 = vlaneseq
  %v36 = vshrl.u32 %v35, 7
  %v37 = vsub.s32 0, %v36
  %v38 = vrot.slane %v33, %v37
  %v42 = vunpack.c.l.b16 %v27
  %v43 = vunpack.c.l.b16 %v28
  %v44 = vpack.c.b16 %v43, %v42
  %v49 = vunpack.c.l.b16 %v29
  %v50 = vunpack.c.l.b16 %v30
  %v51 = vunpack.c.l.b16 %v31
  %v52 = vunpack.c.l.b16 %v32
  %v53 = vpack.c.b16 %v50, %v49
  %v54 = vpack.c.b16 %v52, %v51
  %vm57 = vcmask 261120
  %v59 = vsel %vm57, %v44, 0
  %61 = vmatprep.subr.bf16.mxu0 0
  %62 = vmatpush1.bf16.msra.mxu0 %v53
  %63 = vmatprep.subr.bf16.mxu0 0
  %64 = vmatpush1.bf16.msra.mxu0 %v54
  %65 = vmatprep.subr.bf16.mxu0 0
  %66 = vmatpush1.bf16.msra.mxu0 0
  %67 = vmatprep.subr.bf16.mxu0 0
  %68 = vmatpush1.bf16.msra.mxu0 0
  %69 = vmatprep.subr.bf16.mxu0 0
  %70 = vmatpush1.bf16.msra.mxu0 0
  %71 = vmatprep.subr.bf16.mxu0 0
  %72 = vmatpush1.bf16.msra.mxu0 0
  %73 = vmatprep.subr.bf16.mxu0 0
  %74 = vmatpush1.bf16.msra.mxu0 0
  %75 = vmatprep.subr.bf16.mxu0 0
  %76 = vmatpush1.bf16.msra.mxu0 0
  %77 = vmatprep.subr.bf16.mxu0 0
  %78 = vmatpush1.bf16.msra.mxu0 0
  %79 = vmatprep.subr.bf16.mxu0 0
  %80 = vmatpush1.bf16.msra.mxu0 0
  %81 = vmatprep.subr.bf16.mxu0 0
  %82 = vmatpush1.bf16.msra.mxu0 0
  %83 = vmatprep.subr.bf16.mxu0 0
  %84 = vmatpush1.bf16.msra.mxu0 0
  %85 = vmatprep.subr.bf16.mxu0 0
  %86 = vmatpush1.bf16.msra.mxu0 0
  %87 = vmatprep.subr.bf16.mxu0 0
  %88 = vmatpush1.bf16.msra.mxu0 0
  %89 = vmatprep.subr.bf16.mxu0 0
  %90 = vmatpush1.bf16.msra.mxu0 0
  %91 = vmatprep.subr.bf16.mxu0 0
  %92 = vmatpush1.bf16.msra.mxu0 0
  %93 = vmatprep.mubr.bf16.mxu0 0
  %94 = vmatmul.mubr.bf16.gmra.mrb[0].mxu0 %v59
  %v95 = vpop.f32.mrb[0].mxu0
  %v96 = vadd.f32 %v38, %v95
  %v97 = vpop.f32.mrb[0].mxu0
  %v98 = vpop.f32.mrb[0].mxu0
  %v99 = vadd.f32 %v38, %v98
  %v100 = vpop.f32.mrb[0].mxu0
  %101 = vdwg.mxu0
  %v102 = vpack.c.bf16 %v99, %v96
  %v103 = vld [vmem:[%s3] sm:$0xf]
  %v104 = vld [vmem:[%s3 + $0x4] sm:$0xf]
  %v105 = vld [vmem:[%s3 + $0x8] sm:$0xf]
  %v106 = vld [vmem:[%s3 + $0xc] sm:$0xf]
  %v108 = vunpack.c.l.b16 %v102
  %v109 = vunpack.c.h.b16 %v102
  %v110 = vpack.c.b16 %v108, %v108
  %v111 = vpack.c.b16 %v109, %v109
  %112 = vrot.lane.b32.xlu0 %v110, 96
  %v113 = vpop.permute.xlu0 %112
  %vm114 = vcmask 64512
  %v116 = vsel %vm114, %v110, 0
  %v119 = vsel %vm114, %v113, 0
  %121 = vmatprep.subr.bf16.mxu0 0
  %122 = vmatpush1.bf16.xpose.msra.mxu0 %v119
  %123 = vmatprep.subr.bf16.mxu0 0
  %124 = vmatpush1.bf16.xpose.msra.mxu0 0
  %125 = vmatprep.subr.bf16.mxu0 0
  %126 = vmatpush1.bf16.xpose.msra.mxu0 0
  %127 = vmatprep.subr.bf16.mxu0 0
  %128 = vmatpush1.bf16.xpose.msra.mxu0 0
  %129 = vmatprep.subr.bf16.mxu0 0
  %130 = vmatpush1.bf16.xpose.msra.mxu0 0
  %131 = vmatprep.subr.bf16.mxu0 0
  %132 = vmatpush1.bf16.xpose.msra.mxu0 0
  %133 = vmatprep.subr.bf16.mxu0 0
  %134 = vmatpush1.bf16.xpose.msra.mxu0 0
  %135 = vmatprep.subr.bf16.mxu0 0
  %136 = vmatpush1.bf16.xpose.msra.mxu0 0
  %137 = vmatprep.subr.bf16.mxu0 0
  %138 = vmatpush1.bf16.xpose.msra.mxu0 0
  %139 = vmatprep.subr.bf16.mxu0 0
  %140 = vmatpush1.bf16.xpose.msra.mxu0 0
  %141 = vmatprep.subr.bf16.mxu0 0
  %142 = vmatpush1.bf16.xpose.msra.mxu0 0
  %143 = vmatprep.subr.bf16.mxu0 0
  %144 = vmatpush1.bf16.xpose.msra.mxu0 0
  %145 = vmatprep.subr.bf16.mxu0 0
  %146 = vmatpush1.bf16.xpose.msra.mxu0 0
  %147 = vmatprep.subr.bf16.mxu0 0
  %148 = vmatpush1.bf16.xpose.msra.mxu0 0
  %149 = vmatprep.subr.bf16.mxu0 0
  %150 = vmatpush1.bf16.xpose.msra.mxu0 0
  %151 = vmatprep.subr.bf16.mxu0 0
  %152 = vmatpush1.bf16.xpose.msra.mxu0 0
  %153 = vmatprep.mubr.bf16.mxu0 0
  %154 = vmatmul.mubr.bf16.gmra.mrb[0].mxu0 %v116
  %v155 = vpop.f32.mrb[0].mxu0
  %v156 = vadd.f32 0.0, %v155
  %v157 = vpop.f32.mrb[0].mxu0
  %v158 = vpop.f32.mrb[0].mxu0
  %v159 = vpop.f32.mrb[0].mxu0
  %160 = vdwg.mxu0
  %161 = vrot.lane.b32.xlu0 %v111, 96
  %v162 = vpop.permute.xlu0 %161
  %v164 = vsel %vm114, %v111, 0
  %v167 = vsel %vm114, %v162, 0
  %169 = vmatprep.subr.bf16.mxu0 0
  %170 = vmatpush1.bf16.xpose.msra.mxu0 %v167
  %171 = vmatprep.subr.bf16.mxu0 0
  %172 = vmatpush1.bf16.xpose.msra.mxu0 0
  %173 = vmatprep.subr.bf16.mxu0 0
  %174 = vmatpush1.bf16.xpose.msra.mxu0 0
  %175 = vmatprep.subr.bf16.mxu0 0
  %176 = vmatpush1.bf16.xpose.msra.mxu0 0
  %177 = vmatprep.subr.bf16.mxu0 0
  %178 = vmatpush1.bf16.xpose.msra.mxu0 0
  %179 = vmatprep.subr.bf16.mxu0 0
  %180 = vmatpush1.bf16.xpose.msra.mxu0 0
  %181 = vmatprep.subr.bf16.mxu0 0
  %182 = vmatpush1.bf16.xpose.msra.mxu0 0
  %183 = vmatprep.subr.bf16.mxu0 0
  %184 = vmatpush1.bf16.xpose.msra.mxu0 0
  %185 = vmatprep.subr.bf16.mxu0 0
  %186 = vmatpush1.bf16.xpose.msra.mxu0 0
  %187 = vmatprep.subr.bf16.mxu0 0
  %188 = vmatpush1.bf16.xpose.msra.mxu0 0
  %189 = vmatprep.subr.bf16.mxu0 0
  %190 = vmatpush1.bf16.xpose.msra.mxu0 0
  %191 = vmatprep.subr.bf16.mxu0 0
  %192 = vmatpush1.bf16.xpose.msra.mxu0 0
  %193 = vmatprep.subr.bf16.mxu0 0
  %194 = vmatpush1.bf16.xpose.msra.mxu0 0
  %195 = vmatprep.subr.bf16.mxu0 0
  %196 = vmatpush1.bf16.xpose.msra.mxu0 0
  %197 = vmatprep.subr.bf16.mxu0 0
  %198 = vmatpush1.bf16.xpose.msra.mxu0 0
  %199 = vmatprep.subr.bf16.mxu0 0
  %200 = vmatpush1.bf16.xpose.msra.mxu0 0
  %201 = vmatprep.mubr.bf16.mxu0 0
  %202 = vmatmul.mubr.bf16.gmra.mrb[0].mxu0 %v164
  %v203 = vpop.f32.mrb[0].mxu0
  %v204 = vadd.f32 0.0, %v203
  %v205 = vpop.f32.mrb[0].mxu0
  %v206 = vpop.f32.mrb[0].mxu0
  %v207 = vpop.f32.mrb[0].mxu0
  %208 = vdwg.mxu0
  %v209 = vmul.f32 %v156, 0.35355338
  %v210 = vmul.f32 %v204, 0.35355338
  %v211 = vsel %vm114, %v209, -inf
  %212 = vmax.xlane.f32.xlu0 %v211
  %v213 = vpop.xlane.xlu0 %212
  %v214 = vsel %vm114, %v210, -inf
  %215 = vmax.xlane.f32.xlu0 %v214
  %v216 = vpop.xlane.xlu0 %215
  %v217 = vsub.f32 %v209, %v213
  %v218 = vsub.f32 %v210, %v216
  %v219 = vmul.f32 %v217, 1.442695
  %v220 = vpow.pop %v219
  %v221 = vmul.f32 %v218, 1.442695
  %v222 = vpow.pop %v221
  %v223 = vsel %vm114, %v220, 0.0
  %224 = vadd.xlane.f32.xlu0 %v223
  %v225 = vpop.xlane.xlu0 %224
  %v226 = vsel %vm114, %v222, 0.0
  %227 = vadd.xlane.f32.xlu0 %v226
  %v228 = vpop.xlane.xlu0 %227
  %v229 = vrcp.pop %v225
  %v230 = vrcp.pop %v228
  %v231 = vmul.f32 %v220, %v229
  %v232 = vmul.f32 %v222, %v230
  %v233 = vpack.c.bf16 %v231, %v231
  %v234 = vpack.c.bf16 %v232, %v232
  %235 = vrot.lane.b32.xlu0 %v110, 64
  %v236 = vpop.permute.xlu0 %235
  %v238 = vsel %vm114, %v233, 0
  %vm240 = vcmask 1043456
  %v242 = vsel %vm240, %v236, 0
  %244 = vmatprep.subr.bf16.mxu0 0
  %245 = vmatpush1.bf16.msra.mxu0 %v242
  %246 = vmatprep.subr.bf16.mxu0 0
  %247 = vmatpush1.bf16.msra.mxu0 0
  %248 = vmatprep.subr.bf16.mxu0 0
  %249 = vmatpush1.bf16.msra.mxu0 0
  %250 = vmatprep.subr.bf16.mxu0 0
  %251 = vmatpush1.bf16.msra.mxu0 0
  %252 = vmatprep.subr.bf16.mxu0 0
  %253 = vmatpush1.bf16.msra.mxu0 0
  %254 = vmatprep.subr.bf16.mxu0 0
  %255 = vmatpush1.bf16.msra.mxu0 0
  %256 = vmatprep.subr.bf16.mxu0 0
  %257 = vmatpush1.bf16.msra.mxu0 0
  %258 = vmatprep.subr.bf16.mxu0 0
  %259 = vmatpush1.bf16.msra.mxu0 0
  %260 = vmatprep.subr.bf16.mxu0 0
  %261 = vmatpush1.bf16.msra.mxu0 0
  %262 = vmatprep.subr.bf16.mxu0 0
  %263 = vmatpush1.bf16.msra.mxu0 0
  %264 = vmatprep.subr.bf16.mxu0 0
  %265 = vmatpush1.bf16.msra.mxu0 0
  %266 = vmatprep.subr.bf16.mxu0 0
  %267 = vmatpush1.bf16.msra.mxu0 0
  %268 = vmatprep.subr.bf16.mxu0 0
  %269 = vmatpush1.bf16.msra.mxu0 0
  %270 = vmatprep.subr.bf16.mxu0 0
  %271 = vmatpush1.bf16.msra.mxu0 0
  %272 = vmatprep.subr.bf16.mxu0 0
  %273 = vmatpush1.bf16.msra.mxu0 0
  %274 = vmatprep.subr.bf16.mxu0 0
  %275 = vmatpush1.bf16.msra.mxu0 0
  %276 = vmatprep.mubr.bf16.mxu0 0
  %277 = vmatmul.mubr.bf16.gmra.mrb[0].mxu0 %v238
  %v278 = vpop.f32.mrb[0].mxu0
  %v279 = vadd.f32 0.0, %v278
  %v280 = vpop.f32.mrb[0].mxu0
  %v281 = vpop.f32.mrb[0].mxu0
  %v282 = vpop.f32.mrb[0].mxu0
  %283 = vdwg.mxu0
  %284 = vrot.lane.b32.xlu0 %v111, 64
  %v285 = vpop.permute.xlu0 %284
  %v287 = vsel %vm114, %v234, 0
  %v290 = vsel %vm240, %v285, 0
  %292 = vmatprep.subr.bf16.mxu0 0
  %293 = vmatpush1.bf16.msra.mxu0 %v290
  %294 = vmatprep.subr.bf16.mxu0 0
  %295 = vmatpush1.bf16.msra.mxu0 0
  %296 = vmatprep.subr.bf16.mxu0 0
  %297 = vmatpush1.bf16.msra.mxu0 0
  %298 = vmatprep.subr.bf16.mxu0 0
  %299 = vmatpush1.bf16.msra.mxu0 0
  %300 = vmatprep.subr.bf16.mxu0 0
  %301 = vmatpush1.bf16.msra.mxu0 0
  %302 = vmatprep.subr.bf16.mxu0 0
  %303 = vmatpush1.bf16.msra.mxu0 0
  %304 = vmatprep.subr.bf16.mxu0 0
  %305 = vmatpush1.bf16.msra.mxu0 0
  %306 = vmatprep.subr.bf16.mxu0 0
  %307 = vmatpush1.bf16.msra.mxu0 0
  %308 = vmatprep.subr.bf16.mxu0 0
  %309 = vmatpush1.bf16.msra.mxu0 0
  %310 = vmatprep.subr.bf16.mxu0 0
  %311 = vmatpush1.bf16.msra.mxu0 0
  %312 = vmatprep.subr.bf16.mxu0 0
  %313 = vmatpush1.bf16.msra.mxu0 0
  %314 = vmatprep.subr.bf16.mxu0 0
  %315 = vmatpush1.bf16.msra.mxu0 0
  %316 = vmatprep.subr.bf16.mxu0 0
  %317 = vmatpush1.bf16.msra.mxu0 0
  %318 = vmatprep.subr.bf16.mxu0 0
  %319 = vmatpush1.bf16.msra.mxu0 0
  %320 = vmatprep.subr.bf16.mxu0 0
  %321 = vmatpush1.bf16.msra.mxu0 0
  %322 = vmatprep.subr.bf16.mxu0 0
  %323 = vmatpush1.bf16.msra.mxu0 0
  %324 = vmatprep.mubr.bf16.mxu0 0
  %325 = vmatmul.mubr.bf16.gmra.mrb[0].mxu0 %v287
  %v326 = vpop.f32.mrb[0].mxu0
  %v327 = vadd.f32 0.0, %v326
  %v328 = vpop.f32.mrb[0].mxu0
  %v329 = vpop.f32.mrb[0].mxu0
  %v330 = vpop.f32.mrb[0].mxu0
  %331 = vdwg.mxu0
  %v332 = vpack.c.bf16 %v327, %v279
  %333 = vrot.lane.b32.xlu0 %v110, 120
  %v334 = vpop.permute.xlu0 %333
  %335 = vrot.lane.b32.xlu0 %v110, 88
  %v336 = vpop.permute.xlu0 %335
  %v338 = vsel %vm114, %v334, 0
  %v341 = vsel %vm114, %v336, 0
  %343 = vmatprep.subr.bf16.mxu0 0
  %344 = vmatpush1.bf16.xpose.msra.mxu0 %v341
  %345 = vmatprep.subr.bf16.mxu0 0
  %346 = vmatpush1.bf16.xpose.msra.mxu0 0
  %347 = vmatprep.subr.bf16.mxu0 0
  %348 = vmatpush1.bf16.xpose.msra.mxu0 0
  %349 = vmatprep.subr.bf16.mxu0 0
  %350 = vmatpush1.bf16.xpose.msra.mxu0 0
  %351 = vmatprep.subr.bf16.mxu0 0
  %352 = vmatpush1.bf16.xpose.msra.mxu0 0
  %353 = vmatprep.subr.bf16.mxu0 0
  %354 = vmatpush1.bf16.xpose.msra.mxu0 0
  %355 = vmatprep.subr.bf16.mxu0 0
  %356 = vmatpush1.bf16.xpose.msra.mxu0 0
  %357 = vmatprep.subr.bf16.mxu0 0
  %358 = vmatpush1.bf16.xpose.msra.mxu0 0
  %359 = vmatprep.subr.bf16.mxu0 0
  %360 = vmatpush1.bf16.xpose.msra.mxu0 0
  %361 = vmatprep.subr.bf16.mxu0 0
  %362 = vmatpush1.bf16.xpose.msra.mxu0 0
  %363 = vmatprep.subr.bf16.mxu0 0
  %364 = vmatpush1.bf16.xpose.msra.mxu0 0
  %365 = vmatprep.subr.bf16.mxu0 0
  %366 = vmatpush1.bf16.xpose.msra.mxu0 0
  %367 = vmatprep.subr.bf16.mxu0 0
  %368 = vmatpush1.bf16.xpose.msra.mxu0 0
  %369 = vmatprep.subr.bf16.mxu0 0
  %370 = vmatpush1.bf16.xpose.msra.mxu0 0
  %371 = vmatprep.subr.bf16.mxu0 0
  %372 = vmatpush1.bf16.xpose.msra.mxu0 0
  %373 = vmatprep.subr.bf16.mxu0 0
  %374 = vmatpush1.bf16.xpose.msra.mxu0 0
  %375 = vmatprep.mubr.bf16.mxu0 0
  %376 = vmatmul.mubr.bf16.gmra.mrb[0].mxu0 %v338
  %v377 = vpop.f32.mrb[0].mxu0
  %v378 = vadd.f32 0.0, %v377
  %v379 = vpop.f32.mrb[0].mxu0
  %v380 = vpop.f32.mrb[0].mxu0
  %v381 = vpop.f32.mrb[0].mxu0
  %382 = vdwg.mxu0
  %383 = vrot.lane.b32.xlu0 %v111, 120
  %v384 = vpop.permute.xlu0 %383
  %385 = vrot.lane.b32.xlu0 %v111, 88
  %v386 = vpop.permute.xlu0 %385
  %v388 = vsel %vm114, %v384, 0
  %v391 = vsel %vm114, %v386, 0
  %393 = vmatprep.subr.bf16.mxu0 0
  %394 = vmatpush1.bf16.xpose.msra.mxu0 %v391
  %395 = vmatprep.subr.bf16.mxu0 0
  %396 = vmatpush1.bf16.xpose.msra.mxu0 0
  %397 = vmatprep.subr.bf16.mxu0 0
  %398 = vmatpush1.bf16.xpose.msra.mxu0 0
  %399 = vmatprep.subr.bf16.mxu0 0
  %400 = vmatpush1.bf16.xpose.msra.mxu0 0
  %401 = vmatprep.subr.bf16.mxu0 0
  %402 = vmatpush1.bf16.xpose.msra.mxu0 0
  %403 = vmatprep.subr.bf16.mxu0 0
  %404 = vmatpush1.bf16.xpose.msra.mxu0 0
  %405 = vmatprep.subr.bf16.mxu0 0
  %406 = vmatpush1.bf16.xpose.msra.mxu0 0
  %407 = vmatprep.subr.bf16.mxu0 0
  %408 = vmatpush1.bf16.xpose.msra.mxu0 0
  %409 = vmatprep.subr.bf16.mxu0 0
  %410 = vmatpush1.bf16.xpose.msra.mxu0 0
  %411 = vmatprep.subr.bf16.mxu0 0
  %412 = vmatpush1.bf16.xpose.msra.mxu0 0
  %413 = vmatprep.subr.bf16.mxu0 0
  %414 = vmatpush1.bf16.xpose.msra.mxu0 0
  %415 = vmatprep.subr.bf16.mxu0 0
  %416 = vmatpush1.bf16.xpose.msra.mxu0 0
  %417 = vmatprep.subr.bf16.mxu0 0
  %418 = vmatpush1.bf16.xpose.msra.mxu0 0
  %419 = vmatprep.subr.bf16.mxu0 0
  %420 = vmatpush1.bf16.xpose.msra.mxu0 0
  %421 = vmatprep.subr.bf16.mxu0 0
  %422 = vmatpush1.bf16.xpose.msra.mxu0 0
  %423 = vmatprep.subr.bf16.mxu0 0
  %424 = vmatpush1.bf16.xpose.msra.mxu0 0
  %425 = vmatprep.mubr.bf16.mxu0 0
  %426 = vmatmul.mubr.bf16.gmra.mrb[0].mxu0 %v388
  %v427 = vpop.f32.mrb[0].mxu0
  %v428 = vadd.f32 0.0, %v427
  %v429 = vpop.f32.mrb[0].mxu0
  %v430 = vpop.f32.mrb[0].mxu0
  %v431 = vpop.f32.mrb[0].mxu0
  %432 = vdwg.mxu0
  %v433 = vmul.f32 %v378, 0.35355338
  %v434 = vmul.f32 %v428, 0.35355338
  %v435 = vsel %vm114, %v433, -inf
  %436 = vmax.xlane.f32.xlu0 %v435
  %v437 = vpop.xlane.xlu0 %436
  %v438 = vsel %vm114, %v434, -inf
  %439 = vmax.xlane.f32.xlu0 %v438
  %v440 = vpop.xlane.xlu0 %439
  %v441 = vsub.f32 %v433, %v437
  %v442 = vsub.f32 %v434, %v440
  %v443 = vmul.f32 %v441, 1.442695
  %v444 = vpow.pop %v443
  %v445 = vmul.f32 %v442, 1.442695
  %v446 = vpow.pop %v445
  %v447 = vsel %vm114, %v444, 0.0
  %448 = vadd.xlane.f32.xlu0 %v447
  %v449 = vpop.xlane.xlu0 %448
  %v450 = vsel %vm114, %v446, 0.0
  %451 = vadd.xlane.f32.xlu0 %v450
  %v452 = vpop.xlane.xlu0 %451
  %v453 = vrcp.pop %v449
  %v454 = vrcp.pop %v452
  %v455 = vmul.f32 %v444, %v453
  %v456 = vmul.f32 %v446, %v454
  %v457 = vpack.c.bf16 %v455, %v455
  %v458 = vpack.c.bf16 %v456, %v456
  %459 = vrot.lane.b32.xlu0 %v110, 56
  %v460 = vpop.permute.xlu0 %459
  %v462 = vsel %vm114, %v457, 0
  %v465 = vsel %vm240, %v460, 0
  %467 = vmatprep.subr.bf16.mxu0 0
  %468 = vmatpush1.bf16.msra.mxu0 %v465
  %469 = vmatprep.subr.bf16.mxu0 0
  %470 = vmatpush1.bf16.msra.mxu0 0
  %471 = vmatprep.subr.bf16.mxu0 0
  %472 = vmatpush1.bf16.msra.mxu0 0
  %473 = vmatprep.subr.bf16.mxu0 0
  %474 = vmatpush1.bf16.msra.mxu0 0
  %475 = vmatprep.subr.bf16.mxu0 0
  %476 = vmatpush1.bf16.msra.mxu0 0
  %477 = vmatprep.subr.bf16.mxu0 0
  %478 = vmatpush1.bf16.msra.mxu0 0
  %479 = vmatprep.subr.bf16.mxu0 0
  %480 = vmatpush1.bf16.msra.mxu0 0
  %481 = vmatprep.subr.bf16.mxu0 0
  %482 = vmatpush1.bf16.msra.mxu0 0
  %483 = vmatprep.subr.bf16.mxu0 0
  %484 = vmatpush1.bf16.msra.mxu0 0
  %485 = vmatprep.subr.bf16.mxu0 0
  %486 = vmatpush1.bf16.msra.mxu0 0
  %487 = vmatprep.subr.bf16.mxu0 0
  %488 = vmatpush1.bf16.msra.mxu0 0
  %489 = vmatprep.subr.bf16.mxu0 0
  %490 = vmatpush1.bf16.msra.mxu0 0
  %491 = vmatprep.subr.bf16.mxu0 0
  %492 = vmatpush1.bf16.msra.mxu0 0
  %493 = vmatprep.subr.bf16.mxu0 0
  %494 = vmatpush1.bf16.msra.mxu0 0
  %495 = vmatprep.subr.bf16.mxu0 0
  %496 = vmatpush1.bf16.msra.mxu0 0
  %497 = vmatprep.subr.bf16.mxu0 0
  %498 = vmatpush1.bf16.msra.mxu0 0
  %499 = vmatprep.mubr.bf16.mxu0 0
  %500 = vmatmul.mubr.bf16.gmra.mrb[0].mxu0 %v462
  %v501 = vpop.f32.mrb[0].mxu0
  %v502 = vadd.f32 0.0, %v501
  %v503 = vpop.f32.mrb[0].mxu0
  %v504 = vpop.f32.mrb[0].mxu0
  %v505 = vpop.f32.mrb[0].mxu0
  %506 = vdwg.mxu0
  %507 = vrot.lane.b32.xlu0 %v111, 56
  %v508 = vpop.permute.xlu0 %507
  %v510 = vsel %vm114, %v458, 0
  %v513 = vsel %vm240, %v508, 0
  %515 = vmatprep.subr.bf16.mxu0 0
  %516 = vmatpush1.bf16.msra.mxu0 %v513
  %517 = vmatprep.subr.bf16.mxu0 0
  %518 = vmatpush1.bf16.msra.mxu0 0
  %519 = vmatprep.subr.bf16.mxu0 0
  %520 = vmatpush1.bf16.msra.mxu0 0
  %521 = vmatprep.subr.bf16.mxu0 0
  %522 = vmatpush1.bf16.msra.mxu0 0
  %523 = vmatprep.subr.bf16.mxu0 0
  %524 = vmatpush1.bf16.msra.mxu0 0
  %525 = vmatprep.subr.bf16.mxu0 0
  %526 = vmatpush1.bf16.msra.mxu0 0
  %527 = vmatprep.subr.bf16.mxu0 0
  %528 = vmatpush1.bf16.msra.mxu0 0
  %529 = vmatprep.subr.bf16.mxu0 0
  %530 = vmatpush1.bf16.msra.mxu0 0
  %531 = vmatprep.subr.bf16.mxu0 0
  %532 = vmatpush1.bf16.msra.mxu0 0
  %533 = vmatprep.subr.bf16.mxu0 0
  %534 = vmatpush1.bf16.msra.mxu0 0
  %535 = vmatprep.subr.bf16.mxu0 0
  %536 = vmatpush1.bf16.msra.mxu0 0
  %537 = vmatprep.subr.bf16.mxu0 0
  %538 = vmatpush1.bf16.msra.mxu0 0
  %539 = vmatprep.subr.bf16.mxu0 0
  %540 = vmatpush1.bf16.msra.mxu0 0
  %541 = vmatprep.subr.bf16.mxu0 0
  %542 = vmatpush1.bf16.msra.mxu0 0
  %543 = vmatprep.subr.bf16.mxu0 0
  %544 = vmatpush1.bf16.msra.mxu0 0
  %545 = vmatprep.subr.bf16.mxu0 0
  %546 = vmatpush1.bf16.msra.mxu0 0
  %547 = vmatprep.mubr.bf16.mxu0 0
  %548 = vmatmul.mubr.bf16.gmra.mrb[0].mxu0 %v510
  %v549 = vpop.f32.mrb[0].mxu0
  %v550 = vadd.f32 0.0, %v549
  %v551 = vpop.f32.mrb[0].mxu0
  %v552 = vpop.f32.mrb[0].mxu0
  %v553 = vpop.f32.mrb[0].mxu0
  %554 = vdwg.mxu0
  %v555 = vpack.c.bf16 %v550, %v502
  %v557 = vsel %vm114, %v555, 0
  %v560 = vsel %vm240, %v104, 0
  %562 = vmatprep.subr.bf16.mxu0 0
  %563 = vmatpush1.bf16.msra.mxu0 %v560
  %564 = vmatprep.subr.bf16.mxu0 0
  %565 = vmatpush1.bf16.msra.mxu0 0
  %566 = vmatprep.subr.bf16.mxu0 0
  %567 = vmatpush1.bf16.msra.mxu0 0
  %568 = vmatprep.subr.bf16.mxu0 0
  %569 = vmatpush1.bf16.msra.mxu0 0
  %570 = vmatprep.subr.bf16.mxu0 0
  %571 = vmatpush1.bf16.msra.mxu0 0
  %572 = vmatprep.subr.bf16.mxu0 0
  %573 = vmatpush1.bf16.msra.mxu0 0
  %574 = vmatprep.subr.bf16.mxu0 0
  %575 = vmatpush1.bf16.msra.mxu0 0
  %576 = vmatprep.subr.bf16.mxu0 0
  %577 = vmatpush1.bf16.msra.mxu0 0
  %578 = vmatprep.subr.bf16.mxu0 0
  %579 = vmatpush1.bf16.msra.mxu0 0
  %580 = vmatprep.subr.bf16.mxu0 0
  %581 = vmatpush1.bf16.msra.mxu0 0
  %582 = vmatprep.subr.bf16.mxu0 0
  %583 = vmatpush1.bf16.msra.mxu0 0
  %584 = vmatprep.subr.bf16.mxu0 0
  %585 = vmatpush1.bf16.msra.mxu0 0
  %586 = vmatprep.subr.bf16.mxu0 0
  %587 = vmatpush1.bf16.msra.mxu0 0
  %588 = vmatprep.subr.bf16.mxu0 0
  %589 = vmatpush1.bf16.msra.mxu0 0
  %590 = vmatprep.subr.bf16.mxu0 0
  %591 = vmatpush1.bf16.msra.mxu0 0
  %592 = vmatprep.subr.bf16.mxu0 0
  %593 = vmatpush1.bf16.msra.mxu0 0
  %594 = vmatprep.mubr.bf16.mxu0 0
  %595 = vmatmul.mubr.bf16.gmra.mrb[0].mxu0 %v557
  %v596 = vpop.f32.mrb[0].mxu0
  %v597 = vadd.f32 0.0, %v596
  %v598 = vpop.f32.mrb[0].mxu0
  %v599 = vpop.f32.mrb[0].mxu0
  %v600 = vadd.f32 0.0, %v599
  %v601 = vpop.f32.mrb[0].mxu0
  %602 = vdwg.mxu0
  %v604 = vsel %vm114, %v332, 0
  %v607 = vsel %vm240, %v103, 0
  %609 = vmatprep.subr.bf16.mxu0 0
  %610 = vmatpush1.bf16.msra.mxu0 %v607
  %611 = vmatprep.subr.bf16.mxu0 0
  %612 = vmatpush1.bf16.msra.mxu0 0
  %613 = vmatprep.subr.bf16.mxu0 0
  %614 = vmatpush1.bf16.msra.mxu0 0
  %615 = vmatprep.subr.bf16.mxu0 0
  %616 = vmatpush1.bf16.msra.mxu0 0
  %617 = vmatprep.subr.bf16.mxu0 0
  %618 = vmatpush1.bf16.msra.mxu0 0
  %619 = vmatprep.subr.bf16.mxu0 0
  %620 = vmatpush1.bf16.msra.mxu0 0
  %621 = vmatprep.subr.bf16.mxu0 0
  %622 = vmatpush1.bf16.msra.mxu0 0
  %623 = vmatprep.subr.bf16.mxu0 0
  %624 = vmatpush1.bf16.msra.mxu0 0
  %625 = vmatprep.subr.bf16.mxu0 0
  %626 = vmatpush1.bf16.msra.mxu0 0
  %627 = vmatprep.subr.bf16.mxu0 0
  %628 = vmatpush1.bf16.msra.mxu0 0
  %629 = vmatprep.subr.bf16.mxu0 0
  %630 = vmatpush1.bf16.msra.mxu0 0
  %631 = vmatprep.subr.bf16.mxu0 0
  %632 = vmatpush1.bf16.msra.mxu0 0
  %633 = vmatprep.subr.bf16.mxu0 0
  %634 = vmatpush1.bf16.msra.mxu0 0
  %635 = vmatprep.subr.bf16.mxu0 0
  %636 = vmatpush1.bf16.msra.mxu0 0
  %637 = vmatprep.subr.bf16.mxu0 0
  %638 = vmatpush1.bf16.msra.mxu0 0
  %639 = vmatprep.subr.bf16.mxu0 0
  %640 = vmatpush1.bf16.msra.mxu0 0
  %641 = vmatprep.mubr.bf16.mxu0 0
  %642 = vmatmul.mubr.bf16.gmra.mrb[0].mxu0 %v604
  %v643 = vpop.f32.mrb[0].mxu0
  %v644 = vadd.f32 %v597, %v643
  %v645 = vpop.f32.mrb[0].mxu0
  %v646 = vpop.f32.mrb[0].mxu0
  %v647 = vadd.f32 %v600, %v646
  %v648 = vpop.f32.mrb[0].mxu0
  %649 = vdwg.mxu0
  %650 = vrot.lane.b32.xlu0 %v110, 112
  %v651 = vpop.permute.xlu0 %650
  %652 = vrot.lane.b32.xlu0 %v110, 80
  %v653 = vpop.permute.xlu0 %652
  %v655 = vsel %vm114, %v651, 0
  %v658 = vsel %vm114, %v653, 0
  %660 = vmatprep.subr.bf16.mxu0 0
  %661 = vmatpush1.bf16.xpose.msra.mxu0 %v658
  %662 = vmatprep.subr.bf16.mxu0 0
  %663 = vmatpush1.bf16.xpose.msra.mxu0 0
  %664 = vmatprep.subr.bf16.mxu0 0
  %665 = vmatpush1.bf16.xpose.msra.mxu0 0
  %666 = vmatprep.subr.bf16.mxu0 0
  %667 = vmatpush1.bf16.xpose.msra.mxu0 0
  %668 = vmatprep.subr.bf16.mxu0 0
  %669 = vmatpush1.bf16.xpose.msra.mxu0 0
  %670 = vmatprep.subr.bf16.mxu0 0
  %671 = vmatpush1.bf16.xpose.msra.mxu0 0
  %672 = vmatprep.subr.bf16.mxu0 0
  %673 = vmatpush1.bf16.xpose.msra.mxu0 0
  %674 = vmatprep.subr.bf16.mxu0 0
  %675 = vmatpush1.bf16.xpose.msra.mxu0 0
  %676 = vmatprep.subr.bf16.mxu0 0
  %677 = vmatpush1.bf16.xpose.msra.mxu0 0
  %678 = vmatprep.subr.bf16.mxu0 0
  %679 = vmatpush1.bf16.xpose.msra.mxu0 0
  %680 = vmatprep.subr.bf16.mxu0 0
  %681 = vmatpush1.bf16.xpose.msra.mxu0 0
  %682 = vmatprep.subr.bf16.mxu0 0
  %683 = vmatpush1.bf16.xpose.msra.mxu0 0
  %684 = vmatprep.subr.bf16.mxu0 0
  %685 = vmatpush1.bf16.xpose.msra.mxu0 0
  %686 = vmatprep.subr.bf16.mxu0 0
  %687 = vmatpush1.bf16.xpose.msra.mxu0 0
  %688 = vmatprep.subr.bf16.mxu0 0
  %689 = vmatpush1.bf16.xpose.msra.mxu0 0
  %690 = vmatprep.subr.bf16.mxu0 0
  %691 = vmatpush1.bf16.xpose.msra.mxu0 0
  %692 = vmatprep.mubr.bf16.mxu0 0
  %693 = vmatmul.mubr.bf16.gmra.mrb[0].mxu0 %v655
  %v694 = vpop.f32.mrb[0].mxu0
  %v695 = vadd.f32 0.0, %v694
  %v696 = vpop.f32.mrb[0].mxu0
  %v697 = vpop.f32.mrb[0].mxu0
  %v698 = vpop.f32.mrb[0].mxu0
  %699 = vdwg.mxu0
  %700 = vrot.lane.b32.xlu0 %v111, 112
  %v701 = vpop.permute.xlu0 %700
  %702 = vrot.lane.b32.xlu0 %v111, 80
  %v703 = vpop.permute.xlu0 %702
  %v705 = vsel %vm114, %v701, 0
  %v708 = vsel %vm114, %v703, 0
  %710 = vmatprep.subr.bf16.mxu0 0
  %711 = vmatpush1.bf16.xpose.msra.mxu0 %v708
  %712 = vmatprep.subr.bf16.mxu0 0
  %713 = vmatpush1.bf16.xpose.msra.mxu0 0
  %714 = vmatprep.subr.bf16.mxu0 0
  %715 = vmatpush1.bf16.xpose.msra.mxu0 0
  %716 = vmatprep.subr.bf16.mxu0 0
  %717 = vmatpush1.bf16.xpose.msra.mxu0 0
  %718 = vmatprep.subr.bf16.mxu0 0
  %719 = vmatpush1.bf16.xpose.msra.mxu0 0
  %720 = vmatprep.subr.bf16.mxu0 0
  %721 = vmatpush1.bf16.xpose.msra.mxu0 0
  %722 = vmatprep.subr.bf16.mxu0 0
  %723 = vmatpush1.bf16.xpose.msra.mxu0 0
  %724 = vmatprep.subr.bf16.mxu0 0
  %725 = vmatpush1.bf16.xpose.msra.mxu0 0
  %726 = vmatprep.subr.bf16.mxu0 0
  %727 = vmatpush1.bf16.xpose.msra.mxu0 0
  %728 = vmatprep.subr.bf16.mxu0 0
  %729 = vmatpush1.bf16.xpose.msra.mxu0 0
  %730 = vmatprep.subr.bf16.mxu0 0
  %731 = vmatpush1.bf16.xpose.msra.mxu0 0
  %732 = vmatprep.subr.bf16.mxu0 0
  %733 = vmatpush1.bf16.xpose.msra.mxu0 0
  %734 = vmatprep.subr.bf16.mxu0 0
  %735 = vmatpush1.bf16.xpose.msra.mxu0 0
  %736 = vmatprep.subr.bf16.mxu0 0
  %737 = vmatpush1.bf16.xpose.msra.mxu0 0
  %738 = vmatprep.subr.bf16.mxu0 0
  %739 = vmatpush1.bf16.xpose.msra.mxu0 0
  %740 = vmatprep.subr.bf16.mxu0 0
  %741 = vmatpush1.bf16.xpose.msra.mxu0 0
  %742 = vmatprep.mubr.bf16.mxu0 0
  %743 = vmatmul.mubr.bf16.gmra.mrb[0].mxu0 %v705
  %v744 = vpop.f32.mrb[0].mxu0
  %v745 = vadd.f32 0.0, %v744
  %v746 = vpop.f32.mrb[0].mxu0
  %v747 = vpop.f32.mrb[0].mxu0
  %v748 = vpop.f32.mrb[0].mxu0
  %749 = vdwg.mxu0
  %v750 = vmul.f32 %v695, 0.35355338
  %v751 = vmul.f32 %v745, 0.35355338
  %v752 = vsel %vm114, %v750, -inf
  %753 = vmax.xlane.f32.xlu0 %v752
  %v754 = vpop.xlane.xlu0 %753
  %v755 = vsel %vm114, %v751, -inf
  %756 = vmax.xlane.f32.xlu0 %v755
  %v757 = vpop.xlane.xlu0 %756
  %v758 = vsub.f32 %v750, %v754
  %v759 = vsub.f32 %v751, %v757
  %v760 = vmul.f32 %v758, 1.442695
  %v761 = vpow.pop %v760
  %v762 = vmul.f32 %v759, 1.442695
  %v763 = vpow.pop %v762
  %v764 = vsel %vm114, %v761, 0.0
  %765 = vadd.xlane.f32.xlu0 %v764
  %v766 = vpop.xlane.xlu0 %765
  %v767 = vsel %vm114, %v763, 0.0
  %768 = vadd.xlane.f32.xlu0 %v767
  %v769 = vpop.xlane.xlu0 %768
  %v770 = vrcp.pop %v766
  %v771 = vrcp.pop %v769
  %v772 = vmul.f32 %v761, %v770
  %v773 = vmul.f32 %v763, %v771
  %v774 = vpack.c.bf16 %v772, %v772
  %v775 = vpack.c.bf16 %v773, %v773
  %776 = vrot.lane.b32.xlu0 %v110, 48
  %v777 = vpop.permute.xlu0 %776
  %v779 = vsel %vm114, %v774, 0
  %v782 = vsel %vm240, %v777, 0
  %784 = vmatprep.subr.bf16.mxu0 0
  %785 = vmatpush1.bf16.msra.mxu0 %v782
  %786 = vmatprep.subr.bf16.mxu0 0
  %787 = vmatpush1.bf16.msra.mxu0 0
  %788 = vmatprep.subr.bf16.mxu0 0
  %789 = vmatpush1.bf16.msra.mxu0 0
  %790 = vmatprep.subr.bf16.mxu0 0
  %791 = vmatpush1.bf16.msra.mxu0 0
  %792 = vmatprep.subr.bf16.mxu0 0
  %793 = vmatpush1.bf16.msra.mxu0 0
  %794 = vmatprep.subr.bf16.mxu0 0
  %795 = vmatpush1.bf16.msra.mxu0 0
  %796 = vmatprep.subr.bf16.mxu0 0
  %797 = vmatpush1.bf16.msra.mxu0 0
  %798 = vmatprep.subr.bf16.mxu0 0
  %799 = vmatpush1.bf16.msra.mxu0 0
  %800 = vmatprep.subr.bf16.mxu0 0
  %801 = vmatpush1.bf16.msra.mxu0 0
  %802 = vmatprep.subr.bf16.mxu0 0
  %803 = vmatpush1.bf16.msra.mxu0 0
  %804 = vmatprep.subr.bf16.mxu0 0
  %805 = vmatpush1.bf16.msra.mxu0 0
  %806 = vmatprep.subr.bf16.mxu0 0
  %807 = vmatpush1.bf16.msra.mxu0 0
  %808 = vmatprep.subr.bf16.mxu0 0
  %809 = vmatpush1.bf16.msra.mxu0 0
  %810 = vmatprep.subr.bf16.mxu0 0
  %811 = vmatpush1.bf16.msra.mxu0 0
  %812 = vmatprep.subr.bf16.mxu0 0
  %813 = vmatpush1.bf16.msra.mxu0 0
  %814 = vmatprep.subr.bf16.mxu0 0
  %815 = vmatpush1.bf16.msra.mxu0 0
  %816 = vmatprep.mubr.bf16.mxu0 0
  %817 = vmatmul.mubr.bf16.gmra.mrb[0].mxu0 %v779
  %v818 = vpop.f32.mrb[0].mxu0
  %v819 = vadd.f32 0.0, %v818
  %v820 = vpop.f32.mrb[0].mxu0
  %v821 = vpop.f32.mrb[0].mxu0
  %v822 = vpop.f32.mrb[0].mxu0
  %823 = vdwg.mxu0
  %824 = vrot.lane.b32.xlu0 %v111, 48
  %v825 = vpop.permute.xlu0 %824
  %v827 = vsel %vm114, %v775, 0
  %v830 = vsel %vm240, %v825, 0
  %832 = vmatprep.subr.bf16.mxu0 0
  %833 = vmatpush1.bf16.msra.mxu0 %v830
  %834 = vmatprep.subr.bf16.mxu0 0
  %835 = vmatpush1.bf16.msra.mxu0 0
  %836 = vmatprep.subr.bf16.mxu0 0
  %837 = vmatpush1.bf16.msra.mxu0 0
  %838 = vmatprep.subr.bf16.mxu0 0
  %839 = vmatpush1.bf16.msra.mxu0 0
  %840 = vmatprep.subr.bf16.mxu0 0
  %841 = vmatpush1.bf16.msra.mxu0 0
  %842 = vmatprep.subr.bf16.mxu0 0
  %843 = vmatpush1.bf16.msra.mxu0 0
  %844 = vmatprep.subr.bf16.mxu0 0
  %845 = vmatpush1.bf16.msra.mxu0 0
  %846 = vmatprep.subr.bf16.mxu0 0
  %847 = vmatpush1.bf16.msra.mxu0 0
  %848 = vmatprep.subr.bf16.mxu0 0
  %849 = vmatpush1.bf16.msra.mxu0 0
  %850 = vmatprep.subr.bf16.mxu0 0
  %851 = vmatpush1.bf16.msra.mxu0 0
  %852 = vmatprep.subr.bf16.mxu0 0
  %853 = vmatpush1.bf16.msra.mxu0 0
  %854 = vmatprep.subr.bf16.mxu0 0
  %855 = vmatpush1.bf16.msra.mxu0 0
  %856 = vmatprep.subr.bf16.mxu0 0
  %857 = vmatpush1.bf16.msra.mxu0 0
  %858 = vmatprep.subr.bf16.mxu0 0
  %859 = vmatpush1.bf16.msra.mxu0 0
  %860 = vmatprep.subr.bf16.mxu0 0
  %861 = vmatpush1.bf16.msra.mxu0 0
  %862 = vmatprep.subr.bf16.mxu0 0
  %863 = vmatpush1.bf16.msra.mxu0 0
  %864 = vmatprep.mubr.bf16.mxu0 0
  %865 = vmatmul.mubr.bf16.gmra.mrb[0].mxu0 %v827
  %v866 = vpop.f32.mrb[0].mxu0
  %v867 = vadd.f32 0.0, %v866
  %v868 = vpop.f32.mrb[0].mxu0
  %v869 = vpop.f32.mrb[0].mxu0
  %v870 = vpop.f32.mrb[0].mxu0
  %871 = vdwg.mxu0
  %v872 = vpack.c.bf16 %v867, %v819
  %v874 = vsel %vm114, %v872, 0
  %v877 = vsel %vm240, %v105, 0
  %879 = vmatprep.subr.bf16.mxu0 0
  %880 = vmatpush1.bf16.msra.mxu0 %v877
  %881 = vmatprep.subr.bf16.mxu0 0
  %882 = vmatpush1.bf16.msra.mxu0 0
  %883 = vmatprep.subr.bf16.mxu0 0
  %884 = vmatpush1.bf16.msra.mxu0 0
  %885 = vmatprep.subr.bf16.mxu0 0
  %886 = vmatpush1.bf16.msra.mxu0 0
  %887 = vmatprep.subr.bf16.mxu0 0
  %888 = vmatpush1.bf16.msra.mxu0 0
  %889 = vmatprep.subr.bf16.mxu0 0
  %890 = vmatpush1.bf16.msra.mxu0 0
  %891 = vmatprep.subr.bf16.mxu0 0
  %892 = vmatpush1.bf16.msra.mxu0 0
  %893 = vmatprep.subr.bf16.mxu0 0
  %894 = vmatpush1.bf16.msra.mxu0 0
  %895 = vmatprep.subr.bf16.mxu0 0
  %896 = vmatpush1.bf16.msra.mxu0 0
  %897 = vmatprep.subr.bf16.mxu0 0
  %898 = vmatpush1.bf16.msra.mxu0 0
  %899 = vmatprep.subr.bf16.mxu0 0
  %900 = vmatpush1.bf16.msra.mxu0 0
  %901 = vmatprep.subr.bf16.mxu0 0
  %902 = vmatpush1.bf16.msra.mxu0 0
  %903 = vmatprep.subr.bf16.mxu0 0
  %904 = vmatpush1.bf16.msra.mxu0 0
  %905 = vmatprep.subr.bf16.mxu0 0
  %906 = vmatpush1.bf16.msra.mxu0 0
  %907 = vmatprep.subr.bf16.mxu0 0
  %908 = vmatpush1.bf16.msra.mxu0 0
  %909 = vmatprep.subr.bf16.mxu0 0
  %910 = vmatpush1.bf16.msra.mxu0 0
  %911 = vmatprep.mubr.bf16.mxu0 0
  %912 = vmatmul.mubr.bf16.gmra.mrb[0].mxu0 %v874
  %v913 = vpop.f32.mrb[0].mxu0
  %v914 = vadd.f32 0.0, %v913
  %v915 = vpop.f32.mrb[0].mxu0
  %v916 = vpop.f32.mrb[0].mxu0
  %v917 = vadd.f32 0.0, %v916
  %v918 = vpop.f32.mrb[0].mxu0
  %919 = vdwg.mxu0
  %v920 = vadd.f32 %v644, %v914
  %v921 = vadd.f32 %v647, %v917
  %922 = vrot.lane.b32.xlu0 %v110, 104
  %v923 = vpop.permute.xlu0 %922
  %924 = vrot.lane.b32.xlu0 %v110, 72
  %v925 = vpop.permute.xlu0 %924
  %v927 = vsel %vm114, %v923, 0
  %v930 = vsel %vm114, %v925, 0
  %932 = vmatprep.subr.bf16.mxu0 0
  %933 = vmatpush1.bf16.xpose.msra.mxu0 %v930
  %934 = vmatprep.subr.bf16.mxu0 0
  %935 = vmatpush1.bf16.xpose.msra.mxu0 0
  %936 = vmatprep.subr.bf16.mxu0 0
  %937 = vmatpush1.bf16.xpose.msra.mxu0 0
  %938 = vmatprep.subr.bf16.mxu0 0
  %939 = vmatpush1.bf16.xpose.msra.mxu0 0
  %940 = vmatprep.subr.bf16.mxu0 0
  %941 = vmatpush1.bf16.xpose.msra.mxu0 0
  %942 = vmatprep.subr.bf16.mxu0 0
  %943 = vmatpush1.bf16.xpose.msra.mxu0 0
  %944 = vmatprep.subr.bf16.mxu0 0
  %945 = vmatpush1.bf16.xpose.msra.mxu0 0
  %946 = vmatprep.subr.bf16.mxu0 0
  %947 = vmatpush1.bf16.xpose.msra.mxu0 0
  %948 = vmatprep.subr.bf16.mxu0 0
  %949 = vmatpush1.bf16.xpose.msra.mxu0 0
  %950 = vmatprep.subr.bf16.mxu0 0
  %951 = vmatpush1.bf16.xpose.msra.mxu0 0
  %952 = vmatprep.subr.bf16.mxu0 0
  %953 = vmatpush1.bf16.xpose.msra.mxu0 0
  %954 = vmatprep.subr.bf16.mxu0 0
  %955 = vmatpush1.bf16.xpose.msra.mxu0 0
  %956 = vmatprep.subr.bf16.mxu0 0
  %957 = vmatpush1.bf16.xpose.msra.mxu0 0
  %958 = vmatprep.subr.bf16.mxu0 0
  %959 = vmatpush1.bf16.xpose.msra.mxu0 0
  %960 = vmatprep.subr.bf16.mxu0 0
  %961 = vmatpush1.bf16.xpose.msra.mxu0 0
  %962 = vmatprep.subr.bf16.mxu0 0
  %963 = vmatpush1.bf16.xpose.msra.mxu0 0
  %964 = vmatprep.mubr.bf16.mxu0 0
  %965 = vmatmul.mubr.bf16.gmra.mrb[0].mxu0 %v927
  %v966 = vpop.f32.mrb[0].mxu0
  %v967 = vadd.f32 0.0, %v966
  %v968 = vpop.f32.mrb[0].mxu0
  %v969 = vpop.f32.mrb[0].mxu0
  %v970 = vpop.f32.mrb[0].mxu0
  %971 = vdwg.mxu0
  %972 = vrot.lane.b32.xlu0 %v111, 104
  %v973 = vpop.permute.xlu0 %972
  %974 = vrot.lane.b32.xlu0 %v111, 72
  %v975 = vpop.permute.xlu0 %974
  %v977 = vsel %vm114, %v973, 0
  %v980 = vsel %vm114, %v975, 0
  %982 = vmatprep.subr.bf16.mxu0 0
  %983 = vmatpush1.bf16.xpose.msra.mxu0 %v980
  %984 = vmatprep.subr.bf16.mxu0 0
  %985 = vmatpush1.bf16.xpose.msra.mxu0 0
  %986 = vmatprep.subr.bf16.mxu0 0
  %987 = vmatpush1.bf16.xpose.msra.mxu0 0
  %988 = vmatprep.subr.bf16.mxu0 0
  %989 = vmatpush1.bf16.xpose.msra.mxu0 0
  %990 = vmatprep.subr.bf16.mxu0 0
  %991 = vmatpush1.bf16.xpose.msra.mxu0 0
  %992 = vmatprep.subr.bf16.mxu0 0
  %993 = vmatpush1.bf16.xpose.msra.mxu0 0
  %994 = vmatprep.subr.bf16.mxu0 0
  %995 = vmatpush1.bf16.xpose.msra.mxu0 0
  %996 = vmatprep.subr.bf16.mxu0 0
  %997 = vmatpush1.bf16.xpose.msra.mxu0 0
  %998 = vmatprep.subr.bf16.mxu0 0
  %999 = vmatpush1.bf16.xpose.msra.mxu0 0
  %1000 = vmatprep.subr.bf16.mxu0 0
  %1001 = vmatpush1.bf16.xpose.msra.mxu0 0
  %1002 = vmatprep.subr.bf16.mxu0 0
  %1003 = vmatpush1.bf16.xpose.msra.mxu0 0
  %1004 = vmatprep.subr.bf16.mxu0 0
  %1005 = vmatpush1.bf16.xpose.msra.mxu0 0
  %1006 = vmatprep.subr.bf16.mxu0 0
  %1007 = vmatpush1.bf16.xpose.msra.mxu0 0
  %1008 = vmatprep.subr.bf16.mxu0 0
  %1009 = vmatpush1.bf16.xpose.msra.mxu0 0
  %1010 = vmatprep.subr.bf16.mxu0 0
  %1011 = vmatpush1.bf16.xpose.msra.mxu0 0
  %1012 = vmatprep.subr.bf16.mxu0 0
  %1013 = vmatpush1.bf16.xpose.msra.mxu0 0
  %1014 = vmatprep.mubr.bf16.mxu0 0
  %1015 = vmatmul.mubr.bf16.gmra.mrb[0].mxu0 %v977
  %v1016 = vpop.f32.mrb[0].mxu0
  %v1017 = vadd.f32 0.0, %v1016
  %v1018 = vpop.f32.mrb[0].mxu0
  %v1019 = vpop.f32.mrb[0].mxu0
  %v1020 = vpop.f32.mrb[0].mxu0
  %1021 = vdwg.mxu0
  %v1022 = vmul.f32 %v967, 0.35355338
  %v1023 = vmul.f32 %v1017, 0.35355338
  %v1024 = vsel %vm114, %v1022, -inf
  %1025 = vmax.xlane.f32.xlu0 %v1024
  %v1026 = vpop.xlane.xlu0 %1025
  %v1027 = vsel %vm114, %v1023, -inf
  %1028 = vmax.xlane.f32.xlu0 %v1027
  %v1029 = vpop.xlane.xlu0 %1028
  %v1030 = vsub.f32 %v1022, %v1026
  %v1031 = vsub.f32 %v1023, %v1029
  %v1032 = vmul.f32 %v1030, 1.442695
  %v1033 = vpow.pop %v1032
  %v1034 = vmul.f32 %v1031, 1.442695
  %v1035 = vpow.pop %v1034
  %v1036 = vsel %vm114, %v1033, 0.0
  %1037 = vadd.xlane.f32.xlu0 %v1036
  %v1038 = vpop.xlane.xlu0 %1037
  %v1039 = vsel %vm114, %v1035, 0.0
  %1040 = vadd.xlane.f32.xlu0 %v1039
  %v1041 = vpop.xlane.xlu0 %1040
  %v1042 = vrcp.pop %v1038
  %v1043 = vrcp.pop %v1041
  %v1044 = vmul.f32 %v1033, %v1042
  %v1045 = vmul.f32 %v1035, %v1043
  %v1046 = vpack.c.bf16 %v1044, %v1044
  %v1047 = vpack.c.bf16 %v1045, %v1045
  %1048 = vrot.lane.b32.xlu0 %v110, 40
  %v1049 = vpop.permute.xlu0 %1048
  %v1051 = vsel %vm114, %v1046, 0
  %v1054 = vsel %vm240, %v1049, 0
  %1056 = vmatprep.subr.bf16.mxu0 0
  %1057 = vmatpush1.bf16.msra.mxu0 %v1054
  %1058 = vmatprep.subr.bf16.mxu0 0
  %1059 = vmatpush1.bf16.msra.mxu0 0
  %1060 = vmatprep.subr.bf16.mxu0 0
  %1061 = vmatpush1.bf16.msra.mxu0 0
  %1062 = vmatprep.subr.bf16.mxu0 0
  %1063 = vmatpush1.bf16.msra.mxu0 0
  %1064 = vmatprep.subr.bf16.mxu0 0
  %1065 = vmatpush1.bf16.msra.mxu0 0
  %1066 = vmatprep.subr.bf16.mxu0 0
  %1067 = vmatpush1.bf16.msra.mxu0 0
  %1068 = vmatprep.subr.bf16.mxu0 0
  %1069 = vmatpush1.bf16.msra.mxu0 0
  %1070 = vmatprep.subr.bf16.mxu0 0
  %1071 = vmatpush1.bf16.msra.mxu0 0
  %1072 = vmatprep.subr.bf16.mxu0 0
  %1073 = vmatpush1.bf16.msra.mxu0 0
  %1074 = vmatprep.subr.bf16.mxu0 0
  %1075 = vmatpush1.bf16.msra.mxu0 0
  %1076 = vmatprep.subr.bf16.mxu0 0
  %1077 = vmatpush1.bf16.msra.mxu0 0
  %1078 = vmatprep.subr.bf16.mxu0 0
  %1079 = vmatpush1.bf16.msra.mxu0 0
  %1080 = vmatprep.subr.bf16.mxu0 0
  %1081 = vmatpush1.bf16.msra.mxu0 0
  %1082 = vmatprep.subr.bf16.mxu0 0
  %1083 = vmatpush1.bf16.msra.mxu0 0
  %1084 = vmatprep.subr.bf16.mxu0 0
  %1085 = vmatpush1.bf16.msra.mxu0 0
  %1086 = vmatprep.subr.bf16.mxu0 0
  %1087 = vmatpush1.bf16.msra.mxu0 0
  %1088 = vmatprep.mubr.bf16.mxu0 0
  %1089 = vmatmul.mubr.bf16.gmra.mrb[0].mxu0 %v1051
  %v1090 = vpop.f32.mrb[0].mxu0
  %v1091 = vadd.f32 0.0, %v1090
  %v1092 = vpop.f32.mrb[0].mxu0
  %v1093 = vpop.f32.mrb[0].mxu0
  %v1094 = vpop.f32.mrb[0].mxu0
  %1095 = vdwg.mxu0
  %1096 = vrot.lane.b32.xlu0 %v111, 40
  %v1097 = vpop.permute.xlu0 %1096
  %v1099 = vsel %vm114, %v1047, 0
  %v1102 = vsel %vm240, %v1097, 0
  %1104 = vmatprep.subr.bf16.mxu0 0
  %1105 = vmatpush1.bf16.msra.mxu0 %v1102
  %1106 = vmatprep.subr.bf16.mxu0 0
  %1107 = vmatpush1.bf16.msra.mxu0 0
  %1108 = vmatprep.subr.bf16.mxu0 0
  %1109 = vmatpush1.bf16.msra.mxu0 0
  %1110 = vmatprep.subr.bf16.mxu0 0
  %1111 = vmatpush1.bf16.msra.mxu0 0
  %1112 = vmatprep.subr.bf16.mxu0 0
  %1113 = vmatpush1.bf16.msra.mxu0 0
  %1114 = vmatprep.subr.bf16.mxu0 0
  %1115 = vmatpush1.bf16.msra.mxu0 0
  %1116 = vmatprep.subr.bf16.mxu0 0
  %1117 = vmatpush1.bf16.msra.mxu0 0
  %1118 = vmatprep.subr.bf16.mxu0 0
  %1119 = vmatpush1.bf16.msra.mxu0 0
  %1120 = vmatprep.subr.bf16.mxu0 0
  %1121 = vmatpush1.bf16.msra.mxu0 0
  %1122 = vmatprep.subr.bf16.mxu0 0
  %1123 = vmatpush1.bf16.msra.mxu0 0
  %1124 = vmatprep.subr.bf16.mxu0 0
  %1125 = vmatpush1.bf16.msra.mxu0 0
  %1126 = vmatprep.subr.bf16.mxu0 0
  %1127 = vmatpush1.bf16.msra.mxu0 0
  %1128 = vmatprep.subr.bf16.mxu0 0
  %1129 = vmatpush1.bf16.msra.mxu0 0
  %1130 = vmatprep.subr.bf16.mxu0 0
  %1131 = vmatpush1.bf16.msra.mxu0 0
  %1132 = vmatprep.subr.bf16.mxu0 0
  %1133 = vmatpush1.bf16.msra.mxu0 0
  %1134 = vmatprep.subr.bf16.mxu0 0
  %1135 = vmatpush1.bf16.msra.mxu0 0
  %1136 = vmatprep.mubr.bf16.mxu0 0
  %1137 = vmatmul.mubr.bf16.gmra.mrb[0].mxu0 %v1099
  %v1138 = vpop.f32.mrb[0].mxu0
  %v1139 = vadd.f32 0.0, %v1138
  %v1140 = vpop.f32.mrb[0].mxu0
  %v1141 = vpop.f32.mrb[0].mxu0
  %v1142 = vpop.f32.mrb[0].mxu0
  %1143 = vdwg.mxu0
  %v1144 = vpack.c.bf16 %v1139, %v1091
  %v1146 = vsel %vm114, %v1144, 0
  %v1149 = vsel %vm240, %v106, 0
  %1151 = vmatprep.subr.bf16.mxu0 0
  %1152 = vmatpush1.bf16.msra.mxu0 %v1149
  %1153 = vmatprep.subr.bf16.mxu0 0
  %1154 = vmatpush1.bf16.msra.mxu0 0
  %1155 = vmatprep.subr.bf16.mxu0 0
  %1156 = vmatpush1.bf16.msra.mxu0 0
  %1157 = vmatprep.subr.bf16.mxu0 0
  %1158 = vmatpush1.bf16.msra.mxu0 0
  %1159 = vmatprep.subr.bf16.mxu0 0
  %1160 = vmatpush1.bf16.msra.mxu0 0
  %1161 = vmatprep.subr.bf16.mxu0 0
  %1162 = vmatpush1.bf16.msra.mxu0 0
  %1163 = vmatprep.subr.bf16.mxu0 0
  %1164 = vmatpush1.bf16.msra.mxu0 0
  %1165 = vmatprep.subr.bf16.mxu0 0
  %1166 = vmatpush1.bf16.msra.mxu0 0
  %1167 = vmatprep.subr.bf16.mxu0 0
  %1168 = vmatpush1.bf16.msra.mxu0 0
  %1169 = vmatprep.subr.bf16.mxu0 0
  %1170 = vmatpush1.bf16.msra.mxu0 0
  %1171 = vmatprep.subr.bf16.mxu0 0
  %1172 = vmatpush1.bf16.msra.mxu0 0
  %1173 = vmatprep.subr.bf16.mxu0 0
  %1174 = vmatpush1.bf16.msra.mxu0 0
  %1175 = vmatprep.subr.bf16.mxu0 0
  %1176 = vmatpush1.bf16.msra.mxu0 0
  %1177 = vmatprep.subr.bf16.mxu0 0
  %1178 = vmatpush1.bf16.msra.mxu0 0
  %1179 = vmatprep.subr.bf16.mxu0 0
  %1180 = vmatpush1.bf16.msra.mxu0 0
  %1181 = vmatprep.subr.bf16.mxu0 0
  %1182 = vmatpush1.bf16.msra.mxu0 0
  %1183 = vmatprep.mubr.bf16.mxu0 0
  %1184 = vmatmul.mubr.bf16.gmra.mrb[0].mxu0 %v1146
  %v1185 = vpop.f32.mrb[0].mxu0
  %v1186 = vadd.f32 0.0, %v1185
  %v1187 = vpop.f32.mrb[0].mxu0
  %v1188 = vpop.f32.mrb[0].mxu0
  %v1189 = vadd.f32 0.0, %v1188
  %v1190 = vpop.f32.mrb[0].mxu0
  %1191 = vdwg.mxu0
  %v1192 = vadd.f32 %v920, %v1186
  %v1193 = vadd.f32 %v921, %v1189
  %v1194 = vld [vmem:[%s4] sm:$0x1]
  %v1196 = vlaneseq
  %v1197 = vshrl.u32 %v1196, 7
  %v1198 = vsub.s32 0, %v1197
  %v1199 = vrot.slane %v1194, %v1198
  %v1201 = vadd.f32 %v1192, %v1199
  %v1202 = vadd.f32 %v1193, %v1199
  %v1203 = vunpack.c.l.bf16 %v27
  %v1204 = vunpack.c.l.bf16 %v28
  %v1205 = vadd.f32 %v1203, %v1201
  %v1206 = vadd.f32 %v1204, %v1202
  %v1207 = vld [vmem:[%s5] sm:$0x1]
  %v1208 = vld [vmem:[%s6] sm:$0x1]
  %v1209 = vsel %vm57, %v1205, 0.0
  %1210 = vadd.xlane.f32.xlu0 %v1209
  %v1211 = vpop.xlane.xlu0 %1210
  %v1212 = vsel %vm57, %v1206, 0.0
  %1213 = vadd.xlane.f32.xlu0 %v1212
  %v1214 = vpop.xlane.xlu0 %1213
  %v1215 = vrcp.pop 32.0
  %v1216 = vmul.f32 %v1211, %v1215
  %v1217 = vmul.f32 %v1214, %v1215
  %v1218 = vsub.f32 %v1205, %v1216
  %v1219 = vsub.f32 %v1206, %v1217
  %v1220 = vmul.f32 %v1218, %v1218
  %v1221 = vmul.f32 %v1219, %v1219
  %v1222 = vsel %vm57, %v1220, 0.0
  %1223 = vadd.xlane.f32.xlu0 %v1222
  %v1224 = vpop.xlane.xlu0 %1223
  %v1225 = vsel %vm57, %v1221, 0.0
  %1226 = vadd.xlane.f32.xlu0 %v1225
  %v1227 = vpop.xlane.xlu0 %1226
  %v1228 = vmul.f32 %v1224, %v1215
  %v1229 = vmul.f32 %v1227, %v1215
  %v1230 = vadd.f32 %v1228, 1e-05
  %v1231 = vadd.f32 %v1229, 1e-05
  %v1232 = vrsqrt.pop %v1230
  %v1233 = vrsqrt.pop %v1231
  %v1234 = vmul.f32 %v1218, %v1232
  %v1235 = vmul.f32 %v1219, %v1233
  %v1237 = vlaneseq
  %v1238 = vshrl.u32 %v1237, 7
  %v1239 = vsub.s32 0, %v1238
  %v1240 = vrot.slane %v1207, %v1239
  %v1242 = vmul.f32 %v1234, %v1240
  %v1243 = vmul.f32 %v1235, %v1240
  %v1245 = vlaneseq
  %v1246 = vshrl.u32 %v1245, 7
  %v1247 = vsub.s32 0, %v1246
  %v1248 = vrot.slane %v1208, %v1247
  %v1250 = vadd.f32 %v1242, %v1248
  %v1251 = vadd.f32 %v1243, %v1248
  %v1252 = vpack.c.bf16 %v1251, %v1250
  %v1254 = vunpack.c.l.b16 %v1252
  %v1255 = vunpack.c.h.b16 %v1252
  %v1256 = vpack.c.b16 %v1254, %v1254
  %v1257 = vpack.c.b16 %v1255, %v1255
  %vm1260 = vcmask 257024
  %1261 = vst.msk [vmem:[%s7] sm:$0xf] %vm1260, %v1256
  %1262 = vst.msk [vmem:[%s7 + $0x4] sm:$0xf] %vm1260, %v1257
  // Predicated region
  $region30: #{transformer_forward.11} parent=0 // pred_check
    _
  $region31: #{transformer_forward.11} parent=0 // pred_check_branch
    %1264 = sbr.rel (0) target = $region33
  $region32: #{transformer_forward.11} parent=0 // pred_region
    _
  $region33: #{transformer_forward.11} parent=0 // pred_fallthru
    _
  // Predicated region
  $region34: #{transformer_forward.11} parent=0 // pred_check
    _
  $region35: #{transformer_forward.11} parent=0 // pred_check_branch
    %1266 = sbr.rel (0) target = $region37
  $region36: #{transformer_forward.11} parent=0 // pred_region
    _
  $region37: #{transformer_forward.11} parent=0 // pred_fallthru
    _

// kernel: transformer_forward.15
$region0: #{transformer_forward.15}
  #allocation0 [shape = 'u32[]', space=smem, size = 0x4, offset = 0x4, fixed_abs, tag = 'smem constant byte address 0x4 - core index']
  #allocation1 [shape = 'u32[144,128]{1,0:T(1,128)}', space=vmem, size = 0x12000, scoped, tag = 'internal scratch']
  %s0 = inlined_call_operand.vmem [shape: bf16[16,32], index: 0, kind: input, shape index: {}]
  %s1 = inlined_call_operand.vmem [shape: bf16[32,96], index: 1, kind: input, shape index: {}]
  %s2 = inlined_call_operand.vmem [shape: f32[1,96], index: 2, kind: input, shape index: {}]
  %s3 = inlined_call_operand.vmem [shape: bf16[32,32], index: 3, kind: input, shape index: {}]
  %s4 = inlined_call_operand.vmem [shape: f32[1,32], index: 4, kind: input, shape index: {}]
  %s5 = inlined_call_operand.vmem [shape: f32[1,32], index: 5, kind: input, shape index: {}]
  %s6 = inlined_call_operand.vmem [shape: f32[1,32], index: 6, kind: input, shape index: {}]
  %s7 = inlined_call_operand.vmem [shape: bf16[16,32], index: 7, kind: output, shape index: {}]
  %s8 = sld [smem:[#allocation0]]
  $region38: #{transformer_forward.15} parent=0
    _
  %s10 = ssub.s32 1, %s8
  %s11 = scalar_select 0, %s10, %s8
  // Predicated region
  $region2: #{transformer_forward.15} parent=0 // pred_check
    _
  $region3: #{transformer_forward.15} parent=0 // pred_check_branch
    %13 = sbr.rel (0) target = $region5
  $region4: #{transformer_forward.15} parent=0 // pred_region
    _
  $region5: #{transformer_forward.15} parent=0 // pred_fallthru
    _
  // Predicated region
  $region6: #{transformer_forward.15} parent=0 // pred_check
    _
  $region7: #{transformer_forward.15} parent=0 // pred_check_branch
    %15 = sbr.rel (0) target = $region9
  $region8: #{transformer_forward.15} parent=0 // pred_region
    _
  $region9: #{transformer_forward.15} parent=0 // pred_fallthru
    _
  // Predicated region
  $region10: #{transformer_forward.15} parent=0 // pred_check
    _
  $region11: #{transformer_forward.15} parent=0 // pred_check_branch
    %17 = sbr.rel (0) target = $region13
  $region12: #{transformer_forward.15} parent=0 // pred_region
    _
  $region13: #{transformer_forward.15} parent=0 // pred_fallthru
    _
  // Predicated region
  $region14: #{transformer_forward.15} parent=0 // pred_check
    _
  $region15: #{transformer_forward.15} parent=0 // pred_check_branch
    %19 = sbr.rel (0) target = $region17
  $region16: #{transformer_forward.15} parent=0 // pred_region
    _
  $region17: #{transformer_forward.15} parent=0 // pred_fallthru
    _
  // Predicated region
  $region18: #{transformer_forward.15} parent=0 // pred_check
    _
  $region19: #{transformer_forward.15} parent=0 // pred_check_branch
    %21 = sbr.rel (0) target = $region21
  $region20: #{transformer_forward.15} parent=0 // pred_region
    _
  $region21: #{transformer_forward.15} parent=0 // pred_fallthru
    _
  // Predicated region
  $region22: #{transformer_forward.15} parent=0 // pred_check
    _
  $region23: #{transformer_forward.15} parent=0 // pred_check_branch
    %23 = sbr.rel (0) target = $region25
  $region24: #{transformer_forward.15} parent=0 // pred_region
    _
  $region25: #{transformer_forward.15} parent=0 // pred_fallthru
    _
  // Predicated region
  $region26: #{transformer_forward.15} parent=0 // pred_check
    _
  $region27: #{transformer_forward.15} parent=0 // pred_check_branch
    %25 = sbr.rel (0) target = $region29
  $region28: #{transformer_forward.15} parent=0 // pred_region
    _
  $region29: #{transformer_forward.15} parent=0 // pred_fallthru
    _
  %v27 = vld [vmem:[%s0] sm:$0xf]
  %v28 = vld [vmem:[%s0 + $0x4] sm:$0xf]
  %v29 = vld [vmem:[%s1] sm:$0xf]
  %v30 = vld [vmem:[%s1 + $0x4] sm:$0xf]
  %v31 = vld [vmem:[%s1 + $0x8] sm:$0xf]
  %v32 = vld [vmem:[%s1 + $0xc] sm:$0xf]
  %v33 = vld [vmem:[%s2] sm:$0x1]
  %v35 = vlaneseq
  %v36 = vshrl.u32 %v35, 7
  %v37 = vsub.s32 0, %v36
  %v38 = vrot.slane %v33, %v37
  %v42 = vunpack.c.l.b16 %v27
  %v43 = vunpack.c.l.b16 %v28
  %v44 = vpack.c.b16 %v43, %v42
  %v49 = vunpack.c.l.b16 %v29
  %v50 = vunpack.c.l.b16 %v30
  %v51 = vunpack.c.l.b16 %v31
  %v52 = vunpack.c.l.b16 %v32
  %v53 = vpack.c.b16 %v50, %v49
  %v54 = vpack.c.b16 %v52, %v51
  %vm57 = vcmask 261120
  %v59 = vsel %vm57, %v44, 0
  %61 = vmatprep.subr.bf16.mxu0 0
  %62 = vmatpush1.bf16.msra.mxu0 %v53
  %63 = vmatprep.subr.bf16.mxu0 0
  %64 = vmatpush1.bf16.msra.mxu0 %v54
  %65 = vmatprep.subr.bf16.mxu0 0
  %66 = vmatpush1.bf16.msra.mxu0 0
  %67 = vmatprep.subr.bf16.mxu0 0
  %68 = vmatpush1.bf16.msra.mxu0 0
  %69 = vmatprep.subr.bf16.mxu0 0
  %70 = vmatpush1.bf16.msra.mxu0 0
  %71 = vmatprep.subr.bf16.mxu0 0
  %72 = vmatpush1.bf16.msra.mxu0 0
  %73 = vmatprep.subr.bf16.mxu0 0
  %74 = vmatpush1.bf16.msra.mxu0 0
  %75 = vmatprep.subr.bf16.mxu0 0
  %76 = vmatpush1.bf16.msra.mxu0 0
  %77 = vmatprep.subr.bf16.mxu0 0
  %78 = vmatpush1.bf16.msra.mxu0 0
  %79 = vmatprep.subr.bf16.mxu0 0
  %80 = vmatpush1.bf16.msra.mxu0 0
  %81 = vmatprep.subr.bf16.mxu0 0
  %82 = vmatpush1.bf16.msra.mxu0 0
  %83 = vmatprep.subr.bf16.mxu0 0
  %84 = vmatpush1.bf16.msra.mxu0 0
  %85 = vmatprep.subr.bf16.mxu0 0
  %86 = vmatpush1.bf16.msra.mxu0 0
  %87 = vmatprep.subr.bf16.mxu0 0
  %88 = vmatpush1.bf16.msra.mxu0 0
  %89 = vmatprep.subr.bf16.mxu0 0
  %90 = vmatpush1.bf16.msra.mxu0 0
  %91 = vmatprep.subr.bf16.mxu0 0
  %92 = vmatpush1.bf16.msra.mxu0 0
  %93 = vmatprep.mubr.bf16.mxu0 0
  %94 = vmatmul.mubr.bf16.gmra.mrb[0].mxu0 %v59
  %v95 = vpop.f32.mrb[0].mxu0
  %v96 = vadd.f32 %v38, %v95
  %v97 = vpop.f32.mrb[0].mxu0
  %v98 = vpop.f32.mrb[0].mxu0
  %v99 = vadd.f32 %v38, %v98
  %v100 = vpop.f32.mrb[0].mxu0
  %101 = vdwg.mxu0
  %v102 = vpack.c.bf16 %v99, %v96
  %v103 = vld [vmem:[%s3] sm:$0xf]
  %v104 = vld [vmem:[%s3 + $0x4] sm:$0xf]
  %v105 = vld [vmem:[%s3 + $0x8] sm:$0xf]
  %v106 = vld [vmem:[%s3 + $0xc] sm:$0xf]
  %v108 = vunpack.c.l.b16 %v102
  %v109 = vunpack.c.h.b16 %v102
  %v110 = vpack.c.b16 %v108, %v108
  %v111 = vpack.c.b16 %v109, %v109
  %v112 = vlaneseq
  %v113 = vshrl.u32 %v112, 7
  %v114 = vlaneseq
  %v115 = vand.u32 %v114, 127
  %vm116 = vcmp.ge.s32.totalorder %v113, %v115
  %117 = vrot.lane.b32.xlu0 %v110, 96
  %v118 = vpop.permute.xlu0 %117
  %vm119 = vcmask 64512
  %v121 = vsel %vm119, %v110, 0
  %v124 = vsel %vm119, %v118, 0
  %126 = vmatprep.subr.bf16.mxu0 0
  %127 = vmatpush1.bf16.xpose.msra.mxu0 %v124
  %128 = vmatprep.subr.bf16.mxu0 0
  %129 = vmatpush1.bf16.xpose.msra.mxu0 0
  %130 = vmatprep.subr.bf16.mxu0 0
  %131 = vmatpush1.bf16.xpose.msra.mxu0 0
  %132 = vmatprep.subr.bf16.mxu0 0
  %133 = vmatpush1.bf16.xpose.msra.mxu0 0
  %134 = vmatprep.subr.bf16.mxu0 0
  %135 = vmatpush1.bf16.xpose.msra.mxu0 0
  %136 = vmatprep.subr.bf16.mxu0 0
  %137 = vmatpush1.bf16.xpose.msra.mxu0 0
  %138 = vmatprep.subr.bf16.mxu0 0
  %139 = vmatpush1.bf16.xpose.msra.mxu0 0
  %140 = vmatprep.subr.bf16.mxu0 0
  %141 = vmatpush1.bf16.xpose.msra.mxu0 0
  %142 = vmatprep.subr.bf16.mxu0 0
  %143 = vmatpush1.bf16.xpose.msra.mxu0 0
  %144 = vmatprep.subr.bf16.mxu0 0
  %145 = vmatpush1.bf16.xpose.msra.mxu0 0
  %146 = vmatprep.subr.bf16.mxu0 0
  %147 = vmatpush1.bf16.xpose.msra.mxu0 0
  %148 = vmatprep.subr.bf16.mxu0 0
  %149 = vmatpush1.bf16.xpose.msra.mxu0 0
  %150 = vmatprep.subr.bf16.mxu0 0
  %151 = vmatpush1.bf16.xpose.msra.mxu0 0
  %152 = vmatprep.subr.bf16.mxu0 0
  %153 = vmatpush1.bf16.xpose.msra.mxu0 0
  %154 = vmatprep.subr.bf16.mxu0 0
  %155 = vmatpush1.bf16.xpose.msra.mxu0 0
  %156 = vmatprep.subr.bf16.mxu0 0
  %157 = vmatpush1.bf16.xpose.msra.mxu0 0
  %158 = vmatprep.mubr.bf16.mxu0 0
  %159 = vmatmul.mubr.bf16.gmra.mrb[0].mxu0 %v121
  %v160 = vpop.f32.mrb[0].mxu0
  %v161 = vadd.f32 0.0, %v160
  %v162 = vpop.f32.mrb[0].mxu0
  %v163 = vpop.f32.mrb[0].mxu0
  %v164 = vpop.f32.mrb[0].mxu0
  %165 = vdwg.mxu0
  %166 = vrot.lane.b32.xlu0 %v111, 96
  %v167 = vpop.permute.xlu0 %166
  %v169 = vsel %vm119, %v111, 0
  %v172 = vsel %vm119, %v167, 0
  %174 = vmatprep.subr.bf16.mxu0 0
  %175 = vmatpush1.bf16.xpose.msra.mxu0 %v172
  %176 = vmatprep.subr.bf16.mxu0 0
  %177 = vmatpush1.bf16.xpose.msra.mxu0 0
  %178 = vmatprep.subr.bf16.mxu0 0
  %179 = vmatpush1.bf16.xpose.msra.mxu0 0
  %180 = vmatprep.subr.bf16.mxu0 0
  %181 = vmatpush1.bf16.xpose.msra.mxu0 0
  %182 = vmatprep.subr.bf16.mxu0 0
  %183 = vmatpush1.bf16.xpose.msra.mxu0 0
  %184 = vmatprep.subr.bf16.mxu0 0
  %185 = vmatpush1.bf16.xpose.msra.mxu0 0
  %186 = vmatprep.subr.bf16.mxu0 0
  %187 = vmatpush1.bf16.xpose.msra.mxu0 0
  %188 = vmatprep.subr.bf16.mxu0 0
  %189 = vmatpush1.bf16.xpose.msra.mxu0 0
  %190 = vmatprep.subr.bf16.mxu0 0
  %191 = vmatpush1.bf16.xpose.msra.mxu0 0
  %192 = vmatprep.subr.bf16.mxu0 0
  %193 = vmatpush1.bf16.xpose.msra.mxu0 0
  %194 = vmatprep.subr.bf16.mxu0 0
  %195 = vmatpush1.bf16.xpose.msra.mxu0 0
  %196 = vmatprep.subr.bf16.mxu0 0
  %197 = vmatpush1.bf16.xpose.msra.mxu0 0
  %198 = vmatprep.subr.bf16.mxu0 0
  %199 = vmatpush1.bf16.xpose.msra.mxu0 0
  %200 = vmatprep.subr.bf16.mxu0 0
  %201 = vmatpush1.bf16.xpose.msra.mxu0 0
  %202 = vmatprep.subr.bf16.mxu0 0
  %203 = vmatpush1.bf16.xpose.msra.mxu0 0
  %204 = vmatprep.subr.bf16.mxu0 0
  %205 = vmatpush1.bf16.xpose.msra.mxu0 0
  %206 = vmatprep.mubr.bf16.mxu0 0
  %207 = vmatmul.mubr.bf16.gmra.mrb[0].mxu0 %v169
  %v208 = vpop.f32.mrb[0].mxu0
  %v209 = vadd.f32 0.0, %v208
  %v210 = vpop.f32.mrb[0].mxu0
  %v211 = vpop.f32.mrb[0].mxu0
  %v212 = vpop.f32.mrb[0].mxu0
  %213 = vdwg.mxu0
  %v214 = vmul.f32 %v161, 0.35355338
  %v215 = vmul.f32 %v209, 0.35355338
  %v216 = vsel %vm116, 1, 0
  %vm217 = vcmp.eq.s32.totalorder %v216, 1
  %v218 = vsel %vm217, %v214, -1e+30
  %v219 = vsel %vm217, %v215, -1e+30
  %v220 = vsel %vm119, %v218, -inf
  %221 = vmax.xlane.f32.xlu0 %v220
  %v222 = vpop.xlane.xlu0 %221
  %v223 = vsel %vm119, %v219, -inf
  %224 = vmax.xlane.f32.xlu0 %v223
  %v225 = vpop.xlane.xlu0 %224
  %v226 = vsub.f32 %v218, %v222
  %v227 = vsub.f32 %v219, %v225
  %v228 = vmul.f32 %v226, 1.442695
  %v229 = vpow.pop %v228
  %v230 = vmul.f32 %v227, 1.442695
  %v231 = vpow.pop %v230
  %v232 = vsel %vm119, %v229, 0.0
  %233 = vadd.xlane.f32.xlu0 %v232
  %v234 = vpop.xlane.xlu0 %233
  %v235 = vsel %vm119, %v231, 0.0
  %236 = vadd.xlane.f32.xlu0 %v235
  %v237 = vpop.xlane.xlu0 %236
  %v238 = vrcp.pop %v234
  %v239 = vrcp.pop %v237
  %v240 = vmul.f32 %v229, %v238
  %v241 = vmul.f32 %v231, %v239
  %v242 = vpack.c.bf16 %v240, %v240
  %v243 = vpack.c.bf16 %v241, %v241
  %244 = vrot.lane.b32.xlu0 %v110, 64
  %v245 = vpop.permute.xlu0 %244
  %v247 = vsel %vm119, %v242, 0
  %vm249 = vcmask 1043456
  %v251 = vsel %vm249, %v245, 0
  %253 = vmatprep.subr.bf16.mxu0 0
  %254 = vmatpush1.bf16.msra.mxu0 %v251
  %255 = vmatprep.subr.bf16.mxu0 0
  %256 = vmatpush1.bf16.msra.mxu0 0
  %257 = vmatprep.subr.bf16.mxu0 0
  %258 = vmatpush1.bf16.msra.mxu0 0
  %259 = vmatprep.subr.bf16.mxu0 0
  %260 = vmatpush1.bf16.msra.mxu0 0
  %261 = vmatprep.subr.bf16.mxu0 0
  %262 = vmatpush1.bf16.msra.mxu0 0
  %263 = vmatprep.subr.bf16.mxu0 0
  %264 = vmatpush1.bf16.msra.mxu0 0
  %265 = vmatprep.subr.bf16.mxu0 0
  %266 = vmatpush1.bf16.msra.mxu0 0
  %267 = vmatprep.subr.bf16.mxu0 0
  %268 = vmatpush1.bf16.msra.mxu0 0
  %269 = vmatprep.subr.bf16.mxu0 0
  %270 = vmatpush1.bf16.msra.mxu0 0
  %271 = vmatprep.subr.bf16.mxu0 0
  %272 = vmatpush1.bf16.msra.mxu0 0
  %273 = vmatprep.subr.bf16.mxu0 0
  %274 = vmatpush1.bf16.msra.mxu0 0
  %275 = vmatprep.subr.bf16.mxu0 0
  %276 = vmatpush1.bf16.msra.mxu0 0
  %277 = vmatprep.subr.bf16.mxu0 0
  %278 = vmatpush1.bf16.msra.mxu0 0
  %279 = vmatprep.subr.bf16.mxu0 0
  %280 = vmatpush1.bf16.msra.mxu0 0
  %281 = vmatprep.subr.bf16.mxu0 0
  %282 = vmatpush1.bf16.msra.mxu0 0
  %283 = vmatprep.subr.bf16.mxu0 0
  %284 = vmatpush1.bf16.msra.mxu0 0
  %285 = vmatprep.mubr.bf16.mxu0 0
  %286 = vmatmul.mubr.bf16.gmra.mrb[0].mxu0 %v247
  %v287 = vpop.f32.mrb[0].mxu0
  %v288 = vadd.f32 0.0, %v287
  %v289 = vpop.f32.mrb[0].mxu0
  %v290 = vpop.f32.mrb[0].mxu0
  %v291 = vpop.f32.mrb[0].mxu0
  %292 = vdwg.mxu0
  %293 = vrot.lane.b32.xlu0 %v111, 64
  %v294 = vpop.permute.xlu0 %293
  %v296 = vsel %vm119, %v243, 0
  %v299 = vsel %vm249, %v294, 0
  %301 = vmatprep.subr.bf16.mxu0 0
  %302 = vmatpush1.bf16.msra.mxu0 %v299
  %303 = vmatprep.subr.bf16.mxu0 0
  %304 = vmatpush1.bf16.msra.mxu0 0
  %305 = vmatprep.subr.bf16.mxu0 0
  %306 = vmatpush1.bf16.msra.mxu0 0
  %307 = vmatprep.subr.bf16.mxu0 0
  %308 = vmatpush1.bf16.msra.mxu0 0
  %309 = vmatprep.subr.bf16.mxu0 0
  %310 = vmatpush1.bf16.msra.mxu0 0
  %311 = vmatprep.subr.bf16.mxu0 0
  %312 = vmatpush1.bf16.msra.mxu0 0
  %313 = vmatprep.subr.bf16.mxu0 0
  %314 = vmatpush1.bf16.msra.mxu0 0
  %315 = vmatprep.subr.bf16.mxu0 0
  %316 = vmatpush1.bf16.msra.mxu0 0
  %317 = vmatprep.subr.bf16.mxu0 0
  %318 = vmatpush1.bf16.msra.mxu0 0
  %319 = vmatprep.subr.bf16.mxu0 0
  %320 = vmatpush1.bf16.msra.mxu0 0
  %321 = vmatprep.subr.bf16.mxu0 0
  %322 = vmatpush1.bf16.msra.mxu0 0
  %323 = vmatprep.subr.bf16.mxu0 0
  %324 = vmatpush1.bf16.msra.mxu0 0
  %325 = vmatprep.subr.bf16.mxu0 0
  %326 = vmatpush1.bf16.msra.mxu0 0
  %327 = vmatprep.subr.bf16.mxu0 0
  %328 = vmatpush1.bf16.msra.mxu0 0
  %329 = vmatprep.subr.bf16.mxu0 0
  %330 = vmatpush1.bf16.msra.mxu0 0
  %331 = vmatprep.subr.bf16.mxu0 0
  %332 = vmatpush1.bf16.msra.mxu0 0
  %333 = vmatprep.mubr.bf16.mxu0 0
  %334 = vmatmul.mubr.bf16.gmra.mrb[0].mxu0 %v296
  %v335 = vpop.f32.mrb[0].mxu0
  %v336 = vadd.f32 0.0, %v335
  %v337 = vpop.f32.mrb[0].mxu0
  %v338 = vpop.f32.mrb[0].mxu0
  %v339 = vpop.f32.mrb[0].mxu0
  %340 = vdwg.mxu0
  %v341 = vpack.c.bf16 %v336, %v288
  %342 = vrot.lane.b32.xlu0 %v110, 120
  %v343 = vpop.permute.xlu0 %342
  %344 = vrot.lane.b32.xlu0 %v110, 88
  %v345 = vpop.permute.xlu0 %344
  %v347 = vsel %vm119, %v343, 0
  %v350 = vsel %vm119, %v345, 0
  %352 = vmatprep.subr.bf16.mxu0 0
  %353 = vmatpush1.bf16.xpose.msra.mxu0 %v350
  %354 = vmatprep.subr.bf16.mxu0 0
  %355 = vmatpush1.bf16.xpose.msra.mxu0 0
  %356 = vmatprep.subr.bf16.mxu0 0
  %357 = vmatpush1.bf16.xpose.msra.mxu0 0
  %358 = vmatprep.subr.bf16.mxu0 0
  %359 = vmatpush1.bf16.xpose.msra.mxu0 0
  %360 = vmatprep.subr.bf16.mxu0 0
  %361 = vmatpush1.bf16.xpose.msra.mxu0 0
  %362 = vmatprep.subr.bf16.mxu0 0
  %363 = vmatpush1.bf16.xpose.msra.mxu0 0
  %364 = vmatprep.subr.bf16.mxu0 0
  %365 = vmatpush1.bf16.xpose.msra.mxu0 0
  %366 = vmatprep.subr.bf16.mxu0 0
  %367 = vmatpush1.bf16.xpose.msra.mxu0 0
  %368 = vmatprep.subr.bf16.mxu0 0
  %369 = vmatpush1.bf16.xpose.msra.mxu0 0
  %370 = vmatprep.subr.bf16.mxu0 0
  %371 = vmatpush1.bf16.xpose.msra.mxu0 0
  %372 = vmatprep.subr.bf16.mxu0 0
  %373 = vmatpush1.bf16.xpose.msra.mxu0 0
  %374 = vmatprep.subr.bf16.mxu0 0
  %375 = vmatpush1.bf16.xpose.msra.mxu0 0
  %376 = vmatprep.subr.bf16.mxu0 0
  %377 = vmatpush1.bf16.xpose.msra.mxu0 0
  %378 = vmatprep.subr.bf16.mxu0 0
  %379 = vmatpush1.bf16.xpose.msra.mxu0 0
  %380 = vmatprep.subr.bf16.mxu0 0
  %381 = vmatpush1.bf16.xpose.msra.mxu0 0
  %382 = vmatprep.subr.bf16.mxu0 0
  %383 = vmatpush1.bf16.xpose.msra.mxu0 0
  %384 = vmatprep.mubr.bf16.mxu0 0
  %385 = vmatmul.mubr.bf16.gmra.mrb[0].mxu0 %v347
  %v386 = vpop.f32.mrb[0].mxu0
  %v387 = vadd.f32 0.0, %v386
  %v388 = vpop.f32.mrb[0].mxu0
  %v389 = vpop.f32.mrb[0].mxu0
  %v390 = vpop.f32.mrb[0].mxu0
  %391 = vdwg.mxu0
  %392 = vrot.lane.b32.xlu0 %v111, 120
  %v393 = vpop.permute.xlu0 %392
  %394 = vrot.lane.b32.xlu0 %v111, 88
  %v395 = vpop.permute.xlu0 %394
  %v397 = vsel %vm119, %v393, 0
  %v400 = vsel %vm119, %v395, 0
  %402 = vmatprep.subr.bf16.mxu0 0
  %403 = vmatpush1.bf16.xpose.msra.mxu0 %v400
  %404 = vmatprep.subr.bf16.mxu0 0
  %405 = vmatpush1.bf16.xpose.msra.mxu0 0
  %406 = vmatprep.subr.bf16.mxu0 0
  %407 = vmatpush1.bf16.xpose.msra.mxu0 0
  %408 = vmatprep.subr.bf16.mxu0 0
  %409 = vmatpush1.bf16.xpose.msra.mxu0 0
  %410 = vmatprep.subr.bf16.mxu0 0
  %411 = vmatpush1.bf16.xpose.msra.mxu0 0
  %412 = vmatprep.subr.bf16.mxu0 0
  %413 = vmatpush1.bf16.xpose.msra.mxu0 0
  %414 = vmatprep.subr.bf16.mxu0 0
  %415 = vmatpush1.bf16.xpose.msra.mxu0 0
  %416 = vmatprep.subr.bf16.mxu0 0
  %417 = vmatpush1.bf16.xpose.msra.mxu0 0
  %418 = vmatprep.subr.bf16.mxu0 0
  %419 = vmatpush1.bf16.xpose.msra.mxu0 0
  %420 = vmatprep.subr.bf16.mxu0 0
  %421 = vmatpush1.bf16.xpose.msra.mxu0 0
  %422 = vmatprep.subr.bf16.mxu0 0
  %423 = vmatpush1.bf16.xpose.msra.mxu0 0
  %424 = vmatprep.subr.bf16.mxu0 0
  %425 = vmatpush1.bf16.xpose.msra.mxu0 0
  %426 = vmatprep.subr.bf16.mxu0 0
  %427 = vmatpush1.bf16.xpose.msra.mxu0 0
  %428 = vmatprep.subr.bf16.mxu0 0
  %429 = vmatpush1.bf16.xpose.msra.mxu0 0
  %430 = vmatprep.subr.bf16.mxu0 0
  %431 = vmatpush1.bf16.xpose.msra.mxu0 0
  %432 = vmatprep.subr.bf16.mxu0 0
  %433 = vmatpush1.bf16.xpose.msra.mxu0 0
  %434 = vmatprep.mubr.bf16.mxu0 0
  %435 = vmatmul.mubr.bf16.gmra.mrb[0].mxu0 %v397
  %v436 = vpop.f32.mrb[0].mxu0
  %v437 = vadd.f32 0.0, %v436
  %v438 = vpop.f32.mrb[0].mxu0
  %v439 = vpop.f32.mrb[0].mxu0
  %v440 = vpop.f32.mrb[0].mxu0
  %441 = vdwg.mxu0
  %v442 = vmul.f32 %v387, 0.35355338
  %v443 = vmul.f32 %v437, 0.35355338
  %v444 = vsel %vm217, %v442, -1e+30
  %v445 = vsel %vm217, %v443, -1e+30
  %v446 = vsel %vm119, %v444, -inf
  %447 = vmax.xlane.f32.xlu0 %v446
  %v448 = vpop.xlane.xlu0 %447
  %v449 = vsel %vm119, %v445, -inf
  %450 = vmax.xlane.f32.xlu0 %v449
  %v451 = vpop.xlane.xlu0 %450
  %v452 = vsub.f32 %v444, %v448
  %v453 = vsub.f32 %v445, %v451
  %v454 = vmul.f32 %v452, 1.442695
  %v455 = vpow.pop %v454
  %v456 = vmul.f32 %v453, 1.442695
  %v457 = vpow.pop %v456
  %v458 = vsel %vm119, %v455, 0.0
  %459 = vadd.xlane.f32.xlu0 %v458
  %v460 = vpop.xlane.xlu0 %459
  %v461 = vsel %vm119, %v457, 0.0
  %462 = vadd.xlane.f32.xlu0 %v461
  %v463 = vpop.xlane.xlu0 %462
  %v464 = vrcp.pop %v460
  %v465 = vrcp.pop %v463
  %v466 = vmul.f32 %v455, %v464
  %v467 = vmul.f32 %v457, %v465
  %v468 = vpack.c.bf16 %v466, %v466
  %v469 = vpack.c.bf16 %v467, %v467
  %470 = vrot.lane.b32.xlu0 %v110, 56
  %v471 = vpop.permute.xlu0 %470
  %v473 = vsel %vm119, %v468, 0
  %v476 = vsel %vm249, %v471, 0
  %478 = vmatprep.subr.bf16.mxu0 0
  %479 = vmatpush1.bf16.msra.mxu0 %v476
  %480 = vmatprep.subr.bf16.mxu0 0
  %481 = vmatpush1.bf16.msra.mxu0 0
  %482 = vmatprep.subr.bf16.mxu0 0
  %483 = vmatpush1.bf16.msra.mxu0 0
  %484 = vmatprep.subr.bf16.mxu0 0
  %485 = vmatpush1.bf16.msra.mxu0 0
  %486 = vmatprep.subr.bf16.mxu0 0
  %487 = vmatpush1.bf16.msra.mxu0 0
  %488 = vmatprep.subr.bf16.mxu0 0
  %489 = vmatpush1.bf16.msra.mxu0 0
  %490 = vmatprep.subr.bf16.mxu0 0
  %491 = vmatpush1.bf16.msra.mxu0 0
  %492 = vmatprep.subr.bf16.mxu0 0
  %493 = vmatpush1.bf16.msra.mxu0 0
  %494 = vmatprep.subr.bf16.mxu0 0
  %495 = vmatpush1.bf16.msra.mxu0 0
  %496 = vmatprep.subr.bf16.mxu0 0
  %497 = vmatpush1.bf16.msra.mxu0 0
  %498 = vmatprep.subr.bf16.mxu0 0
  %499 = vmatpush1.bf16.msra.mxu0 0
  %500 = vmatprep.subr.bf16.mxu0 0
  %501 = vmatpush1.bf16.msra.mxu0 0
  %502 = vmatprep.subr.bf16.mxu0 0
  %503 = vmatpush1.bf16.msra.mxu0 0
  %504 = vmatprep.subr.bf16.mxu0 0
  %505 = vmatpush1.bf16.msra.mxu0 0
  %506 = vmatprep.subr.bf16.mxu0 0
  %507 = vmatpush1.bf16.msra.mxu0 0
  %508 = vmatprep.subr.bf16.mxu0 0
  %509 = vmatpush1.bf16.msra.mxu0 0
  %510 = vmatprep.mubr.bf16.mxu0 0
  %511 = vmatmul.mubr.bf16.gmra.mrb[0].mxu0 %v473
  %v512 = vpop.f32.mrb[0].mxu0
  %v513 = vadd.f32 0.0, %v512
  %v514 = vpop.f32.mrb[0].mxu0
  %v515 = vpop.f32.mrb[0].mxu0
  %v516 = vpop.f32.mrb[0].mxu0
  %517 = vdwg.mxu0
  %518 = vrot.lane.b32.xlu0 %v111, 56
  %v519 = vpop.permute.xlu0 %518
  %v521 = vsel %vm119, %v469, 0
  %v524 = vsel %vm249, %v519, 0
  %526 = vmatprep.subr.bf16.mxu0 0
  %527 = vmatpush1.bf16.msra.mxu0 %v524
  %528 = vmatprep.subr.bf16.mxu0 0
  %529 = vmatpush1.bf16.msra.mxu0 0
  %530 = vmatprep.subr.bf16.mxu0 0
  %531 = vmatpush1.bf16.msra.mxu0 0
  %532 = vmatprep.subr.bf16.mxu0 0
  %533 = vmatpush1.bf16.msra.mxu0 0
  %534 = vmatprep.subr.bf16.mxu0 0
  %535 = vmatpush1.bf16.msra.mxu0 0
  %536 = vmatprep.subr.bf16.mxu0 0
  %537 = vmatpush1.bf16.msra.mxu0 0
  %538 = vmatprep.subr.bf16.mxu0 0
  %539 = vmatpush1.bf16.msra.mxu0 0
  %540 = vmatprep.subr.bf16.mxu0 0
  %541 = vmatpush1.bf16.msra.mxu0 0
  %542 = vmatprep.subr.bf16.mxu0 0
  %543 = vmatpush1.bf16.msra.mxu0 0
  %544 = vmatprep.subr.bf16.mxu0 0
  %545 = vmatpush1.bf16.msra.mxu0 0
  %546 = vmatprep.subr.bf16.mxu0 0
  %547 = vmatpush1.bf16.msra.mxu0 0
  %548 = vmatprep.subr.bf16.mxu0 0
  %549 = vmatpush1.bf16.msra.mxu0 0
  %550 = vmatprep.subr.bf16.mxu0 0
  %551 = vmatpush1.bf16.msra.mxu0 0
  %552 = vmatprep.subr.bf16.mxu0 0
  %553 = vmatpush1.bf16.msra.mxu0 0
  %554 = vmatprep.subr.bf16.mxu0 0
  %555 = vmatpush1.bf16.msra.mxu0 0
  %556 = vmatprep.subr.bf16.mxu0 0
  %557 = vmatpush1.bf16.msra.mxu0 0
  %558 = vmatprep.mubr.bf16.mxu0 0
  %559 = vmatmul.mubr.bf16.gmra.mrb[0].mxu0 %v521
  %v560 = vpop.f32.mrb[0].mxu0
  %v561 = vadd.f32 0.0, %v560
  %v562 = vpop.f32.mrb[0].mxu0
  %v563 = vpop.f32.mrb[0].mxu0
  %v564 = vpop.f32.mrb[0].mxu0
  %565 = vdwg.mxu0
  %v566 = vpack.c.bf16 %v561, %v513
  %v568 = vsel %vm119, %v566, 0
  %v571 = vsel %vm249, %v104, 0
  %573 = vmatprep.subr.bf16.mxu0 0
  %574 = vmatpush1.bf16.msra.mxu0 %v571
  %575 = vmatprep.subr.bf16.mxu0 0
  %576 = vmatpush1.bf16.msra.mxu0 0
  %577 = vmatprep.subr.bf16.mxu0 0
  %578 = vmatpush1.bf16.msra.mxu0 0
  %579 = vmatprep.subr.bf16.mxu0 0
  %580 = vmatpush1.bf16.msra.mxu0 0
  %581 = vmatprep.subr.bf16.mxu0 0
  %582 = vmatpush1.bf16.msra.mxu0 0
  %583 = vmatprep.subr.bf16.mxu0 0
  %584 = vmatpush1.bf16.msra.mxu0 0
  %585 = vmatprep.subr.bf16.mxu0 0
  %586 = vmatpush1.bf16.msra.mxu0 0
  %587 = vmatprep.subr.bf16.mxu0 0
  %588 = vmatpush1.bf16.msra.mxu0 0
  %589 = vmatprep.subr.bf16.mxu0 0
  %590 = vmatpush1.bf16.msra.mxu0 0
  %591 = vmatprep.subr.bf16.mxu0 0
  %592 = vmatpush1.bf16.msra.mxu0 0
  %593 = vmatprep.subr.bf16.mxu0 0
  %594 = vmatpush1.bf16.msra.mxu0 0
  %595 = vmatprep.subr.bf16.mxu0 0
  %596 = vmatpush1.bf16.msra.mxu0 0
  %597 = vmatprep.subr.bf16.mxu0 0
  %598 = vmatpush1.bf16.msra.mxu0 0
  %599 = vmatprep.subr.bf16.mxu0 0
  %600 = vmatpush1.bf16.msra.mxu0 0
  %601 = vmatprep.subr.bf16.mxu0 0
  %602 = vmatpush1.bf16.msra.mxu0 0
  %603 = vmatprep.subr.bf16.mxu0 0
  %604 = vmatpush1.bf16.msra.mxu0 0
  %605 = vmatprep.mubr.bf16.mxu0 0
  %606 = vmatmul.mubr.bf16.gmra.mrb[0].mxu0 %v568
  %v607 = vpop.f32.mrb[0].mxu0
  %v608 = vadd.f32 0.0, %v607
  %v609 = vpop.f32.mrb[0].mxu0
  %v610 = vpop.f32.mrb[0].mxu0
  %v611 = vadd.f32 0.0, %v610
  %v612 = vpop.f32.mrb[0].mxu0
  %613 = vdwg.mxu0
  %v615 = vsel %vm119, %v341, 0
  %v618 = vsel %vm249, %v103, 0
  %620 = vmatprep.subr.bf16.mxu0 0
  %621 = vmatpush1.bf16.msra.mxu0 %v618
  %622 = vmatprep.subr.bf16.mxu0 0
  %623 = vmatpush1.bf16.msra.mxu0 0
  %624 = vmatprep.subr.bf16.mxu0 0
  %625 = vmatpush1.bf16.msra.mxu0 0
  %626 = vmatprep.subr.bf16.mxu0 0
  %627 = vmatpush1.bf16.msra.mxu0 0
  %628 = vmatprep.subr.bf16.mxu0 0
  %629 = vmatpush1.bf16.msra.mxu0 0
  %630 = vmatprep.subr.bf16.mxu0 0
  %631 = vmatpush1.bf16.msra.mxu0 0
  %632 = vmatprep.subr.bf16.mxu0 0
  %633 = vmatpush1.bf16.msra.mxu0 0
  %634 = vmatprep.subr.bf16.mxu0 0
  %635 = vmatpush1.bf16.msra.mxu0 0
  %636 = vmatprep.subr.bf16.mxu0 0
  %637 = vmatpush1.bf16.msra.mxu0 0
  %638 = vmatprep.subr.bf16.mxu0 0
  %639 = vmatpush1.bf16.msra.mxu0 0
  %640 = vmatprep.subr.bf16.mxu0 0
  %641 = vmatpush1.bf16.msra.mxu0 0
  %642 = vmatprep.subr.bf16.mxu0 0
  %643 = vmatpush1.bf16.msra.mxu0 0
  %644 = vmatprep.subr.bf16.mxu0 0
  %645 = vmatpush1.bf16.msra.mxu0 0
  %646 = vmatprep.subr.bf16.mxu0 0
  %647 = vmatpush1.bf16.msra.mxu0 0
  %648 = vmatprep.subr.bf16.mxu0 0
  %649 = vmatpush1.bf16.msra.mxu0 0
  %650 = vmatprep.subr.bf16.mxu0 0
  %651 = vmatpush1.bf16.msra.mxu0 0
  %652 = vmatprep.mubr.bf16.mxu0 0
  %653 = vmatmul.mubr.bf16.gmra.mrb[0].mxu0 %v615
  %v654 = vpop.f32.mrb[0].mxu0
  %v655 = vadd.f32 %v608, %v654
  %v656 = vpop.f32.mrb[0].mxu0
  %v657 = vpop.f32.mrb[0].mxu0
  %v658 = vadd.f32 %v611, %v657
  %v659 = vpop.f32.mrb[0].mxu0
  %660 = vdwg.mxu0
  %661 = vrot.lane.b32.xlu0 %v110, 112
  %v662 = vpop.permute.xlu0 %661
  %663 = vrot.lane.b32.xlu0 %v110, 80
  %v664 = vpop.permute.xlu0 %663
  %v666 = vsel %vm119, %v662, 0
  %v669 = vsel %vm119, %v664, 0
  %671 = vmatprep.subr.bf16.mxu0 0
  %672 = vmatpush1.bf16.xpose.msra.mxu0 %v669
  %673 = vmatprep.subr.bf16.mxu0 0
  %674 = vmatpush1.bf16.xpose.msra.mxu0 0
  %675 = vmatprep.subr.bf16.mxu0 0
  %676 = vmatpush1.bf16.xpose.msra.mxu0 0
  %677 = vmatprep.subr.bf16.mxu0 0
  %678 = vmatpush1.bf16.xpose.msra.mxu0 0
  %679 = vmatprep.subr.bf16.mxu0 0
  %680 = vmatpush1.bf16.xpose.msra.mxu0 0
  %681 = vmatprep.subr.bf16.mxu0 0
  %682 = vmatpush1.bf16.xpose.msra.mxu0 0
  %683 = vmatprep.subr.bf16.mxu0 0
  %684 = vmatpush1.bf16.xpose.msra.mxu0 0
  %685 = vmatprep.subr.bf16.mxu0 0
  %686 = vmatpush1.bf16.xpose.msra.mxu0 0
  %687 = vmatprep.subr.bf16.mxu0 0
  %688 = vmatpush1.bf16.xpose.msra.mxu0 0
  %689 = vmatprep.subr.bf16.mxu0 0
  %690 = vmatpush1.bf16.xpose.msra.mxu0 0
  %691 = vmatprep.subr.bf16.mxu0 0
  %692 = vmatpush1.bf16.xpose.msra.mxu0 0
  %693 = vmatprep.subr.bf16.mxu0 0
  %694 = vmatpush1.bf16.xpose.msra.mxu0 0
  %695 = vmatprep.subr.bf16.mxu0 0
  %696 = vmatpush1.bf16.xpose.msra.mxu0 0
  %697 = vmatprep.subr.bf16.mxu0 0
  %698 = vmatpush1.bf16.xpose.msra.mxu0 0
  %699 = vmatprep.subr.bf16.mxu0 0
  %700 = vmatpush1.bf16.xpose.msra.mxu0 0
  %701 = vmatprep.subr.bf16.mxu0 0
  %702 = vmatpush1.bf16.xpose.msra.mxu0 0
  %703 = vmatprep.mubr.bf16.mxu0 0
  %704 = vmatmul.mubr.bf16.gmra.mrb[0].mxu0 %v666
  %v705 = vpop.f32.mrb[0].mxu0
  %v706 = vadd.f32 0.0, %v705
  %v707 = vpop.f32.mrb[0].mxu0
  %v708 = vpop.f32.mrb[0].mxu0
  %v709 = vpop.f32.mrb[0].mxu0
  %710 = vdwg.mxu0
  %711 = vrot.lane.b32.xlu0 %v111, 112
  %v712 = vpop.permute.xlu0 %711
  %713 = vrot.lane.b32.xlu0 %v111, 80
  %v714 = vpop.permute.xlu0 %713
  %v716 = vsel %vm119, %v712, 0
  %v719 = vsel %vm119, %v714, 0
  %721 = vmatprep.subr.bf16.mxu0 0
  %722 = vmatpush1.bf16.xpose.msra.mxu0 %v719
  %723 = vmatprep.subr.bf16.mxu0 0
  %724 = vmatpush1.bf16.xpose.msra.mxu0 0
  %725 = vmatprep.subr.bf16.mxu0 0
  %726 = vmatpush1.bf16.xpose.msra.mxu0 0
  %727 = vmatprep.subr.bf16.mxu0 0
  %728 = vmatpush1.bf16.xpose.msra.mxu0 0
  %729 = vmatprep.subr.bf16.mxu0 0
  %730 = vmatpush1.bf16.xpose.msra.mxu0 0
  %731 = vmatprep.subr.bf16.mxu0 0
  %732 = vmatpush1.bf16.xpose.msra.mxu0 0
  %733 = vmatprep.subr.bf16.mxu0 0
  %734 = vmatpush1.bf16.xpose.msra.mxu0 0
  %735 = vmatprep.subr.bf16.mxu0 0
  %736 = vmatpush1.bf16.xpose.msra.mxu0 0
  %737 = vmatprep.subr.bf16.mxu0 0
  %738 = vmatpush1.bf16.xpose.msra.mxu0 0
  %739 = vmatprep.subr.bf16.mxu0 0
  %740 = vmatpush1.bf16.xpose.msra.mxu0 0
  %741 = vmatprep.subr.bf16.mxu0 0
  %742 = vmatpush1.bf16.xpose.msra.mxu0 0
  %743 = vmatprep.subr.bf16.mxu0 0
  %744 = vmatpush1.bf16.xpose.msra.mxu0 0
  %745 = vmatprep.subr.bf16.mxu0 0
  %746 = vmatpush1.bf16.xpose.msra.mxu0 0
  %747 = vmatprep.subr.bf16.mxu0 0
  %748 = vmatpush1.bf16.xpose.msra.mxu0 0
  %749 = vmatprep.subr.bf16.mxu0 0
  %750 = vmatpush1.bf16.xpose.msra.mxu0 0
  %751 = vmatprep.subr.bf16.mxu0 0
  %752 = vmatpush1.bf16.xpose.msra.mxu0 0
  %753 = vmatprep.mubr.bf16.mxu0 0
  %754 = vmatmul.mubr.bf16.gmra.mrb[0].mxu0 %v716
  %v755 = vpop.f32.mrb[0].mxu0
  %v756 = vadd.f32 0.0, %v755
  %v757 = vpop.f32.mrb[0].mxu0
  %v758 = vpop.f32.mrb[0].mxu0
  %v759 = vpop.f32.mrb[0].mxu0
  %760 = vdwg.mxu0
  %v761 = vmul.f32 %v706, 0.35355338
  %v762 = vmul.f32 %v756, 0.35355338
  %v763 = vsel %vm217, %v761, -1e+30
  %v764 = vsel %vm217, %v762, -1e+30
  %v765 = vsel %vm119, %v763, -inf
  %766 = vmax.xlane.f32.xlu0 %v765
  %v767 = vpop.xlane.xlu0 %766
  %v768 = vsel %vm119, %v764, -inf
  %769 = vmax.xlane.f32.xlu0 %v768
  %v770 = vpop.xlane.xlu0 %769
  %v771 = vsub.f32 %v763, %v767
  %v772 = vsub.f32 %v764, %v770
  %v773 = vmul.f32 %v771, 1.442695
  %v774 = vpow.pop %v773
  %v775 = vmul.f32 %v772, 1.442695
  %v776 = vpow.pop %v775
  %v777 = vsel %vm119, %v774, 0.0
  %778 = vadd.xlane.f32.xlu0 %v777
  %v779 = vpop.xlane.xlu0 %778
  %v780 = vsel %vm119, %v776, 0.0
  %781 = vadd.xlane.f32.xlu0 %v780
  %v782 = vpop.xlane.xlu0 %781
  %v783 = vrcp.pop %v779
  %v784 = vrcp.pop %v782
  %v785 = vmul.f32 %v774, %v783
  %v786 = vmul.f32 %v776, %v784
  %v787 = vpack.c.bf16 %v785, %v785
  %v788 = vpack.c.bf16 %v786, %v786
  %789 = vrot.lane.b32.xlu0 %v110, 48
  %v790 = vpop.permute.xlu0 %789
  %v792 = vsel %vm119, %v787, 0
  %v795 = vsel %vm249, %v790, 0
  %797 = vmatprep.subr.bf16.mxu0 0
  %798 = vmatpush1.bf16.msra.mxu0 %v795
  %799 = vmatprep.subr.bf16.mxu0 0
  %800 = vmatpush1.bf16.msra.mxu0 0
  %801 = vmatprep.subr.bf16.mxu0 0
  %802 = vmatpush1.bf16.msra.mxu0 0
  %803 = vmatprep.subr.bf16.mxu0 0
  %804 = vmatpush1.bf16.msra.mxu0 0
  %805 = vmatprep.subr.bf16.mxu0 0
  %806 = vmatpush1.bf16.msra.mxu0 0
  %807 = vmatprep.subr.bf16.mxu0 0
  %808 = vmatpush1.bf16.msra.mxu0 0
  %809 = vmatprep.subr.bf16.mxu0 0
  %810 = vmatpush1.bf16.msra.mxu0 0
  %811 = vmatprep.subr.bf16.mxu0 0
  %812 = vmatpush1.bf16.msra.mxu0 0
  %813 = vmatprep.subr.bf16.mxu0 0
  %814 = vmatpush1.bf16.msra.mxu0 0
  %815 = vmatprep.subr.bf16.mxu0 0
  %816 = vmatpush1.bf16.msra.mxu0 0
  %817 = vmatprep.subr.bf16.mxu0 0
  %818 = vmatpush1.bf16.msra.mxu0 0
  %819 = vmatprep.subr.bf16.mxu0 0
  %820 = vmatpush1.bf16.msra.mxu0 0
  %821 = vmatprep.subr.bf16.mxu0 0
  %822 = vmatpush1.bf16.msra.mxu0 0
  %823 = vmatprep.subr.bf16.mxu0 0
  %824 = vmatpush1.bf16.msra.mxu0 0
  %825 = vmatprep.subr.bf16.mxu0 0
  %826 = vmatpush1.bf16.msra.mxu0 0
  %827 = vmatprep.subr.bf16.mxu0 0
  %828 = vmatpush1.bf16.msra.mxu0 0
  %829 = vmatprep.mubr.bf16.mxu0 0
  %830 = vmatmul.mubr.bf16.gmra.mrb[0].mxu0 %v792
  %v831 = vpop.f32.mrb[0].mxu0
  %v832 = vadd.f32 0.0, %v831
  %v833 = vpop.f32.mrb[0].mxu0
  %v834 = vpop.f32.mrb[0].mxu0
  %v835 = vpop.f32.mrb[0].mxu0
  %836 = vdwg.mxu0
  %837 = vrot.lane.b32.xlu0 %v111, 48
  %v838 = vpop.permute.xlu0 %837
  %v840 = vsel %vm119, %v788, 0
  %v843 = vsel %vm249, %v838, 0
  %845 = vmatprep.subr.bf16.mxu0 0
  %846 = vmatpush1.bf16.msra.mxu0 %v843
  %847 = vmatprep.subr.bf16.mxu0 0
  %848 = vmatpush1.bf16.msra.mxu0 0
  %849 = vmatprep.subr.bf16.mxu0 0
  %850 = vmatpush1.bf16.msra.mxu0 0
  %851 = vmatprep.subr.bf16.mxu0 0
  %852 = vmatpush1.bf16.msra.mxu0 0
  %853 = vmatprep.subr.bf16.mxu0 0
  %854 = vmatpush1.bf16.msra.mxu0 0
  %855 = vmatprep.subr.bf16.mxu0 0
  %856 = vmatpush1.bf16.msra.mxu0 0
  %857 = vmatprep.subr.bf16.mxu0 0
  %858 = vmatpush1.bf16.msra.mxu0 0
  %859 = vmatprep.subr.bf16.mxu0 0
  %860 = vmatpush1.bf16.msra.mxu0 0
  %861 = vmatprep.subr.bf16.mxu0 0
  %862 = vmatpush1.bf16.msra.mxu0 0
  %863 = vmatprep.subr.bf16.mxu0 0
  %864 = vmatpush1.bf16.msra.mxu0 0
  %865 = vmatprep.subr.bf16.mxu0 0
  %866 = vmatpush1.bf16.msra.mxu0 0
  %867 = vmatprep.subr.bf16.mxu0 0
  %868 = vmatpush1.bf16.msra.mxu0 0
  %869 = vmatprep.subr.bf16.mxu0 0
  %870 = vmatpush1.bf16.msra.mxu0 0
  %871 = vmatprep.subr.bf16.mxu0 0
  %872 = vmatpush1.bf16.msra.mxu0 0
  %873 = vmatprep.subr.bf16.mxu0 0
  %874 = vmatpush1.bf16.msra.mxu0 0
  %875 = vmatprep.subr.bf16.mxu0 0
  %876 = vmatpush1.bf16.msra.mxu0 0
  %877 = vmatprep.mubr.bf16.mxu0 0
  %878 = vmatmul.mubr.bf16.gmra.mrb[0].mxu0 %v840
  %v879 = vpop.f32.mrb[0].mxu0
  %v880 = vadd.f32 0.0, %v879
  %v881 = vpop.f32.mrb[0].mxu0
  %v882 = vpop.f32.mrb[0].mxu0
  %v883 = vpop.f32.mrb[0].mxu0
  %884 = vdwg.mxu0
  %v885 = vpack.c.bf16 %v880, %v832
  %v887 = vsel %vm119, %v885, 0
  %v890 = vsel %vm249, %v105, 0
  %892 = vmatprep.subr.bf16.mxu0 0
  %893 = vmatpush1.bf16.msra.mxu0 %v890
  %894 = vmatprep.subr.bf16.mxu0 0
  %895 = vmatpush1.bf16.msra.mxu0 0
  %896 = vmatprep.subr.bf16.mxu0 0
  %897 = vmatpush1.bf16.msra.mxu0 0
  %898 = vmatprep.subr.bf16.mxu0 0
  %899 = vmatpush1.bf16.msra.mxu0 0
  %900 = vmatprep.subr.bf16.mxu0 0
  %901 = vmatpush1.bf16.msra.mxu0 0
  %902 = vmatprep.subr.bf16.mxu0 0
  %903 = vmatpush1.bf16.msra.mxu0 0
  %904 = vmatprep.subr.bf16.mxu0 0
  %905 = vmatpush1.bf16.msra.mxu0 0
  %906 = vmatprep.subr.bf16.mxu0 0
  %907 = vmatpush1.bf16.msra.mxu0 0
  %908 = vmatprep.subr.bf16.mxu0 0
  %909 = vmatpush1.bf16.msra.mxu0 0
  %910 = vmatprep.subr.bf16.mxu0 0
  %911 = vmatpush1.bf16.msra.mxu0 0
  %912 = vmatprep.subr.bf16.mxu0 0
  %913 = vmatpush1.bf16.msra.mxu0 0
  %914 = vmatprep.subr.bf16.mxu0 0
  %915 = vmatpush1.bf16.msra.mxu0 0
  %916 = vmatprep.subr.bf16.mxu0 0
  %917 = vmatpush1.bf16.msra.mxu0 0
  %918 = vmatprep.subr.bf16.mxu0 0
  %919 = vmatpush1.bf16.msra.mxu0 0
  %920 = vmatprep.subr.bf16.mxu0 0
  %921 = vmatpush1.bf16.msra.mxu0 0
  %922 = vmatprep.subr.bf16.mxu0 0
  %923 = vmatpush1.bf16.msra.mxu0 0
  %924 = vmatprep.mubr.bf16.mxu0 0
  %925 = vmatmul.mubr.bf16.gmra.mrb[0].mxu0 %v887
  %v926 = vpop.f32.mrb[0].mxu0
  %v927 = vadd.f32 0.0, %v926
  %v928 = vpop.f32.mrb[0].mxu0
  %v929 = vpop.f32.mrb[0].mxu0
  %v930 = vadd.f32 0.0, %v929
  %v931 = vpop.f32.mrb[0].mxu0
  %932 = vdwg.mxu0
  %v933 = vadd.f32 %v655, %v927
  %v934 = vadd.f32 %v658, %v930
  %935 = vrot.lane.b32.xlu0 %v110, 104
  %v936 = vpop.permute.xlu0 %935
  %937 = vrot.lane.b32.xlu0 %v110, 72
  %v938 = vpop.permute.xlu0 %937
  %v940 = vsel %vm119, %v936, 0
  %v943 = vsel %vm119, %v938, 0
  %945 = vmatprep.subr.bf16.mxu0 0
  %946 = vmatpush1.bf16.xpose.msra.mxu0 %v943
  %947 = vmatprep.subr.bf16.mxu0 0
  %948 = vmatpush1.bf16.xpose.msra.mxu0 0
  %949 = vmatprep.subr.bf16.mxu0 0
  %950 = vmatpush1.bf16.xpose.msra.mxu0 0
  %951 = vmatprep.subr.bf16.mxu0 0
  %952 = vmatpush1.bf16.xpose.msra.mxu0 0
  %953 = vmatprep.subr.bf16.mxu0 0
  %954 = vmatpush1.bf16.xpose.msra.mxu0 0
  %955 = vmatprep.subr.bf16.mxu0 0
  %956 = vmatpush1.bf16.xpose.msra.mxu0 0
  %957 = vmatprep.subr.bf16.mxu0 0
  %958 = vmatpush1.bf16.xpose.msra.mxu0 0
  %959 = vmatprep.subr.bf16.mxu0 0
  %960 = vmatpush1.bf16.xpose.msra.mxu0 0
  %961 = vmatprep.subr.bf16.mxu0 0
  %962 = vmatpush1.bf16.xpose.msra.mxu0 0
  %963 = vmatprep.subr.bf16.mxu0 0
  %964 = vmatpush1.bf16.xpose.msra.mxu0 0
  %965 = vmatprep.subr.bf16.mxu0 0
  %966 = vmatpush1.bf16.xpose.msra.mxu0 0
  %967 = vmatprep.subr.bf16.mxu0 0
  %968 = vmatpush1.bf16.xpose.msra.mxu0 0
  %969 = vmatprep.subr.bf16.mxu0 0
  %970 = vmatpush1.bf16.xpose.msra.mxu0 0
  %971 = vmatprep.subr.bf16.mxu0 0
  %972 = vmatpush1.bf16.xpose.msra.mxu0 0
  %973 = vmatprep.subr.bf16.mxu0 0
  %974 = vmatpush1.bf16.xpose.msra.mxu0 0
  %975 = vmatprep.subr.bf16.mxu0 0
  %976 = vmatpush1.bf16.xpose.msra.mxu0 0
  %977 = vmatprep.mubr.bf16.mxu0 0
  %978 = vmatmul.mubr.bf16.gmra.mrb[0].mxu0 %v940
  %v979 = vpop.f32.mrb[0].mxu0
  %v980 = vadd.f32 0.0, %v979
  %v981 = vpop.f32.mrb[0].mxu0
  %v982 = vpop.f32.mrb[0].mxu0
  %v983 = vpop.f32.mrb[0].mxu0
  %984 = vdwg.mxu0
  %985 = vrot.lane.b32.xlu0 %v111, 104
  %v986 = vpop.permute.xlu0 %985
  %987 = vrot.lane.b32.xlu0 %v111, 72
  %v988 = vpop.permute.xlu0 %987
  %v990 = vsel %vm119, %v986, 0
  %v993 = vsel %vm119, %v988, 0
  %995 = vmatprep.subr.bf16.mxu0 0
  %996 = vmatpush1.bf16.xpose.msra.mxu0 %v993
  %997 = vmatprep.subr.bf16.mxu0 0
  %998 = vmatpush1.bf16.xpose.msra.mxu0 0
  %999 = vmatprep.subr.bf16.mxu0 0
  %1000 = vmatpush1.bf16.xpose.msra.mxu0 0
  %1001 = vmatprep.subr.bf16.mxu0 0
  %1002 = vmatpush1.bf16.xpose.msra.mxu0 0
  %1003 = vmatprep.subr.bf16.mxu0 0
  %1004 = vmatpush1.bf16.xpose.msra.mxu0 0
  %1005 = vmatprep.subr.bf16.mxu0 0
  %1006 = vmatpush1.bf16.xpose.msra.mxu0 0
  %1007 = vmatprep.subr.bf16.mxu0 0
  %1008 = vmatpush1.bf16.xpose.msra.mxu0 0
  %1009 = vmatprep.subr.bf16.mxu0 0
  %1010 = vmatpush1.bf16.xpose.msra.mxu0 0
  %1011 = vmatprep.subr.bf16.mxu0 0
  %1012 = vmatpush1.bf16.xpose.msra.mxu0 0
  %1013 = vmatprep.subr.bf16.mxu0 0
  %1014 = vmatpush1.bf16.xpose.msra.mxu0 0
  %1015 = vmatprep.subr.bf16.mxu0 0
  %1016 = vmatpush1.bf16.xpose.msra.mxu0 0
  %1017 = vmatprep.subr.bf16.mxu0 0
  %1018 = vmatpush1.bf16.xpose.msra.mxu0 0
  %1019 = vmatprep.subr.bf16.mxu0 0
  %1020 = vmatpush1.bf16.xpose.msra.mxu0 0
  %1021 = vmatprep.subr.bf16.mxu0 0
  %1022 = vmatpush1.bf16.xpose.msra.mxu0 0
  %1023 = vmatprep.subr.bf16.mxu0 0
  %1024 = vmatpush1.bf16.xpose.msra.mxu0 0
  %1025 = vmatprep.subr.bf16.mxu0 0
  %1026 = vmatpush1.bf16.xpose.msra.mxu0 0
  %1027 = vmatprep.mubr.bf16.mxu0 0
  %1028 = vmatmul.mubr.bf16.gmra.mrb[0].mxu0 %v990
  %v1029 = vpop.f32.mrb[0].mxu0
  %v1030 = vadd.f32 0.0, %v1029
  %v1031 = vpop.f32.mrb[0].mxu0
  %v1032 = vpop.f32.mrb[0].mxu0
  %v1033 = vpop.f32.mrb[0].mxu0
  %1034 = vdwg.mxu0
  %v1035 = vmul.f32 %v980, 0.35355338
  %v1036 = vmul.f32 %v1030, 0.35355338
  %v1037 = vsel %vm217, %v1035, -1e+30
  %v1038 = vsel %vm217, %v1036, -1e+30
  %v1039 = vsel %vm119, %v1037, -inf
  %1040 = vmax.xlane.f32.xlu0 %v1039
  %v1041 = vpop.xlane.xlu0 %1040
  %v1042 = vsel %vm119, %v1038, -inf
  %1043 = vmax.xlane.f32.xlu0 %v1042
  %v1044 = vpop.xlane.xlu0 %1043
  %v1045 = vsub.f32 %v1037, %v1041
  %v1046 = vsub.f32 %v1038, %v1044
  %v1047 = vmul.f32 %v1045, 1.442695
  %v1048 = vpow.pop %v1047
  %v1049 = vmul.f32 %v1046, 1.442695
  %v1050 = vpow.pop %v1049
  %v1051 = vsel %vm119, %v1048, 0.0
  %1052 = vadd.xlane.f32.xlu0 %v1051
  %v1053 = vpop.xlane.xlu0 %1052
  %v1054 = vsel %vm119, %v1050, 0.0
  %1055 = vadd.xlane.f32.xlu0 %v1054
  %v1056 = vpop.xlane.xlu0 %1055
  %v1057 = vrcp.pop %v1053
  %v1058 = vrcp.pop %v1056
  %v1059 = vmul.f32 %v1048, %v1057
  %v1060 = vmul.f32 %v1050, %v1058
  %v1061 = vpack.c.bf16 %v1059, %v1059
  %v1062 = vpack.c.bf16 %v1060, %v1060
  %1063 = vrot.lane.b32.xlu0 %v110, 40
  %v1064 = vpop.permute.xlu0 %1063
  %v1066 = vsel %vm119, %v1061, 0
  %v1069 = vsel %vm249, %v1064, 0
  %1071 = vmatprep.subr.bf16.mxu0 0
  %1072 = vmatpush1.bf16.msra.mxu0 %v1069
  %1073 = vmatprep.subr.bf16.mxu0 0
  %1074 = vmatpush1.bf16.msra.mxu0 0
  %1075 = vmatprep.subr.bf16.mxu0 0
  %1076 = vmatpush1.bf16.msra.mxu0 0
  %1077 = vmatprep.subr.bf16.mxu0 0
  %1078 = vmatpush1.bf16.msra.mxu0 0
  %1079 = vmatprep.subr.bf16.mxu0 0
  %1080 = vmatpush1.bf16.msra.mxu0 0
  %1081 = vmatprep.subr.bf16.mxu0 0
  %1082 = vmatpush1.bf16.msra.mxu0 0
  %1083 = vmatprep.subr.bf16.mxu0 0
  %1084 = vmatpush1.bf16.msra.mxu0 0
  %1085 = vmatprep.subr.bf16.mxu0 0
  %1086 = vmatpush1.bf16.msra.mxu0 0
  %1087 = vmatprep.subr.bf16.mxu0 0
  %1088 = vmatpush1.bf16.msra.mxu0 0
  %1089 = vmatprep.subr.bf16.mxu0 0
  %1090 = vmatpush1.bf16.msra.mxu0 0
  %1091 = vmatprep.subr.bf16.mxu0 0
  %1092 = vmatpush1.bf16.msra.mxu0 0
  %1093 = vmatprep.subr.bf16.mxu0 0
  %1094 = vmatpush1.bf16.msra.mxu0 0
  %1095 = vmatprep.subr.bf16.mxu0 0
  %1096 = vmatpush1.bf16.msra.mxu0 0
  %1097 = vmatprep.subr.bf16.mxu0 0
  %1098 = vmatpush1.bf16.msra.mxu0 0
  %1099 = vmatprep.subr.bf16.mxu0 0
  %1100 = vmatpush1.bf16.msra.mxu0 0
  %1101 = vmatprep.subr.bf16.mxu0 0
  %1102 = vmatpush1.bf16.msra.mxu0 0
  %1103 = vmatprep.mubr.bf16.mxu0 0
  %1104 = vmatmul.mubr.bf16.gmra.mrb[0].mxu0 %v1066
  %v1105 = vpop.f32.mrb[0].mxu0
  %v1106 = vadd.f32 0.0, %v1105
  %v1107 = vpop.f32.mrb[0].mxu0
  %v1108 = vpop.f32.mrb[0].mxu0
  %v1109 = vpop.f32.mrb[0].mxu0
  %1110 = vdwg.mxu0
  %1111 = vrot.lane.b32.xlu0 %v111, 40
  %v1112 = vpop.permute.xlu0 %1111
  %v1114 = vsel %vm119, %v1062, 0
  %v1117 = vsel %vm249, %v1112, 0
  %1119 = vmatprep.subr.bf16.mxu0 0
  %1120 = vmatpush1.bf16.msra.mxu0 %v1117
  %1121 = vmatprep.subr.bf16.mxu0 0
  %1122 = vmatpush1.bf16.msra.mxu0 0
  %1123 = vmatprep.subr.bf16.mxu0 0
  %1124 = vmatpush1.bf16.msra.mxu0 0
  %1125 = vmatprep.subr.bf16.mxu0 0
  %1126 = vmatpush1.bf16.msra.mxu0 0
  %1127 = vmatprep.subr.bf16.mxu0 0
  %1128 = vmatpush1.bf16.msra.mxu0 0
  %1129 = vmatprep.subr.bf16.mxu0 0
  %1130 = vmatpush1.bf16.msra.mxu0 0
  %1131 = vmatprep.subr.bf16.mxu0 0
  %1132 = vmatpush1.bf16.msra.mxu0 0
  %1133 = vmatprep.subr.bf16.mxu0 0
  %1134 = vmatpush1.bf16.msra.mxu0 0
  %1135 = vmatprep.subr.bf16.mxu0 0
  %1136 = vmatpush1.bf16.msra.mxu0 0
  %1137 = vmatprep.subr.bf16.mxu0 0
  %1138 = vmatpush1.bf16.msra.mxu0 0
  %1139 = vmatprep.subr.bf16.mxu0 0
  %1140 = vmatpush1.bf16.msra.mxu0 0
  %1141 = vmatprep.subr.bf16.mxu0 0
  %1142 = vmatpush1.bf16.msra.mxu0 0
  %1143 = vmatprep.subr.bf16.mxu0 0
  %1144 = vmatpush1.bf16.msra.mxu0 0
  %1145 = vmatprep.subr.bf16.mxu0 0
  %1146 = vmatpush1.bf16.msra.mxu0 0
  %1147 = vmatprep.subr.bf16.mxu0 0
  %1148 = vmatpush1.bf16.msra.mxu0 0
  %1149 = vmatprep.subr.bf16.mxu0 0
  %1150 = vmatpush1.bf16.msra.mxu0 0
  %1151 = vmatprep.mubr.bf16.mxu0 0
  %1152 = vmatmul.mubr.bf16.gmra.mrb[0].mxu0 %v1114
  %v1153 = vpop.f32.mrb[0].mxu0
  %v1154 = vadd.f32 0.0, %v1153
  %v1155 = vpop.f32.mrb[0].mxu0
  %v1156 = vpop.f32.mrb[0].mxu0
  %v1157 = vpop.f32.mrb[0].mxu0
  %1158 = vdwg.mxu0
  %v1159 = vpack.c.bf16 %v1154, %v1106
  %v1161 = vsel %vm119, %v1159, 0
  %v1164 = vsel %vm249, %v106, 0
  %1166 = vmatprep.subr.bf16.mxu0 0
  %1167 = vmatpush1.bf16.msra.mxu0 %v1164
  %1168 = vmatprep.subr.bf16.mxu0 0
  %1169 = vmatpush1.bf16.msra.mxu0 0
  %1170 = vmatprep.subr.bf16.mxu0 0
  %1171 = vmatpush1.bf16.msra.mxu0 0
  %1172 = vmatprep.subr.bf16.mxu0 0
  %1173 = vmatpush1.bf16.msra.mxu0 0
  %1174 = vmatprep.subr.bf16.mxu0 0
  %1175 = vmatpush1.bf16.msra.mxu0 0
  %1176 = vmatprep.subr.bf16.mxu0 0
  %1177 = vmatpush1.bf16.msra.mxu0 0
  %1178 = vmatprep.subr.bf16.mxu0 0
  %1179 = vmatpush1.bf16.msra.mxu0 0
  %1180 = vmatprep.subr.bf16.mxu0 0
  %1181 = vmatpush1.bf16.msra.mxu0 0
  %1182 = vmatprep.subr.bf16.mxu0 0
  %1183 = vmatpush1.bf16.msra.mxu0 0
  %1184 = vmatprep.subr.bf16.mxu0 0
  %1185 = vmatpush1.bf16.msra.mxu0 0
  %1186 = vmatprep.subr.bf16.mxu0 0
  %1187 = vmatpush1.bf16.msra.mxu0 0
  %1188 = vmatprep.subr.bf16.mxu0 0
  %1189 = vmatpush1.bf16.msra.mxu0 0
  %1190 = vmatprep.subr.bf16.mxu0 0
  %1191 = vmatpush1.bf16.msra.mxu0 0
  %1192 = vmatprep.subr.bf16.mxu0 0
  %1193 = vmatpush1.bf16.msra.mxu0 0
  %1194 = vmatprep.subr.bf16.mxu0 0
  %1195 = vmatpush1.bf16.msra.mxu0 0
  %1196 = vmatprep.subr.bf16.mxu0 0
  %1197 = vmatpush1.bf16.msra.mxu0 0
  %1198 = vmatprep.mubr.bf16.mxu0 0
  %1199 = vmatmul.mubr.bf16.gmra.mrb[0].mxu0 %v1161
  %v1200 = vpop.f32.mrb[0].mxu0
  %v1201 = vadd.f32 0.0, %v1200
  %v1202 = vpop.f32.mrb[0].mxu0
  %v1203 = vpop.f32.mrb[0].mxu0
  %v1204 = vadd.f32 0.0, %v1203
  %v1205 = vpop.f32.mrb[0].mxu0
  %1206 = vdwg.mxu0
  %v1207 = vadd.f32 %v933, %v1201
  %v1208 = vadd.f32 %v934, %v1204
  %v1209 = vld [vmem:[%s4] sm:$0x1]
  %v1211 = vlaneseq
  %v1212 = vshrl.u32 %v1211, 7
  %v1213 = vsub.s32 0, %v1212
  %v1214 = vrot.slane %v1209, %v1213
  %v1216 = vadd.f32 %v1207, %v1214
  %v1217 = vadd.f32 %v1208, %v1214
  %v1218 = vunpack.c.l.bf16 %v27
  %v1219 = vunpack.c.l.bf16 %v28
  %v1220 = vadd.f32 %v1218, %v1216
  %v1221 = vadd.f32 %v1219, %v1217
  %v1222 = vld [vmem:[%s5] sm:$0x1]
  %v1223 = vld [vmem:[%s6] sm:$0x1]
  %v1224 = vsel %vm57, %v1220, 0.0
  %1225 = vadd.xlane.f32.xlu0 %v1224
  %v1226 = vpop.xlane.xlu0 %1225
  %v1227 = vsel %vm57, %v1221, 0.0
  %1228 = vadd.xlane.f32.xlu0 %v1227
  %v1229 = vpop.xlane.xlu0 %1228
  %v1230 = vrcp.pop 32.0
  %v1231 = vmul.f32 %v1226, %v1230
  %v1232 = vmul.f32 %v1229, %v1230
  %v1233 = vsub.f32 %v1220, %v1231
  %v1234 = vsub.f32 %v1221, %v1232
  %v1235 = vmul.f32 %v1233, %v1233
  %v1236 = vmul.f32 %v1234, %v1234
  %v1237 = vsel %vm57, %v1235, 0.0
  %1238 = vadd.xlane.f32.xlu0 %v1237
  %v1239 = vpop.xlane.xlu0 %1238
  %v1240 = vsel %vm57, %v1236, 0.0
  %1241 = vadd.xlane.f32.xlu0 %v1240
  %v1242 = vpop.xlane.xlu0 %1241
  %v1243 = vmul.f32 %v1239, %v1230
  %v1244 = vmul.f32 %v1242, %v1230
  %v1245 = vadd.f32 %v1243, 1e-05
  %v1246 = vadd.f32 %v1244, 1e-05
  %v1247 = vrsqrt.pop %v1245
  %v1248 = vrsqrt.pop %v1246
  %v1249 = vmul.f32 %v1233, %v1247
  %v1250 = vmul.f32 %v1234, %v1248
  %v1252 = vlaneseq
  %v1253 = vshrl.u32 %v1252, 7
  %v1254 = vsub.s32 0, %v1253
  %v1255 = vrot.slane %v1222, %v1254
  %v1257 = vmul.f32 %v1249, %v1255
  %v1258 = vmul.f32 %v1250, %v1255
  %v1260 = vlaneseq
  %v1261 = vshrl.u32 %v1260, 7
  %v1262 = vsub.s32 0, %v1261
  %v1263 = vrot.slane %v1223, %v1262
  %v1265 = vadd.f32 %v1257, %v1263
  %v1266 = vadd.f32 %v1258, %v1263
  %v1267 = vpack.c.bf16 %v1266, %v1265
  %v1269 = vunpack.c.l.b16 %v1267
  %v1270 = vunpack.c.h.b16 %v1267
  %v1271 = vpack.c.b16 %v1269, %v1269
  %v1272 = vpack.c.b16 %v1270, %v1270
  %vm1275 = vcmask 257024
  %1276 = vst.msk [vmem:[%s7] sm:$0xf] %vm1275, %v1271
  %1277 = vst.msk [vmem:[%s7 + $0x4] sm:$0xf] %vm1275, %v1272
  // Predicated region
  $region30: #{transformer_forward.15} parent=0 // pred_check
    _
  $region31: #{transformer_forward.15} parent=0 // pred_check_branch
    %1279 = sbr.rel (0) target = $region33
  $region32: #{transformer_forward.15} parent=0 // pred_region
    _
  $region33: #{transformer_forward.15} parent=0 // pred_fallthru
    _
  // Predicated region
  $region34: #{transformer_forward.15} parent=0 // pred_check
    _
  $region35: #{transformer_forward.15} parent=0 // pred_check_branch
    %1281 = sbr.rel (0) target = $region37
  $region36: #{transformer_forward.15} parent=0 // pred_region
    _
  $region37: #{transformer_forward.15} parent=0 // pred_fallthru
    _

// kernel: transformer_forward.16
$region0: #{transformer_forward.16}
  #allocation0 [shape = 'u32[]', space=smem, size = 0x4, offset = 0x4, fixed_abs, tag = 'smem constant byte address 0x4 - core index']
  #allocation1 [shape = 'u32[144,128]{1,0:T(1,128)}', space=vmem, size = 0x12000, scoped, tag = 'internal scratch']
  %s0 = inlined_call_operand.vmem [shape: bf16[16,32], index: 0, kind: input, shape index: {}]
  %s1 = inlined_call_operand.vmem [shape: bf16[16,32], index: 1, kind: input, shape index: {}]
  %s2 = inlined_call_operand.vmem [shape: bf16[32,32], index: 2, kind: input, shape index: {}]
  %s3 = inlined_call_operand.vmem [shape: f32[1,32], index: 3, kind: input, shape index: {}]
  %s4 = inlined_call_operand.vmem [shape: bf16[32,64], index: 4, kind: input, shape index: {}]
  %s5 = inlined_call_operand.vmem [shape: f32[1,64], index: 5, kind: input, shape index: {}]
  %s6 = inlined_call_operand.vmem [shape: bf16[32,32], index: 6, kind: input, shape index: {}]
  %s7 = inlined_call_operand.vmem [shape: f32[1,32], index: 7, kind: input, shape index: {}]
  %s8 = inlined_call_operand.vmem [shape: f32[1,32], index: 8, kind: input, shape index: {}]
  %s9 = inlined_call_operand.vmem [shape: f32[1,32], index: 9, kind: input, shape index: {}]
  %s10 = inlined_call_operand.vmem [shape: bf16[16,32], index: 10, kind: output, shape index: {}]
  %s11 = sld [smem:[#allocation0]]
  $region50: #{transformer_forward.16} parent=0
    _
  %s13 = ssub.s32 1, %s11
  %s14 = scalar_select 0, %s13, %s11
  // Predicated region
  $region2: #{transformer_forward.16} parent=0 // pred_check
    _
  $region3: #{transformer_forward.16} parent=0 // pred_check_branch
    %16 = sbr.rel (0) target = $region5
  $region4: #{transformer_forward.16} parent=0 // pred_region
    _
  $region5: #{transformer_forward.16} parent=0 // pred_fallthru
    _
  // Predicated region
  $region6: #{transformer_forward.16} parent=0 // pred_check
    _
  $region7: #{transformer_forward.16} parent=0 // pred_check_branch
    %18 = sbr.rel (0) target = $region9
  $region8: #{transformer_forward.16} parent=0 // pred_region
    _
  $region9: #{transformer_forward.16} parent=0 // pred_fallthru
    _
  // Predicated region
  $region10: #{transformer_forward.16} parent=0 // pred_check
    _
  $region11: #{transformer_forward.16} parent=0 // pred_check_branch
    %20 = sbr.rel (0) target = $region13
  $region12: #{transformer_forward.16} parent=0 // pred_region
    _
  $region13: #{transformer_forward.16} parent=0 // pred_fallthru
    _
  // Predicated region
  $region14: #{transformer_forward.16} parent=0 // pred_check
    _
  $region15: #{transformer_forward.16} parent=0 // pred_check_branch
    %22 = sbr.rel (0) target = $region17
  $region16: #{transformer_forward.16} parent=0 // pred_region
    _
  $region17: #{transformer_forward.16} parent=0 // pred_fallthru
    _
  // Predicated region
  $region18: #{transformer_forward.16} parent=0 // pred_check
    _
  $region19: #{transformer_forward.16} parent=0 // pred_check_branch
    %24 = sbr.rel (0) target = $region21
  $region20: #{transformer_forward.16} parent=0 // pred_region
    _
  $region21: #{transformer_forward.16} parent=0 // pred_fallthru
    _
  // Predicated region
  $region22: #{transformer_forward.16} parent=0 // pred_check
    _
  $region23: #{transformer_forward.16} parent=0 // pred_check_branch
    %26 = sbr.rel (0) target = $region25
  $region24: #{transformer_forward.16} parent=0 // pred_region
    _
  $region25: #{transformer_forward.16} parent=0 // pred_fallthru
    _
  // Predicated region
  $region26: #{transformer_forward.16} parent=0 // pred_check
    _
  $region27: #{transformer_forward.16} parent=0 // pred_check_branch
    %28 = sbr.rel (0) target = $region29
  $region28: #{transformer_forward.16} parent=0 // pred_region
    _
  $region29: #{transformer_forward.16} parent=0 // pred_fallthru
    _
  // Predicated region
  $region30: #{transformer_forward.16} parent=0 // pred_check
    _
  $region31: #{transformer_forward.16} parent=0 // pred_check_branch
    %30 = sbr.rel (0) target = $region33
  $region32: #{transformer_forward.16} parent=0 // pred_region
    _
  $region33: #{transformer_forward.16} parent=0 // pred_fallthru
    _
  // Predicated region
  $region34: #{transformer_forward.16} parent=0 // pred_check
    _
  $region35: #{transformer_forward.16} parent=0 // pred_check_branch
    %32 = sbr.rel (0) target = $region37
  $region36: #{transformer_forward.16} parent=0 // pred_region
    _
  $region37: #{transformer_forward.16} parent=0 // pred_fallthru
    _
  // Predicated region
  $region38: #{transformer_forward.16} parent=0 // pred_check
    _
  $region39: #{transformer_forward.16} parent=0 // pred_check_branch
    %34 = sbr.rel (0) target = $region41
  $region40: #{transformer_forward.16} parent=0 // pred_region
    _
  $region41: #{transformer_forward.16} parent=0 // pred_fallthru
    _
  %v36 = vld [vmem:[%s0] sm:$0xf]
  %v37 = vld [vmem:[%s0 + $0x4] sm:$0xf]
  %v38 = vld [vmem:[%s1] sm:$0xf]
  %v39 = vld [vmem:[%s1 + $0x4] sm:$0xf]
  %v40 = vld [vmem:[%s2] sm:$0xf]
  %v41 = vld [vmem:[%s2 + $0x4] sm:$0xf]
  %v42 = vld [vmem:[%s2 + $0x8] sm:$0xf]
  %v43 = vld [vmem:[%s2 + $0xc] sm:$0xf]
  %v44 = vld [vmem:[%s3] sm:$0x1]
  %v46 = vlaneseq
  %v47 = vshrl.u32 %v46, 7
  %v48 = vsub.s32 0, %v47
  %v49 = vrot.slane %v44, %v48
  %v53 = vunpack.c.l.b16 %v36
  %v54 = vunpack.c.l.b16 %v37
  %v55 = vpack.c.b16 %v54, %v53
  %v60 = vunpack.c.l.b16 %v40
  %v61 = vunpack.c.l.b16 %v41
  %v62 = vunpack.c.l.b16 %v42
  %v63 = vunpack.c.l.b16 %v43
  %v64 = vpack.c.b16 %v61, %v60
  %v65 = vpack.c.b16 %v63, %v62
  %vm68 = vcmask 261120
  %v70 = vsel %vm68, %v55, 0
  %72 = vmatprep.subr.bf16.mxu0 0
  %73 = vmatpush1.bf16.msra.mxu0 %v64
  %74 = vmatprep.subr.bf16.mxu0 0
  %75 = vmatpush1.bf16.msra.mxu0 %v65
  %76 = vmatprep.subr.bf16.mxu0 0
  %77 = vmatpush1.bf16.msra.mxu0 0
  %78 = vmatprep.subr.bf16.mxu0 0
  %79 = vmatpush1.bf16.msra.mxu0 0
  %80 = vmatprep.subr.bf16.mxu0 0
  %81 = vmatpush1.bf16.msra.mxu0 0
  %82 = vmatprep.subr.bf16.mxu0 0
  %83 = vmatpush1.bf16.msra.mxu0 0
  %84 = vmatprep.subr.bf16.mxu0 0
  %85 = vmatpush1.bf16.msra.mxu0 0
  %86 = vmatprep.subr.bf16.mxu0 0
  %87 = vmatpush1.bf16.msra.mxu0 0
  %88 = vmatprep.subr.bf16.mxu0 0
  %89 = vmatpush1.bf16.msra.mxu0 0
  %90 = vmatprep.subr.bf16.mxu0 0
  %91 = vmatpush1.bf16.msra.mxu0 0
  %92 = vmatprep.subr.bf16.mxu0 0
  %93 = vmatpush1.bf16.msra.mxu0 0
  %94 = vmatprep.subr.bf16.mxu0 0
  %95 = vmatpush1.bf16.msra.mxu0 0
  %96 = vmatprep.subr.bf16.mxu0 0
  %97 = vmatpush1.bf16.msra.mxu0 0
  %98 = vmatprep.subr.bf16.mxu0 0
  %99 = vmatpush1.bf16.msra.mxu0 0
  %100 = vmatprep.subr.bf16.mxu0 0
  %101 = vmatpush1.bf16.msra.mxu0 0
  %102 = vmatprep.subr.bf16.mxu0 0
  %103 = vmatpush1.bf16.msra.mxu0 0
  %104 = vmatprep.mubr.bf16.mxu0 0
  %105 = vmatmul.mubr.bf16.gmra.mrb[0].mxu0 %v70
  %v106 = vpop.f32.mrb[0].mxu0
  %v107 = vadd.f32 %v49, %v106
  %v108 = vpop.f32.mrb[0].mxu0
  %v109 = vpop.f32.mrb[0].mxu0
  %v110 = vadd.f32 %v49, %v109
  %v111 = vpop.f32.mrb[0].mxu0
  %112 = vdwg.mxu0
  %v113 = vpack.c.bf16 %v110, %v107
  %v114 = vld [vmem:[%s4] sm:$0xf]
  %v115 = vld [vmem:[%s4 + $0x4] sm:$0xf]
  %v116 = vld [vmem:[%s4 + $0x8] sm:$0xf]
  %v117 = vld [vmem:[%s4 + $0xc] sm:$0xf]
  %v118 = vld [vmem:[%s5] sm:$0x1]
  %v120 = vlaneseq
  %v121 = vshrl.u32 %v120, 7
  %v122 = vsub.s32 0, %v121
  %v123 = vrot.slane %v118, %v122
  %v127 = vunpack.c.l.b16 %v38
  %v128 = vunpack.c.l.b16 %v39
  %v129 = vpack.c.b16 %v128, %v127
  %v134 = vunpack.c.l.b16 %v114
  %v135 = vunpack.c.l.b16 %v115
  %v136 = vunpack.c.l.b16 %v116
  %v137 = vunpack.c.l.b16 %v117
  %v138 = vpack.c.b16 %v135, %v134
  %v139 = vpack.c.b16 %v137, %v136
  %v143 = vsel %vm68, %v129, 0
  %145 = vmatprep.subr.bf16.mxu0 0
  %146 = vmatpush1.bf16.msra.mxu0 %v138
  %147 = vmatprep.subr.bf16.mxu0 0
  %148 = vmatpush1.bf16.msra.mxu0 %v139
  %149 = vmatprep.subr.bf16.mxu0 0
  %150 = vmatpush1.bf16.msra.mxu0 0
  %151 = vmatprep.subr.bf16.mxu0 0
  %152 = vmatpush1.bf16.msra.mxu0 0
  %153 = vmatprep.subr.bf16.mxu0 0
  %154 = vmatpush1.bf16.msra.mxu0 0
  %155 = vmatprep.subr.bf16.mxu0 0
  %156 = vmatpush1.bf16.msra.mxu0 0
  %157 = vmatprep.subr.bf16.mxu0 0
  %158 = vmatpush1.bf16.msra.mxu0 0
  %159 = vmatprep.subr.bf16.mxu0 0
  %160 = vmatpush1.bf16.msra.mxu0 0
  %161 = vmatprep.subr.bf16.mxu0 0
  %162 = vmatpush1.bf16.msra.mxu0 0
  %163 = vmatprep.subr.bf16.mxu0 0
  %164 = vmatpush1.bf16.msra.mxu0 0
  %165 = vmatprep.subr.bf16.mxu0 0
  %166 = vmatpush1.bf16.msra.mxu0 0
  %167 = vmatprep.subr.bf16.mxu0 0
  %168 = vmatpush1.bf16.msra.mxu0 0
  %169 = vmatprep.subr.bf16.mxu0 0
  %170 = vmatpush1.bf16.msra.mxu0 0
  %171 = vmatprep.subr.bf16.mxu0 0
  %172 = vmatpush1.bf16.msra.mxu0 0
  %173 = vmatprep.subr.bf16.mxu0 0
  %174 = vmatpush1.bf16.msra.mxu0 0
  %175 = vmatprep.subr.bf16.mxu0 0
  %176 = vmatpush1.bf16.msra.mxu0 0
  %177 = vmatprep.mubr.bf16.mxu0 0
  %178 = vmatmul.mubr.bf16.gmra.mrb[0].mxu0 %v143
  %v179 = vpop.f32.mrb[0].mxu0
  %v180 = vadd.f32 %v123, %v179
  %v181 = vpop.f32.mrb[0].mxu0
  %v182 = vpop.f32.mrb[0].mxu0
  %v183 = vadd.f32 %v123, %v182
  %v184 = vpop.f32.mrb[0].mxu0
  %185 = vdwg.mxu0
  %v186 = vpack.c.bf16 %v183, %v180
  %v187 = vld [vmem:[%s6] sm:$0xf]
  %v188 = vld [vmem:[%s6 + $0x4] sm:$0xf]
  %v189 = vld [vmem:[%s6 + $0x8] sm:$0xf]
  %v190 = vld [vmem:[%s6 + $0xc] sm:$0xf]
  %v192 = vunpack.c.l.b16 %v113
  %v193 = vunpack.c.h.b16 %v113
  %v194 = vpack.c.b16 %v192, %v192
  %v195 = vpack.c.b16 %v193, %v193
  %v197 = vunpack.c.l.b16 %v186
  %v198 = vunpack.c.h.b16 %v186
  %v199 = vpack.c.b16 %v197, %v197
  %v200 = vpack.c.b16 %v198, %v198
  %vm201 = vcmask 64512
  %v203 = vsel %vm201, %v194, 0
  %v206 = vsel %vm201, %v199, 0
  %208 = vmatprep.subr.bf16.mxu0 0
  %209 = vmatpush1.bf16.xpose.msra.mxu0 %v206
  %210 = vmatprep.subr.bf16.mxu0 0
  %211 = vmatpush1.bf16.xpose.msra.mxu0 0
  %212 = vmatprep.subr.bf16.mxu0 0
  %213 = vmatpush1.bf16.xpose.msra.mxu0 0
  %214 = vmatprep.subr.bf16.mxu0 0
  %215 = vmatpush1.bf16.xpose.msra.mxu0 0
  %216 = vmatprep.subr.bf16.mxu0 0
  %217 = vmatpush1.bf16.xpose.msra.mxu0 0
  %218 = vmatprep.subr.bf16.mxu0 0
  %219 = vmatpush1.bf16.xpose.msra.mxu0 0
  %220 = vmatprep.subr.bf16.mxu0 0
  %221 = vmatpush1.bf16.xpose.msra.mxu0 0
  %222 = vmatprep.subr.bf16.mxu0 0
  %223 = vmatpush1.bf16.xpose.msra.mxu0 0
  %224 = vmatprep.subr.bf16.mxu0 0
  %225 = vmatpush1.bf16.xpose.msra.mxu0 0
  %226 = vmatprep.subr.bf16.mxu0 0
  %227 = vmatpush1.bf16.xpose.msra.mxu0 0
  %228 = vmatprep.subr.bf16.mxu0 0
  %229 = vmatpush1.bf16.xpose.msra.mxu0 0
  %230 = vmatprep.subr.bf16.mxu0 0
  %231 = vmatpush1.bf16.xpose.msra.mxu0 0
  %232 = vmatprep.subr.bf16.mxu0 0
  %233 = vmatpush1.bf16.xpose.msra.mxu0 0
  %234 = vmatprep.subr.bf16.mxu0 0
  %235 = vmatpush1.bf16.xpose.msra.mxu0 0
  %236 = vmatprep.subr.bf16.mxu0 0
  %237 = vmatpush1.bf16.xpose.msra.mxu0 0
  %238 = vmatprep.subr.bf16.mxu0 0
  %239 = vmatpush1.bf16.xpose.msra.mxu0 0
  %240 = vmatprep.mubr.bf16.mxu0 0
  %241 = vmatmul.mubr.bf16.gmra.mrb[0].mxu0 %v203
  %v242 = vpop.f32.mrb[0].mxu0
  %v243 = vadd.f32 0.0, %v242
  %v244 = vpop.f32.mrb[0].mxu0
  %v245 = vpop.f32.mrb[0].mxu0
  %v246 = vpop.f32.mrb[0].mxu0
  %247 = vdwg.mxu0
  %v249 = vsel %vm201, %v195, 0
  %v252 = vsel %vm201, %v200, 0
  %254 = vmatprep.subr.bf16.mxu0 0
  %255 = vmatpush1.bf16.xpose.msra.mxu0 %v252
  %256 = vmatprep.subr.bf16.mxu0 0
  %257 = vmatpush1.bf16.xpose.msra.mxu0 0
  %258 = vmatprep.subr.bf16.mxu0 0
  %259 = vmatpush1.bf16.xpose.msra.mxu0 0
  %260 = vmatprep.subr.bf16.mxu0 0
  %261 = vmatpush1.bf16.xpose.msra.mxu0 0
  %262 = vmatprep.subr.bf16.mxu0 0
  %263 = vmatpush1.bf16.xpose.msra.mxu0 0
  %264 = vmatprep.subr.bf16.mxu0 0
  %265 = vmatpush1.bf16.xpose.msra.mxu0 0
  %266 = vmatprep.subr.bf16.mxu0 0
  %267 = vmatpush1.bf16.xpose.msra.mxu0 0
  %268 = vmatprep.subr.bf16.mxu0 0
  %269 = vmatpush1.bf16.xpose.msra.mxu0 0
  %270 = vmatprep.subr.bf16.mxu0 0
  %271 = vmatpush1.bf16.xpose.msra.mxu0 0
  %272 = vmatprep.subr.bf16.mxu0 0
  %273 = vmatpush1.bf16.xpose.msra.mxu0 0
  %274 = vmatprep.subr.bf16.mxu0 0
  %275 = vmatpush1.bf16.xpose.msra.mxu0 0
  %276 = vmatprep.subr.bf16.mxu0 0
  %277 = vmatpush1.bf16.xpose.msra.mxu0 0
  %278 = vmatprep.subr.bf16.mxu0 0
  %279 = vmatpush1.bf16.xpose.msra.mxu0 0
  %280 = vmatprep.subr.bf16.mxu0 0
  %281 = vmatpush1.bf16.xpose.msra.mxu0 0
  %282 = vmatprep.subr.bf16.mxu0 0
  %283 = vmatpush1.bf16.xpose.msra.mxu0 0
  %284 = vmatprep.subr.bf16.mxu0 0
  %285 = vmatpush1.bf16.xpose.msra.mxu0 0
  %286 = vmatprep.mubr.bf16.mxu0 0
  %287 = vmatmul.mubr.bf16.gmra.mrb[0].mxu0 %v249
  %v288 = vpop.f32.mrb[0].mxu0
  %v289 = vadd.f32 0.0, %v288
  %v290 = vpop.f32.mrb[0].mxu0
  %v291 = vpop.f32.mrb[0].mxu0
  %v292 = vpop.f32.mrb[0].mxu0
  %293 = vdwg.mxu0
  %v294 = vmul.f32 %v243, 0.35355338
  %v295 = vmul.f32 %v289, 0.35355338
  %v296 = vsel %vm201, %v294, -inf
  %297 = vmax.xlane.f32.xlu0 %v296
  %v298 = vpop.xlane.xlu0 %297
  %v299 = vsel %vm201, %v295, -inf
  %300 = vmax.xlane.f32.xlu0 %v299
  %v301 = vpop.xlane.xlu0 %300
  %v302 = vsub.f32 %v294, %v298
  %v303 = vsub.f32 %v295, %v301
  %v304 = vmul.f32 %v302, 1.442695
  %v305 = vpow.pop %v304
  %v306 = vmul.f32 %v303, 1.442695
  %v307 = vpow.pop %v306
  %v308 = vsel %vm201, %v305, 0.0
  %309 = vadd.xlane.f32.xlu0 %v308
  %v310 = vpop.xlane.xlu0 %309
  %v311 = vsel %vm201, %v307, 0.0
  %312 = vadd.xlane.f32.xlu0 %v311
  %v313 = vpop.xlane.xlu0 %312
  %v314 = vrcp.pop %v310
  %v315 = vrcp.pop %v313
  %v316 = vmul.f32 %v305, %v314
  %v317 = vmul.f32 %v307, %v315
  %v318 = vpack.c.bf16 %v316, %v316
  %v319 = vpack.c.bf16 %v317, %v317
  %320 = vrot.lane.b32.xlu0 %v199, 96
  %v321 = vpop.permute.xlu0 %320
  %v323 = vsel %vm201, %v318, 0
  %vm325 = vcmask 1043456
  %v327 = vsel %vm325, %v321, 0
  %329 = vmatprep.subr.bf16.mxu0 0
  %330 = vmatpush1.bf16.msra.mxu0 %v327
  %331 = vmatprep.subr.bf16.mxu0 0
  %332 = vmatpush1.bf16.msra.mxu0 0
  %333 = vmatprep.subr.bf16.mxu0 0
  %334 = vmatpush1.bf16.msra.mxu0 0
  %335 = vmatprep.subr.bf16.mxu0 0
  %336 = vmatpush1.bf16.msra.mxu0 0
  %337 = vmatprep.subr.bf16.mxu0 0
  %338 = vmatpush1.bf16.msra.mxu0 0
  %339 = vmatprep.subr.bf16.mxu0 0
  %340 = vmatpush1.bf16.msra.mxu0 0
  %341 = vmatprep.subr.bf16.mxu0 0
  %342 = vmatpush1.bf16.msra.mxu0 0
  %343 = vmatprep.subr.bf16.mxu0 0
  %344 = vmatpush1.bf16.msra.mxu0 0
  %345 = vmatprep.subr.bf16.mxu0 0
  %346 = vmatpush1.bf16.msra.mxu0 0
  %347 = vmatprep.subr.bf16.mxu0 0
  %348 = vmatpush1.bf16.msra.mxu0 0
  %349 = vmatprep.subr.bf16.mxu0 0
  %350 = vmatpush1.bf16.msra.mxu0 0
  %351 = vmatprep.subr.bf16.mxu0 0
  %352 = vmatpush1.bf16.msra.mxu0 0
  %353 = vmatprep.subr.bf16.mxu0 0
  %354 = vmatpush1.bf16.msra.mxu0 0
  %355 = vmatprep.subr.bf16.mxu0 0
  %356 = vmatpush1.bf16.msra.mxu0 0
  %357 = vmatprep.subr.bf16.mxu0 0
  %358 = vmatpush1.bf16.msra.mxu0 0
  %359 = vmatprep.subr.bf16.mxu0 0
  %360 = vmatpush1.bf16.msra.mxu0 0
  %361 = vmatprep.mubr.bf16.mxu0 0
  %362 = vmatmul.mubr.bf16.gmra.mrb[0].mxu0 %v323
  %v363 = vpop.f32.mrb[0].mxu0
  %v364 = vadd.f32 0.0, %v363
  %v365 = vpop.f32.mrb[0].mxu0
  %v366 = vpop.f32.mrb[0].mxu0
  %v367 = vpop.f32.mrb[0].mxu0
  %368 = vdwg.mxu0
  %369 = vrot.lane.b32.xlu0 %v200, 96
  %v370 = vpop.permute.xlu0 %369
  %v372 = vsel %vm201, %v319, 0
  %v375 = vsel %vm325, %v370, 0
  %377 = vmatprep.subr.bf16.mxu0 0
  %378 = vmatpush1.bf16.msra.mxu0 %v375
  %379 = vmatprep.subr.bf16.mxu0 0
  %380 = vmatpush1.bf16.msra.mxu0 0
  %381 = vmatprep.subr.bf16.mxu0 0
  %382 = vmatpush1.bf16.msra.mxu0 0
  %383 = vmatprep.subr.bf16.mxu0 0
  %384 = vmatpush1.bf16.msra.mxu0 0
  %385 = vmatprep.subr.bf16.mxu0 0
  %386 = vmatpush1.bf16.msra.mxu0 0
  %387 = vmatprep.subr.bf16.mxu0 0
  %388 = vmatpush1.bf16.msra.mxu0 0
  %389 = vmatprep.subr.bf16.mxu0 0
  %390 = vmatpush1.bf16.msra.mxu0 0
  %391 = vmatprep.subr.bf16.mxu0 0
  %392 = vmatpush1.bf16.msra.mxu0 0
  %393 = vmatprep.subr.bf16.mxu0 0
  %394 = vmatpush1.bf16.msra.mxu0 0
  %395 = vmatprep.subr.bf16.mxu0 0
  %396 = vmatpush1.bf16.msra.mxu0 0
  %397 = vmatprep.subr.bf16.mxu0 0
  %398 = vmatpush1.bf16.msra.mxu0 0
  %399 = vmatprep.subr.bf16.mxu0 0
  %400 = vmatpush1.bf16.msra.mxu0 0
  %401 = vmatprep.subr.bf16.mxu0 0
  %402 = vmatpush1.bf16.msra.mxu0 0
  %403 = vmatprep.subr.bf16.mxu0 0
  %404 = vmatpush1.bf16.msra.mxu0 0
  %405 = vmatprep.subr.bf16.mxu0 0
  %406 = vmatpush1.bf16.msra.mxu0 0
  %407 = vmatprep.subr.bf16.mxu0 0
  %408 = vmatpush1.bf16.msra.mxu0 0
  %409 = vmatprep.mubr.bf16.mxu0 0
  %410 = vmatmul.mubr.bf16.gmra.mrb[0].mxu0 %v372
  %v411 = vpop.f32.mrb[0].mxu0
  %v412 = vadd.f32 0.0, %v411
  %v413 = vpop.f32.mrb[0].mxu0
  %v414 = vpop.f32.mrb[0].mxu0
  %v415 = vpop.f32.mrb[0].mxu0
  %416 = vdwg.mxu0
  %v417 = vpack.c.bf16 %v412, %v364
  %418 = vrot.lane.b32.xlu0 %v194, 120
  %v419 = vpop.permute.xlu0 %418
  %420 = vrot.lane.b32.xlu0 %v199, 120
  %v421 = vpop.permute.xlu0 %420
  %v423 = vsel %vm201, %v419, 0
  %v426 = vsel %vm201, %v421, 0
  %428 = vmatprep.subr.bf16.mxu0 0
  %429 = vmatpush1.bf16.xpose.msra.mxu0 %v426
  %430 = vmatprep.subr.bf16.mxu0 0
  %431 = vmatpush1.bf16.xpose.msra.mxu0 0
  %432 = vmatprep.subr.bf16.mxu0 0
  %433 = vmatpush1.bf16.xpose.msra.mxu0 0
  %434 = vmatprep.subr.bf16.mxu0 0
  %435 = vmatpush1.bf16.xpose.msra.mxu0 0
  %436 = vmatprep.subr.bf16.mxu0 0
  %437 = vmatpush1.bf16.xpose.msra.mxu0 0
  %438 = vmatprep.subr.bf16.mxu0 0
  %439 = vmatpush1.bf16.xpose.msra.mxu0 0
  %440 = vmatprep.subr.bf16.mxu0 0
  %441 = vmatpush1.bf16.xpose.msra.mxu0 0
  %442 = vmatprep.subr.bf16.mxu0 0
  %443 = vmatpush1.bf16.xpose.msra.mxu0 0
  %444 = vmatprep.subr.bf16.mxu0 0
  %445 = vmatpush1.bf16.xpose.msra.mxu0 0
  %446 = vmatprep.subr.bf16.mxu0 0
  %447 = vmatpush1.bf16.xpose.msra.mxu0 0
  %448 = vmatprep.subr.bf16.mxu0 0
  %449 = vmatpush1.bf16.xpose.msra.mxu0 0
  %450 = vmatprep.subr.bf16.mxu0 0
  %451 = vmatpush1.bf16.xpose.msra.mxu0 0
  %452 = vmatprep.subr.bf16.mxu0 0
  %453 = vmatpush1.bf16.xpose.msra.mxu0 0
  %454 = vmatprep.subr.bf16.mxu0 0
  %455 = vmatpush1.bf16.xpose.msra.mxu0 0
  %456 = vmatprep.subr.bf16.mxu0 0
  %457 = vmatpush1.bf16.xpose.msra.mxu0 0
  %458 = vmatprep.subr.bf16.mxu0 0
  %459 = vmatpush1.bf16.xpose.msra.mxu0 0
  %460 = vmatprep.mubr.bf16.mxu0 0
  %461 = vmatmul.mubr.bf16.gmra.mrb[0].mxu0 %v423
  %v462 = vpop.f32.mrb[0].mxu0
  %v463 = vadd.f32 0.0, %v462
  %v464 = vpop.f32.mrb[0].mxu0
  %v465 = vpop.f32.mrb[0].mxu0
  %v466 = vpop.f32.mrb[0].mxu0
  %467 = vdwg.mxu0
  %468 = vrot.lane.b32.xlu0 %v195, 120
  %v469 = vpop.permute.xlu0 %468
  %470 = vrot.lane.b32.xlu0 %v200, 120
  %v471 = vpop.permute.xlu0 %470
  %v473 = vsel %vm201, %v469, 0
  %v476 = vsel %vm201, %v471, 0
  %478 = vmatprep.subr.bf16.mxu0 0
  %479 = vmatpush1.bf16.xpose.msra.mxu0 %v476
  %480 = vmatprep.subr.bf16.mxu0 0
  %481 = vmatpush1.bf16.xpose.msra.mxu0 0
  %482 = vmatprep.subr.bf16.mxu0 0
  %483 = vmatpush1.bf16.xpose.msra.mxu0 0
  %484 = vmatprep.subr.bf16.mxu0 0
  %485 = vmatpush1.bf16.xpose.msra.mxu0 0
  %486 = vmatprep.subr.bf16.mxu0 0
  %487 = vmatpush1.bf16.xpose.msra.mxu0 0
  %488 = vmatprep.subr.bf16.mxu0 0
  %489 = vmatpush1.bf16.xpose.msra.mxu0 0
  %490 = vmatprep.subr.bf16.mxu0 0
  %491 = vmatpush1.bf16.xpose.msra.mxu0 0
  %492 = vmatprep.subr.bf16.mxu0 0
  %493 = vmatpush1.bf16.xpose.msra.mxu0 0
  %494 = vmatprep.subr.bf16.mxu0 0
  %495 = vmatpush1.bf16.xpose.msra.mxu0 0
  %496 = vmatprep.subr.bf16.mxu0 0
  %497 = vmatpush1.bf16.xpose.msra.mxu0 0
  %498 = vmatprep.subr.bf16.mxu0 0
  %499 = vmatpush1.bf16.xpose.msra.mxu0 0
  %500 = vmatprep.subr.bf16.mxu0 0
  %501 = vmatpush1.bf16.xpose.msra.mxu0 0
  %502 = vmatprep.subr.bf16.mxu0 0
  %503 = vmatpush1.bf16.xpose.msra.mxu0 0
  %504 = vmatprep.subr.bf16.mxu0 0
  %505 = vmatpush1.bf16.xpose.msra.mxu0 0
  %506 = vmatprep.subr.bf16.mxu0 0
  %507 = vmatpush1.bf16.xpose.msra.mxu0 0
  %508 = vmatprep.subr.bf16.mxu0 0
  %509 = vmatpush1.bf16.xpose.msra.mxu0 0
  %510 = vmatprep.mubr.bf16.mxu0 0
  %511 = vmatmul.mubr.bf16.gmra.mrb[0].mxu0 %v473
  %v512 = vpop.f32.mrb[0].mxu0
  %v513 = vadd.f32 0.0, %v512
  %v514 = vpop.f32.mrb[0].mxu0
  %v515 = vpop.f32.mrb[0].mxu0
  %v516 = vpop.f32.mrb[0].mxu0
  %517 = vdwg.mxu0
  %v518 = vmul.f32 %v463, 0.35355338
  %v519 = vmul.f32 %v513, 0.35355338
  %v520 = vsel %vm201, %v518, -inf
  %521 = vmax.xlane.f32.xlu0 %v520
  %v522 = vpop.xlane.xlu0 %521
  %v523 = vsel %vm201, %v519, -inf
  %524 = vmax.xlane.f32.xlu0 %v523
  %v525 = vpop.xlane.xlu0 %524
  %v526 = vsub.f32 %v518, %v522
  %v527 = vsub.f32 %v519, %v525
  %v528 = vmul.f32 %v526, 1.442695
  %v529 = vpow.pop %v528
  %v530 = vmul.f32 %v527, 1.442695
  %v531 = vpow.pop %v530
  %v532 = vsel %vm201, %v529, 0.0
  %533 = vadd.xlane.f32.xlu0 %v532
  %v534 = vpop.xlane.xlu0 %533
  %v535 = vsel %vm201, %v531, 0.0
  %536 = vadd.xlane.f32.xlu0 %v535
  %v537 = vpop.xlane.xlu0 %536
  %v538 = vrcp.pop %v534
  %v539 = vrcp.pop %v537
  %v540 = vmul.f32 %v529, %v538
  %v541 = vmul.f32 %v531, %v539
  %v542 = vpack.c.bf16 %v540, %v540
  %v543 = vpack.c.bf16 %v541, %v541
  %544 = vrot.lane.b32.xlu0 %v199, 88
  %v545 = vpop.permute.xlu0 %544
  %v547 = vsel %vm201, %v542, 0
  %v550 = vsel %vm325, %v545, 0
  %552 = vmatprep.subr.bf16.mxu0 0
  %553 = vmatpush1.bf16.msra.mxu0 %v550
  %554 = vmatprep.subr.bf16.mxu0 0
  %555 = vmatpush1.bf16.msra.mxu0 0
  %556 = vmatprep.subr.bf16.mxu0 0
  %557 = vmatpush1.bf16.msra.mxu0 0
  %558 = vmatprep.subr.bf16.mxu0 0
  %559 = vmatpush1.bf16.msra.mxu0 0
  %560 = vmatprep.subr.bf16.mxu0 0
  %561 = vmatpush1.bf16.msra.mxu0 0
  %562 = vmatprep.subr.bf16.mxu0 0
  %563 = vmatpush1.bf16.msra.mxu0 0
  %564 = vmatprep.subr.bf16.mxu0 0
  %565 = vmatpush1.bf16.msra.mxu0 0
  %566 = vmatprep.subr.bf16.mxu0 0
  %567 = vmatpush1.bf16.msra.mxu0 0
  %568 = vmatprep.subr.bf16.mxu0 0
  %569 = vmatpush1.bf16.msra.mxu0 0
  %570 = vmatprep.subr.bf16.mxu0 0
  %571 = vmatpush1.bf16.msra.mxu0 0
  %572 = vmatprep.subr.bf16.mxu0 0
  %573 = vmatpush1.bf16.msra.mxu0 0
  %574 = vmatprep.subr.bf16.mxu0 0
  %575 = vmatpush1.bf16.msra.mxu0 0
  %576 = vmatprep.subr.bf16.mxu0 0
  %577 = vmatpush1.bf16.msra.mxu0 0
  %578 = vmatprep.subr.bf16.mxu0 0
  %579 = vmatpush1.bf16.msra.mxu0 0
  %580 = vmatprep.subr.bf16.mxu0 0
  %581 = vmatpush1.bf16.msra.mxu0 0
  %582 = vmatprep.subr.bf16.mxu0 0
  %583 = vmatpush1.bf16.msra.mxu0 0
  %584 = vmatprep.mubr.bf16.mxu0 0
  %585 = vmatmul.mubr.bf16.gmra.mrb[0].mxu0 %v547
  %v586 = vpop.f32.mrb[0].mxu0
  %v587 = vadd.f32 0.0, %v586
  %v588 = vpop.f32.mrb[0].mxu0
  %v589 = vpop.f32.mrb[0].mxu0
  %v590 = vpop.f32.mrb[0].mxu0
  %591 = vdwg.mxu0
  %592 = vrot.lane.b32.xlu0 %v200, 88
  %v593 = vpop.permute.xlu0 %592
  %v595 = vsel %vm201, %v543, 0
  %v598 = vsel %vm325, %v593, 0
  %600 = vmatprep.subr.bf16.mxu0 0
  %601 = vmatpush1.bf16.msra.mxu0 %v598
  %602 = vmatprep.subr.bf16.mxu0 0
  %603 = vmatpush1.bf16.msra.mxu0 0
  %604 = vmatprep.subr.bf16.mxu0 0
  %605 = vmatpush1.bf16.msra.mxu0 0
  %606 = vmatprep.subr.bf16.mxu0 0
  %607 = vmatpush1.bf16.msra.mxu0 0
  %608 = vmatprep.subr.bf16.mxu0 0
  %609 = vmatpush1.bf16.msra.mxu0 0
  %610 = vmatprep.subr.bf16.mxu0 0
  %611 = vmatpush1.bf16.msra.mxu0 0
  %612 = vmatprep.subr.bf16.mxu0 0
  %613 = vmatpush1.bf16.msra.mxu0 0
  %614 = vmatprep.subr.bf16.mxu0 0
  %615 = vmatpush1.bf16.msra.mxu0 0
  %616 = vmatprep.subr.bf16.mxu0 0
  %617 = vmatpush1.bf16.msra.mxu0 0
  %618 = vmatprep.subr.bf16.mxu0 0
  %619 = vmatpush1.bf16.msra.mxu0 0
  %620 = vmatprep.subr.bf16.mxu0 0
  %621 = vmatpush1.bf16.msra.mxu0 0
  %622 = vmatprep.subr.bf16.mxu0 0
  %623 = vmatpush1.bf16.msra.mxu0 0
  %624 = vmatprep.subr.bf16.mxu0 0
  %625 = vmatpush1.bf16.msra.mxu0 0
  %626 = vmatprep.subr.bf16.mxu0 0
  %627 = vmatpush1.bf16.msra.mxu0 0
  %628 = vmatprep.subr.bf16.mxu0 0
  %629 = vmatpush1.bf16.msra.mxu0 0
  %630 = vmatprep.subr.bf16.mxu0 0
  %631 = vmatpush1.bf16.msra.mxu0 0
  %632 = vmatprep.mubr.bf16.mxu0 0
  %633 = vmatmul.mubr.bf16.gmra.mrb[0].mxu0 %v595
  %v634 = vpop.f32.mrb[0].mxu0
  %v635 = vadd.f32 0.0, %v634
  %v636 = vpop.f32.mrb[0].mxu0
  %v637 = vpop.f32.mrb[0].mxu0
  %v638 = vpop.f32.mrb[0].mxu0
  %639 = vdwg.mxu0
  %v640 = vpack.c.bf16 %v635, %v587
  %v642 = vsel %vm201, %v640, 0
  %v645 = vsel %vm325, %v188, 0
  %647 = vmatprep.subr.bf16.mxu0 0
  %648 = vmatpush1.bf16.msra.mxu0 %v645
  %649 = vmatprep.subr.bf16.mxu0 0
  %650 = vmatpush1.bf16.msra.mxu0 0
  %651 = vmatprep.subr.bf16.mxu0 0
  %652 = vmatpush1.bf16.msra.mxu0 0
  %653 = vmatprep.subr.bf16.mxu0 0
  %654 = vmatpush1.bf16.msra.mxu0 0
  %655 = vmatprep.subr.bf16.mxu0 0
  %656 = vmatpush1.bf16.msra.mxu0 0
  %657 = vmatprep.subr.bf16.mxu0 0
  %658 = vmatpush1.bf16.msra.mxu0 0
  %659 = vmatprep.subr.bf16.mxu0 0
  %660 = vmatpush1.bf16.msra.mxu0 0
  %661 = vmatprep.subr.bf16.mxu0 0
  %662 = vmatpush1.bf16.msra.mxu0 0
  %663 = vmatprep.subr.bf16.mxu0 0
  %664 = vmatpush1.bf16.msra.mxu0 0
  %665 = vmatprep.subr.bf16.mxu0 0
  %666 = vmatpush1.bf16.msra.mxu0 0
  %667 = vmatprep.subr.bf16.mxu0 0
  %668 = vmatpush1.bf16.msra.mxu0 0
  %669 = vmatprep.subr.bf16.mxu0 0
  %670 = vmatpush1.bf16.msra.mxu0 0
  %671 = vmatprep.subr.bf16.mxu0 0
  %672 = vmatpush1.bf16.msra.mxu0 0
  %673 = vmatprep.subr.bf16.mxu0 0
  %674 = vmatpush1.bf16.msra.mxu0 0
  %675 = vmatprep.subr.bf16.mxu0 0
  %676 = vmatpush1.bf16.msra.mxu0 0
  %677 = vmatprep.subr.bf16.mxu0 0
  %678 = vmatpush1.bf16.msra.mxu0 0
  %679 = vmatprep.mubr.bf16.mxu0 0
  %680 = vmatmul.mubr.bf16.gmra.mrb[0].mxu0 %v642
  %v681 = vpop.f32.mrb[0].mxu0
  %v682 = vadd.f32 0.0, %v681
  %v683 = vpop.f32.mrb[0].mxu0
  %v684 = vpop.f32.mrb[0].mxu0
  %v685 = vadd.f32 0.0, %v684
  %v686 = vpop.f32.mrb[0].mxu0
  %687 = vdwg.mxu0
  %v689 = vsel %vm201, %v417, 0
  %v692 = vsel %vm325, %v187, 0
  %694 = vmatprep.subr.bf16.mxu0 0
  %695 = vmatpush1.bf16.msra.mxu0 %v692
  %696 = vmatprep.subr.bf16.mxu0 0
  %697 = vmatpush1.bf16.msra.mxu0 0
  %698 = vmatprep.subr.bf16.mxu0 0
  %699 = vmatpush1.bf16.msra.mxu0 0
  %700 = vmatprep.subr.bf16.mxu0 0
  %701 = vmatpush1.bf16.msra.mxu0 0
  %702 = vmatprep.subr.bf16.mxu0 0
  %703 = vmatpush1.bf16.msra.mxu0 0
  %704 = vmatprep.subr.bf16.mxu0 0
  %705 = vmatpush1.bf16.msra.mxu0 0
  %706 = vmatprep.subr.bf16.mxu0 0
  %707 = vmatpush1.bf16.msra.mxu0 0
  %708 = vmatprep.subr.bf16.mxu0 0
  %709 = vmatpush1.bf16.msra.mxu0 0
  %710 = vmatprep.subr.bf16.mxu0 0
  %711 = vmatpush1.bf16.msra.mxu0 0
  %712 = vmatprep.subr.bf16.mxu0 0
  %713 = vmatpush1.bf16.msra.mxu0 0
  %714 = vmatprep.subr.bf16.mxu0 0
  %715 = vmatpush1.bf16.msra.mxu0 0
  %716 = vmatprep.subr.bf16.mxu0 0
  %717 = vmatpush1.bf16.msra.mxu0 0
  %718 = vmatprep.subr.bf16.mxu0 0
  %719 = vmatpush1.bf16.msra.mxu0 0
  %720 = vmatprep.subr.bf16.mxu0 0
  %721 = vmatpush1.bf16.msra.mxu0 0
  %722 = vmatprep.subr.bf16.mxu0 0
  %723 = vmatpush1.bf16.msra.mxu0 0
  %724 = vmatprep.subr.bf16.mxu0 0
  %725 = vmatpush1.bf16.msra.mxu0 0
  %726 = vmatprep.mubr.bf16.mxu0 0
  %727 = vmatmul.mubr.bf16.gmra.mrb[0].mxu0 %v689
  %v728 = vpop.f32.mrb[0].mxu0
  %v729 = vadd.f32 %v682, %v728
  %v730 = vpop.f32.mrb[0].mxu0
  %v731 = vpop.f32.mrb[0].mxu0
  %v732 = vadd.f32 %v685, %v731
  %v733 = vpop.f32.mrb[0].mxu0
  %734 = vdwg.mxu0
  %735 = vrot.lane.b32.xlu0 %v194, 112
  %v736 = vpop.permute.xlu0 %735
  %737 = vrot.lane.b32.xlu0 %v199, 112
  %v738 = vpop.permute.xlu0 %737
  %v740 = vsel %vm201, %v736, 0
  %v743 = vsel %vm201, %v738, 0
  %745 = vmatprep.subr.bf16.mxu0 0
  %746 = vmatpush1.bf16.xpose.msra.mxu0 %v743
  %747 = vmatprep.subr.bf16.mxu0 0
  %748 = vmatpush1.bf16.xpose.msra.mxu0 0
  %749 = vmatprep.subr.bf16.mxu0 0
  %750 = vmatpush1.bf16.xpose.msra.mxu0 0
  %751 = vmatprep.subr.bf16.mxu0 0
  %752 = vmatpush1.bf16.xpose.msra.mxu0 0
  %753 = vmatprep.subr.bf16.mxu0 0
  %754 = vmatpush1.bf16.xpose.msra.mxu0 0
  %755 = vmatprep.subr.bf16.mxu0 0
  %756 = vmatpush1.bf16.xpose.msra.mxu0 0
  %757 = vmatprep.subr.bf16.mxu0 0
  %758 = vmatpush1.bf16.xpose.msra.mxu0 0
  %759 = vmatprep.subr.bf16.mxu0 0
  %760 = vmatpush1.bf16.xpose.msra.mxu0 0
  %761 = vmatprep.subr.bf16.mxu0 0
  %762 = vmatpush1.bf16.xpose.msra.mxu0 0
  %763 = vmatprep.subr.bf16.mxu0 0
  %764 = vmatpush1.bf16.xpose.msra.mxu0 0
  %765 = vmatprep.subr.bf16.mxu0 0
  %766 = vmatpush1.bf16.xpose.msra.mxu0 0
  %767 = vmatprep.subr.bf16.mxu0 0
  %768 = vmatpush1.bf16.xpose.msra.mxu0 0
  %769 = vmatprep.subr.bf16.mxu0 0
  %770 = vmatpush1.bf16.xpose.msra.mxu0 0
  %771 = vmatprep.subr.bf16.mxu0 0
  %772 = vmatpush1.bf16.xpose.msra.mxu0 0
  %773 = vmatprep.subr.bf16.mxu0 0
  %774 = vmatpush1.bf16.xpose.msra.mxu0 0
  %775 = vmatprep.subr.bf16.mxu0 0
  %776 = vmatpush1.bf16.xpose.msra.mxu0 0
  %777 = vmatprep.mubr.bf16.mxu0 0
  %778 = vmatmul.mubr.bf16.gmra.mrb[0].mxu0 %v740
  %v779 = vpop.f32.mrb[0].mxu0
  %v780 = vadd.f32 0.0, %v779
  %v781 = vpop.f32.mrb[0].mxu0
  %v782 = vpop.f32.mrb[0].mxu0
  %v783 = vpop.f32.mrb[0].mxu0
  %784 = vdwg.mxu0
  %785 = vrot.lane.b32.xlu0 %v195, 112
  %v786 = vpop.permute.xlu0 %785
  %787 = vrot.lane.b32.xlu0 %v200, 112
  %v788 = vpop.permute.xlu0 %787
  %v790 = vsel %vm201, %v786, 0
  %v793 = vsel %vm201, %v788, 0
  %795 = vmatprep.subr.bf16.mxu0 0
  %796 = vmatpush1.bf16.xpose.msra.mxu0 %v793
  %797 = vmatprep.subr.bf16.mxu0 0
  %798 = vmatpush1.bf16.xpose.msra.mxu0 0
  %799 = vmatprep.subr.bf16.mxu0 0
  %800 = vmatpush1.bf16.xpose.msra.mxu0 0
  %801 = vmatprep.subr.bf16.mxu0 0
  %802 = vmatpush1.bf16.xpose.msra.mxu0 0
  %803 = vmatprep.subr.bf16.mxu0 0
  %804 = vmatpush1.bf16.xpose.msra.mxu0 0
  %805 = vmatprep.subr.bf16.mxu0 0
  %806 = vmatpush1.bf16.xpose.msra.mxu0 0
  %807 = vmatprep.subr.bf16.mxu0 0
  %808 = vmatpush1.bf16.xpose.msra.mxu0 0
  %809 = vmatprep.subr.bf16.mxu0 0
  %810 = vmatpush1.bf16.xpose.msra.mxu0 0
  %811 = vmatprep.subr.bf16.mxu0 0
  %812 = vmatpush1.bf16.xpose.msra.mxu0 0
  %813 = vmatprep.subr.bf16.mxu0 0
  %814 = vmatpush1.bf16.xpose.msra.mxu0 0
  %815 = vmatprep.subr.bf16.mxu0 0
  %816 = vmatpush1.bf16.xpose.msra.mxu0 0
  %817 = vmatprep.subr.bf16.mxu0 0
  %818 = vmatpush1.bf16.xpose.msra.mxu0 0
  %819 = vmatprep.subr.bf16.mxu0 0
  %820 = vmatpush1.bf16.xpose.msra.mxu0 0
  %821 = vmatprep.subr.bf16.mxu0 0
  %822 = vmatpush1.bf16.xpose.msra.mxu0 0
  %823 = vmatprep.subr.bf16.mxu0 0
  %824 = vmatpush1.bf16.xpose.msra.mxu0 0
  %825 = vmatprep.subr.bf16.mxu0 0
  %826 = vmatpush1.bf16.xpose.msra.mxu0 0
  %827 = vmatprep.mubr.bf16.mxu0 0
  %828 = vmatmul.mubr.bf16.gmra.mrb[0].mxu0 %v790
  %v829 = vpop.f32.mrb[0].mxu0
  %v830 = vadd.f32 0.0, %v829
  %v831 = vpop.f32.mrb[0].mxu0
  %v832 = vpop.f32.mrb[0].mxu0
  %v833 = vpop.f32.mrb[0].mxu0
  %834 = vdwg.mxu0
  %v835 = vmul.f32 %v780, 0.35355338
  %v836 = vmul.f32 %v830, 0.35355338
  %v837 = vsel %vm201, %v835, -inf
  %838 = vmax.xlane.f32.xlu0 %v837
  %v839 = vpop.xlane.xlu0 %838
  %v840 = vsel %vm201, %v836, -inf
  %841 = vmax.xlane.f32.xlu0 %v840
  %v842 = vpop.xlane.xlu0 %841
  %v843 = vsub.f32 %v835, %v839
  %v844 = vsub.f32 %v836, %v842
  %v845 = vmul.f32 %v843, 1.442695
  %v846 = vpow.pop %v845
  %v847 = vmul.f32 %v844, 1.442695
  %v848 = vpow.pop %v847
  %v849 = vsel %vm201, %v846, 0.0
  %850 = vadd.xlane.f32.xlu0 %v849
  %v851 = vpop.xlane.xlu0 %850
  %v852 = vsel %vm201, %v848, 0.0
  %853 = vadd.xlane.f32.xlu0 %v852
  %v854 = vpop.xlane.xlu0 %853
  %v855 = vrcp.pop %v851
  %v856 = vrcp.pop %v854
  %v857 = vmul.f32 %v846, %v855
  %v858 = vmul.f32 %v848, %v856
  %v859 = vpack.c.bf16 %v857, %v857
  %v860 = vpack.c.bf16 %v858, %v858
  %861 = vrot.lane.b32.xlu0 %v199, 80
  %v862 = vpop.permute.xlu0 %861
  %v864 = vsel %vm201, %v859, 0
  %v867 = vsel %vm325, %v862, 0
  %869 = vmatprep.subr.bf16.mxu0 0
  %870 = vmatpush1.bf16.msra.mxu0 %v867
  %871 = vmatprep.subr.bf16.mxu0 0
  %872 = vmatpush1.bf16.msra.mxu0 0
  %873 = vmatprep.subr.bf16.mxu0 0
  %874 = vmatpush1.bf16.msra.mxu0 0
  %875 = vmatprep.subr.bf16.mxu0 0
  %876 = vmatpush1.bf16.msra.mxu0 0
  %877 = vmatprep.subr.bf16.mxu0 0
  %878 = vmatpush1.bf16.msra.mxu0 0
  %879 = vmatprep.subr.bf16.mxu0 0
  %880 = vmatpush1.bf16.msra.mxu0 0
  %881 = vmatprep.subr.bf16.mxu0 0
  %882 = vmatpush1.bf16.msra.mxu0 0
  %883 = vmatprep.subr.bf16.mxu0 0
  %884 = vmatpush1.bf16.msra.mxu0 0
  %885 = vmatprep.subr.bf16.mxu0 0
  %886 = vmatpush1.bf16.msra.mxu0 0
  %887 = vmatprep.subr.bf16.mxu0 0
  %888 = vmatpush1.bf16.msra.mxu0 0
  %889 = vmatprep.subr.bf16.mxu0 0
  %890 = vmatpush1.bf16.msra.mxu0 0
  %891 = vmatprep.subr.bf16.mxu0 0
  %892 = vmatpush1.bf16.msra.mxu0 0
  %893 = vmatprep.subr.bf16.mxu0 0
  %894 = vmatpush1.bf16.msra.mxu0 0
  %895 = vmatprep.subr.bf16.mxu0 0
  %896 = vmatpush1.bf16.msra.mxu0 0
  %897 = vmatprep.subr.bf16.mxu0 0
  %898 = vmatpush1.bf16.msra.mxu0 0
  %899 = vmatprep.subr.bf16.mxu0 0
  %900 = vmatpush1.bf16.msra.mxu0 0
  %901 = vmatprep.mubr.bf16.mxu0 0
  %902 = vmatmul.mubr.bf16.gmra.mrb[0].mxu0 %v864
  %v903 = vpop.f32.mrb[0].mxu0
  %v904 = vadd.f32 0.0, %v903
  %v905 = vpop.f32.mrb[0].mxu0
  %v906 = vpop.f32.mrb[0].mxu0
  %v907 = vpop.f32.mrb[0].mxu0
  %908 = vdwg.mxu0
  %909 = vrot.lane.b32.xlu0 %v200, 80
  %v910 = vpop.permute.xlu0 %909
  %v912 = vsel %vm201, %v860, 0
  %v915 = vsel %vm325, %v910, 0
  %917 = vmatprep.subr.bf16.mxu0 0
  %918 = vmatpush1.bf16.msra.mxu0 %v915
  %919 = vmatprep.subr.bf16.mxu0 0
  %920 = vmatpush1.bf16.msra.mxu0 0
  %921 = vmatprep.subr.bf16.mxu0 0
  %922 = vmatpush1.bf16.msra.mxu0 0
  %923 = vmatprep.subr.bf16.mxu0 0
  %924 = vmatpush1.bf16.msra.mxu0 0
  %925 = vmatprep.subr.bf16.mxu0 0
  %926 = vmatpush1.bf16.msra.mxu0 0
  %927 = vmatprep.subr.bf16.mxu0 0
  %928 = vmatpush1.bf16.msra.mxu0 0
  %929 = vmatprep.subr.bf16.mxu0 0
  %930 = vmatpush1.bf16.msra.mxu0 0
  %931 = vmatprep.subr.bf16.mxu0 0
  %932 = vmatpush1.bf16.msra.mxu0 0
  %933 = vmatprep.subr.bf16.mxu0 0
  %934 = vmatpush1.bf16.msra.mxu0 0
  %935 = vmatprep.subr.bf16.mxu0 0
  %936 = vmatpush1.bf16.msra.mxu0 0
  %937 = vmatprep.subr.bf16.mxu0 0
  %938 = vmatpush1.bf16.msra.mxu0 0
  %939 = vmatprep.subr.bf16.mxu0 0
  %940 = vmatpush1.bf16.msra.mxu0 0
  %941 = vmatprep.subr.bf16.mxu0 0
  %942 = vmatpush1.bf16.msra.mxu0 0
  %943 = vmatprep.subr.bf16.mxu0 0
  %944 = vmatpush1.bf16.msra.mxu0 0
  %945 = vmatprep.subr.bf16.mxu0 0
  %946 = vmatpush1.bf16.msra.mxu0 0
  %947 = vmatprep.subr.bf16.mxu0 0
  %948 = vmatpush1.bf16.msra.mxu0 0
  %949 = vmatprep.mubr.bf16.mxu0 0
  %950 = vmatmul.mubr.bf16.gmra.mrb[0].mxu0 %v912
  %v951 = vpop.f32.mrb[0].mxu0
  %v952 = vadd.f32 0.0, %v951
  %v953 = vpop.f32.mrb[0].mxu0
  %v954 = vpop.f32.mrb[0].mxu0
  %v955 = vpop.f32.mrb[0].mxu0
  %956 = vdwg.mxu0
  %v957 = vpack.c.bf16 %v952, %v904
  %v959 = vsel %vm201, %v957, 0
  %v962 = vsel %vm325, %v189, 0
  %964 = vmatprep.subr.bf16.mxu0 0
  %965 = vmatpush1.bf16.msra.mxu0 %v962
  %966 = vmatprep.subr.bf16.mxu0 0
  %967 = vmatpush1.bf16.msra.mxu0 0
  %968 = vmatprep.subr.bf16.mxu0 0
  %969 = vmatpush1.bf16.msra.mxu0 0
  %970 = vmatprep.subr.bf16.mxu0 0
  %971 = vmatpush1.bf16.msra.mxu0 0
  %972 = vmatprep.subr.bf16.mxu0 0
  %973 = vmatpush1.bf16.msra.mxu0 0
  %974 = vmatprep.subr.bf16.mxu0 0
  %975 = vmatpush1.bf16.msra.mxu0 0
  %976 = vmatprep.subr.bf16.mxu0 0
  %977 = vmatpush1.bf16.msra.mxu0 0
  %978 = vmatprep.subr.bf16.mxu0 0
  %979 = vmatpush1.bf16.msra.mxu0 0
  %980 = vmatprep.subr.bf16.mxu0 0
  %981 = vmatpush1.bf16.msra.mxu0 0
  %982 = vmatprep.subr.bf16.mxu0 0
  %983 = vmatpush1.bf16.msra.mxu0 0
  %984 = vmatprep.subr.bf16.mxu0 0
  %985 = vmatpush1.bf16.msra.mxu0 0
  %986 = vmatprep.subr.bf16.mxu0 0
  %987 = vmatpush1.bf16.msra.mxu0 0
  %988 = vmatprep.subr.bf16.mxu0 0
  %989 = vmatpush1.bf16.msra.mxu0 0
  %990 = vmatprep.subr.bf16.mxu0 0
  %991 = vmatpush1.bf16.msra.mxu0 0
  %992 = vmatprep.subr.bf16.mxu0 0
  %993 = vmatpush1.bf16.msra.mxu0 0
  %994 = vmatprep.subr.bf16.mxu0 0
  %995 = vmatpush1.bf16.msra.mxu0 0
  %996 = vmatprep.mubr.bf16.mxu0 0
  %997 = vmatmul.mubr.bf16.gmra.mrb[0].mxu0 %v959
  %v998 = vpop.f32.mrb[0].mxu0
  %v999 = vadd.f32 0.0, %v998
  %v1000 = vpop.f32.mrb[0].mxu0
  %v1001 = vpop.f32.mrb[0].mxu0
  %v1002 = vadd.f32 0.0, %v1001
  %v1003 = vpop.f32.mrb[0].mxu0
  %1004 = vdwg.mxu0
  %v1005 = vadd.f32 %v729, %v999
  %v1006 = vadd.f32 %v732, %v1002
  %1007 = vrot.lane.b32.xlu0 %v194, 104
  %v1008 = vpop.permute.xlu0 %1007
  %1009 = vrot.lane.b32.xlu0 %v199, 104
  %v1010 = vpop.permute.xlu0 %1009
  %v1012 = vsel %vm201, %v1008, 0
  %v1015 = vsel %vm201, %v1010, 0
  %1017 = vmatprep.subr.bf16.mxu0 0
  %1018 = vmatpush1.bf16.xpose.msra.mxu0 %v1015
  %1019 = vmatprep.subr.bf16.mxu0 0
  %1020 = vmatpush1.bf16.xpose.msra.mxu0 0
  %1021 = vmatprep.subr.bf16.mxu0 0
  %1022 = vmatpush1.bf16.xpose.msra.mxu0 0
  %1023 = vmatprep.subr.bf16.mxu0 0
  %1024 = vmatpush1.bf16.xpose.msra.mxu0 0
  %1025 = vmatprep.subr.bf16.mxu0 0
  %1026 = vmatpush1.bf16.xpose.msra.mxu0 0
  %1027 = vmatprep.subr.bf16.mxu0 0
  %1028 = vmatpush1.bf16.xpose.msra.mxu0 0
  %1029 = vmatprep.subr.bf16.mxu0 0
  %1030 = vmatpush1.bf16.xpose.msra.mxu0 0
  %1031 = vmatprep.subr.bf16.mxu0 0
  %1032 = vmatpush1.bf16.xpose.msra.mxu0 0
  %1033 = vmatprep.subr.bf16.mxu0 0
  %1034 = vmatpush1.bf16.xpose.msra.mxu0 0
  %1035 = vmatprep.subr.bf16.mxu0 0
  %1036 = vmatpush1.bf16.xpose.msra.mxu0 0
  %1037 = vmatprep.subr.bf16.mxu0 0
  %1038 = vmatpush1.bf16.xpose.msra.mxu0 0
  %1039 = vmatprep.subr.bf16.mxu0 0
  %1040 = vmatpush1.bf16.xpose.msra.mxu0 0
  %1041 = vmatprep.subr.bf16.mxu0 0
  %1042 = vmatpush1.bf16.xpose.msra.mxu0 0
  %1043 = vmatprep.subr.bf16.mxu0 0
  %1044 = vmatpush1.bf16.xpose.msra.mxu0 0
  %1045 = vmatprep.subr.bf16.mxu0 0
  %1046 = vmatpush1.bf16.xpose.msra.mxu0 0
  %1047 = vmatprep.subr.bf16.mxu0 0
  %1048 = vmatpush1.bf16.xpose.msra.mxu0 0
  %1049 = vmatprep.mubr.bf16.mxu0 0
  %1050 = vmatmul.mubr.bf16.gmra.mrb[0].mxu0 %v1012
  %v1051 = vpop.f32.mrb[0].mxu0
  %v1052 = vadd.f32 0.0, %v1051
  %v1053 = vpop.f32.mrb[0].mxu0
  %v1054 = vpop.f32.mrb[0].mxu0
  %v1055 = vpop.f32.mrb[0].mxu0
  %1056 = vdwg.mxu0
  %1057 = vrot.lane.b32.xlu0 %v195, 104
  %v1058 = vpop.permute.xlu0 %1057
  %1059 = vrot.lane.b32.xlu0 %v200, 104
  %v1060 = vpop.permute.xlu0 %1059
  %v1062 = vsel %vm201, %v1058, 0
  %v1065 = vsel %vm201, %v1060, 0
  %1067 = vmatprep.subr.bf16.mxu0 0
  %1068 = vmatpush1.bf16.xpose.msra.mxu0 %v1065
  %1069 = vmatprep.subr.bf16.mxu0 0
  %1070 = vmatpush1.bf16.xpose.msra.mxu0 0
  %1071 = vmatprep.subr.bf16.mxu0 0
  %1072 = vmatpush1.bf16.xpose.msra.mxu0 0
  %1073 = vmatprep.subr.bf16.mxu0 0
  %1074 = vmatpush1.bf16.xpose.msra.mxu0 0
  %1075 = vmatprep.subr.bf16.mxu0 0
  %1076 = vmatpush1.bf16.xpose.msra.mxu0 0
  %1077 = vmatprep.subr.bf16.mxu0 0
  %1078 = vmatpush1.bf16.xpose.msra.mxu0 0
  %1079 = vmatprep.subr.bf16.mxu0 0
  %1080 = vmatpush1.bf16.xpose.msra.mxu0 0
  %1081 = vmatprep.subr.bf16.mxu0 0
  %1082 = vmatpush1.bf16.xpose.msra.mxu0 0
  %1083 = vmatprep.subr.bf16.mxu0 0
  %1084 = vmatpush1.bf16.xpose.msra.mxu0 0
  %1085 = vmatprep.subr.bf16.mxu0 0
  %1086 = vmatpush1.bf16.xpose.msra.mxu0 0
  %1087 = vmatprep.subr.bf16.mxu0 0
  %1088 = vmatpush1.bf16.xpose.msra.mxu0 0
  %1089 = vmatprep.subr.bf16.mxu0 0
  %1090 = vmatpush1.bf16.xpose.msra.mxu0 0
  %1091 = vmatprep.subr.bf16.mxu0 0
  %1092 = vmatpush1.bf16.xpose.msra.mxu0 0
  %1093 = vmatprep.subr.bf16.mxu0 0
  %1094 = vmatpush1.bf16.xpose.msra.mxu0 0
  %1095 = vmatprep.subr.bf16.mxu0 0
  %1096 = vmatpush1.bf16.xpose.msra.mxu0 0
  %1097 = vmatprep.subr.bf16.mxu0 0
  %1098 = vmatpush1.bf16.xpose.msra.mxu0 0
  %1099 = vmatprep.mubr.bf16.mxu0 0
  %1100 = vmatmul.mubr.bf16.gmra.mrb[0].mxu0 %v1062
  %v1101 = vpop.f32.mrb[0].mxu0
  %v1102 = vadd.f32 0.0, %v1101
  %v1103 = vpop.f32.mrb[0].mxu0
  %v1104 = vpop.f32.mrb[0].mxu0
  %v1105 = vpop.f32.mrb[0].mxu0
  %1106 = vdwg.mxu0
  %v1107 = vmul.f32 %v1052, 0.35355338
  %v1108 = vmul.f32 %v1102, 0.35355338
  %v1109 = vsel %vm201, %v1107, -inf
  %1110 = vmax.xlane.f32.xlu0 %v1109
  %v1111 = vpop.xlane.xlu0 %1110
  %v1112 = vsel %vm201, %v1108, -inf
  %1113 = vmax.xlane.f32.xlu0 %v1112
  %v1114 = vpop.xlane.xlu0 %1113
  %v1115 = vsub.f32 %v1107, %v1111
  %v1116 = vsub.f32 %v1108, %v1114
  %v1117 = vmul.f32 %v1115, 1.442695
  %v1118 = vpow.pop %v1117
  %v1119 = vmul.f32 %v1116, 1.442695
  %v1120 = vpow.pop %v1119
  %v1121 = vsel %vm201, %v1118, 0.0
  %1122 = vadd.xlane.f32.xlu0 %v1121
  %v1123 = vpop.xlane.xlu0 %1122
  %v1124 = vsel %vm201, %v1120, 0.0
  %1125 = vadd.xlane.f32.xlu0 %v1124
  %v1126 = vpop.xlane.xlu0 %1125
  %v1127 = vrcp.pop %v1123
  %v1128 = vrcp.pop %v1126
  %v1129 = vmul.f32 %v1118, %v1127
  %v1130 = vmul.f32 %v1120, %v1128
  %v1131 = vpack.c.bf16 %v1129, %v1129
  %v1132 = vpack.c.bf16 %v1130, %v1130
  %1133 = vrot.lane.b32.xlu0 %v199, 72
  %v1134 = vpop.permute.xlu0 %1133
  %v1136 = vsel %vm201, %v1131, 0
  %v1139 = vsel %vm325, %v1134, 0
  %1141 = vmatprep.subr.bf16.mxu0 0
  %1142 = vmatpush1.bf16.msra.mxu0 %v1139
  %1143 = vmatprep.subr.bf16.mxu0 0
  %1144 = vmatpush1.bf16.msra.mxu0 0
  %1145 = vmatprep.subr.bf16.mxu0 0
  %1146 = vmatpush1.bf16.msra.mxu0 0
  %1147 = vmatprep.subr.bf16.mxu0 0
  %1148 = vmatpush1.bf16.msra.mxu0 0
  %1149 = vmatprep.subr.bf16.mxu0 0
  %1150 = vmatpush1.bf16.msra.mxu0 0
  %1151 = vmatprep.subr.bf16.mxu0 0
  %1152 = vmatpush1.bf16.msra.mxu0 0
  %1153 = vmatprep.subr.bf16.mxu0 0
  %1154 = vmatpush1.bf16.msra.mxu0 0
  %1155 = vmatprep.subr.bf16.mxu0 0
  %1156 = vmatpush1.bf16.msra.mxu0 0
  %1157 = vmatprep.subr.bf16.mxu0 0
  %1158 = vmatpush1.bf16.msra.mxu0 0
  %1159 = vmatprep.subr.bf16.mxu0 0
  %1160 = vmatpush1.bf16.msra.mxu0 0
  %1161 = vmatprep.subr.bf16.mxu0 0
  %1162 = vmatpush1.bf16.msra.mxu0 0
  %1163 = vmatprep.subr.bf16.mxu0 0
  %1164 = vmatpush1.bf16.msra.mxu0 0
  %1165 = vmatprep.subr.bf16.mxu0 0
  %1166 = vmatpush1.bf16.msra.mxu0 0
  %1167 = vmatprep.subr.bf16.mxu0 0
  %1168 = vmatpush1.bf16.msra.mxu0 0
  %1169 = vmatprep.subr.bf16.mxu0 0
  %1170 = vmatpush1.bf16.msra.mxu0 0
  %1171 = vmatprep.subr.bf16.mxu0 0
  %1172 = vmatpush1.bf16.msra.mxu0 0
  %1173 = vmatprep.mubr.bf16.mxu0 0
  %1174 = vmatmul.mubr.bf16.gmra.mrb[0].mxu0 %v1136
  %v1175 = vpop.f32.mrb[0].mxu0
  %v1176 = vadd.f32 0.0, %v1175
  %v1177 = vpop.f32.mrb[0].mxu0
  %v1178 = vpop.f32.mrb[0].mxu0
  %v1179 = vpop.f32.mrb[0].mxu0
  %1180 = vdwg.mxu0
  %1181 = vrot.lane.b32.xlu0 %v200, 72
  %v1182 = vpop.permute.xlu0 %1181
  %v1184 = vsel %vm201, %v1132, 0
  %v1187 = vsel %vm325, %v1182, 0
  %1189 = vmatprep.subr.bf16.mxu0 0
  %1190 = vmatpush1.bf16.msra.mxu0 %v1187
  %1191 = vmatprep.subr.bf16.mxu0 0
  %1192 = vmatpush1.bf16.msra.mxu0 0
  %1193 = vmatprep.subr.bf16.mxu0 0
  %1194 = vmatpush1.bf16.msra.mxu0 0
  %1195 = vmatprep.subr.bf16.mxu0 0
  %1196 = vmatpush1.bf16.msra.mxu0 0
  %1197 = vmatprep.subr.bf16.mxu0 0
  %1198 = vmatpush1.bf16.msra.mxu0 0
  %1199 = vmatprep.subr.bf16.mxu0 0
  %1200 = vmatpush1.bf16.msra.mxu0 0
  %1201 = vmatprep.subr.bf16.mxu0 0
  %1202 = vmatpush1.bf16.msra.mxu0 0
  %1203 = vmatprep.subr.bf16.mxu0 0
  %1204 = vmatpush1.bf16.msra.mxu0 0
  %1205 = vmatprep.subr.bf16.mxu0 0
  %1206 = vmatpush1.bf16.msra.mxu0 0
  %1207 = vmatprep.subr.bf16.mxu0 0
  %1208 = vmatpush1.bf16.msra.mxu0 0
  %1209 = vmatprep.subr.bf16.mxu0 0
  %1210 = vmatpush1.bf16.msra.mxu0 0
  %1211 = vmatprep.subr.bf16.mxu0 0
  %1212 = vmatpush1.bf16.msra.mxu0 0
  %1213 = vmatprep.subr.bf16.mxu0 0
  %1214 = vmatpush1.bf16.msra.mxu0 0
  %1215 = vmatprep.subr.bf16.mxu0 0
  %1216 = vmatpush1.bf16.msra.mxu0 0
  %1217 = vmatprep.subr.bf16.mxu0 0
  %1218 = vmatpush1.bf16.msra.mxu0 0
  %1219 = vmatprep.subr.bf16.mxu0 0
  %1220 = vmatpush1.bf16.msra.mxu0 0
  %1221 = vmatprep.mubr.bf16.mxu0 0
  %1222 = vmatmul.mubr.bf16.gmra.mrb[0].mxu0 %v1184
  %v1223 = vpop.f32.mrb[0].mxu0
  %v1224 = vadd.f32 0.0, %v1223
  %v1225 = vpop.f32.mrb[0].mxu0
  %v1226 = vpop.f32.mrb[0].mxu0
  %v1227 = vpop.f32.mrb[0].mxu0
  %1228 = vdwg.mxu0
  %v1229 = vpack.c.bf16 %v1224, %v1176
  %v1231 = vsel %vm201, %v1229, 0
  %v1234 = vsel %vm325, %v190, 0
  %1236 = vmatprep.subr.bf16.mxu0 0
  %1237 = vmatpush1.bf16.msra.mxu0 %v1234
  %1238 = vmatprep.subr.bf16.mxu0 0
  %1239 = vmatpush1.bf16.msra.mxu0 0
  %1240 = vmatprep.subr.bf16.mxu0 0
  %1241 = vmatpush1.bf16.msra.mxu0 0
  %1242 = vmatprep.subr.bf16.mxu0 0
  %1243 = vmatpush1.bf16.msra.mxu0 0
  %1244 = vmatprep.subr.bf16.mxu0 0
  %1245 = vmatpush1.bf16.msra.mxu0 0
  %1246 = vmatprep.subr.bf16.mxu0 0
  %1247 = vmatpush1.bf16.msra.mxu0 0
  %1248 = vmatprep.subr.bf16.mxu0 0
  %1249 = vmatpush1.bf16.msra.mxu0 0
  %1250 = vmatprep.subr.bf16.mxu0 0
  %1251 = vmatpush1.bf16.msra.mxu0 0
  %1252 = vmatprep.subr.bf16.mxu0 0
  %1253 = vmatpush1.bf16.msra.mxu0 0
  %1254 = vmatprep.subr.bf16.mxu0 0
  %1255 = vmatpush1.bf16.msra.mxu0 0
  %1256 = vmatprep.subr.bf16.mxu0 0
  %1257 = vmatpush1.bf16.msra.mxu0 0
  %1258 = vmatprep.subr.bf16.mxu0 0
  %1259 = vmatpush1.bf16.msra.mxu0 0
  %1260 = vmatprep.subr.bf16.mxu0 0
  %1261 = vmatpush1.bf16.msra.mxu0 0
  %1262 = vmatprep.subr.bf16.mxu0 0
  %1263 = vmatpush1.bf16.msra.mxu0 0
  %1264 = vmatprep.subr.bf16.mxu0 0
  %1265 = vmatpush1.bf16.msra.mxu0 0
  %1266 = vmatprep.subr.bf16.mxu0 0
  %1267 = vmatpush1.bf16.msra.mxu0 0
  %1268 = vmatprep.mubr.bf16.mxu0 0
  %1269 = vmatmul.mubr.bf16.gmra.mrb[0].mxu0 %v1231
  %v1270 = vpop.f32.mrb[0].mxu0
  %v1271 = vadd.f32 0.0, %v1270
  %v1272 = vpop.f32.mrb[0].mxu0
  %v1273 = vpop.f32.mrb[0].mxu0
  %v1274 = vadd.f32 0.0, %v1273
  %v1275 = vpop.f32.mrb[0].mxu0
  %1276 = vdwg.mxu0
  %v1277 = vadd.f32 %v1005, %v1271
  %v1278 = vadd.f32 %v1006, %v1274
  %v1279 = vld [vmem:[%s7] sm:$0x1]
  %v1281 = vlaneseq
  %v1282 = vshrl.u32 %v1281, 7
  %v1283 = vsub.s32 0, %v1282
  %v1284 = vrot.slane %v1279, %v1283
  %v1286 = vadd.f32 %v1277, %v1284
  %v1287 = vadd.f32 %v1278, %v1284
  %v1288 = vunpack.c.l.bf16 %v36
  %v1289 = vunpack.c.l.bf16 %v37
  %v1290 = vadd.f32 %v1288, %v1286
  %v1291 = vadd.f32 %v1289, %v1287
  %v1292 = vld [vmem:[%s8] sm:$0x1]
  %v1293 = vld [vmem:[%s9] sm:$0x1]
  %v1294 = vsel %vm68, %v1290, 0.0
  %1295 = vadd.xlane.f32.xlu0 %v1294
  %v1296 = vpop.xlane.xlu0 %1295
  %v1297 = vsel %vm68, %v1291, 0.0
  %1298 = vadd.xlane.f32.xlu0 %v1297
  %v1299 = vpop.xlane.xlu0 %1298
  %v1300 = vrcp.pop 32.0
  %v1301 = vmul.f32 %v1296, %v1300
  %v1302 = vmul.f32 %v1299, %v1300
  %v1303 = vsub.f32 %v1290, %v1301
  %v1304 = vsub.f32 %v1291, %v1302
  %v1305 = vmul.f32 %v1303, %v1303
  %v1306 = vmul.f32 %v1304, %v1304
  %v1307 = vsel %vm68, %v1305, 0.0
  %1308 = vadd.xlane.f32.xlu0 %v1307
  %v1309 = vpop.xlane.xlu0 %1308
  %v1310 = vsel %vm68, %v1306, 0.0
  %1311 = vadd.xlane.f32.xlu0 %v1310
  %v1312 = vpop.xlane.xlu0 %1311
  %v1313 = vmul.f32 %v1309, %v1300
  %v1314 = vmul.f32 %v1312, %v1300
  %v1315 = vadd.f32 %v1313, 1e-05
  %v1316 = vadd.f32 %v1314, 1e-05
  %v1317 = vrsqrt.pop %v1315
  %v1318 = vrsqrt.pop %v1316
  %v1319 = vmul.f32 %v1303, %v1317
  %v1320 = vmul.f32 %v1304, %v1318
  %v1322 = vlaneseq
  %v1323 = vshrl.u32 %v1322, 7
  %v1324 = vsub.s32 0, %v1323
  %v1325 = vrot.slane %v1292, %v1324
  %v1327 = vmul.f32 %v1319, %v1325
  %v1328 = vmul.f32 %v1320, %v1325
  %v1330 = vlaneseq
  %v1331 = vshrl.u32 %v1330, 7
  %v1332 = vsub.s32 0, %v1331
  %v1333 = vrot.slane %v1293, %v1332
  %v1335 = vadd.f32 %v1327, %v1333
  %v1336 = vadd.f32 %v1328, %v1333
  %v1337 = vpack.c.bf16 %v1336, %v1335
  %v1339 = vunpack.c.l.b16 %v1337
  %v1340 = vunpack.c.h.b16 %v1337
  %v1341 = vpack.c.b16 %v1339, %v1339
  %v1342 = vpack.c.b16 %v1340, %v1340
  %vm1345 = vcmask 257024
  %1346 = vst.msk [vmem:[%s10] sm:$0xf] %vm1345, %v1341
  %1347 = vst.msk [vmem:[%s10 + $0x4] sm:$0xf] %vm1345, %v1342
  // Predicated region
  $region42: #{transformer_forward.16} parent=0 // pred_check
    _
  $region43: #{transformer_forward.16} parent=0 // pred_check_branch
    %1349 = sbr.rel (0) target = $region45
  $region44: #{transformer_forward.16} parent=0 // pred_region
    _
  $region45: #{transformer_forward.16} parent=0 // pred_fallthru
    _
  // Predicated region
  $region46: #{transformer_forward.16} parent=0 // pred_check
    _
  $region47: #{transformer_forward.16} parent=0 // pred_check_branch
    %1351 = sbr.rel (0) target = $region49
  $region48: #{transformer_forward.16} parent=0 // pred_region
    _
  $region49: #{transformer_forward.16} parent=0 // pred_fallthru
    _

// kernel: transformer_forward.21
$region0: #{transformer_forward.21}
  #allocation0 [shape = 'u32[]', space=smem, size = 0x4, offset = 0x4, fixed_abs, tag = 'smem constant byte address 0x4 - core index']
  #allocation1 [shape = 'u32[144,128]{1,0:T(1,128)}', space=vmem, size = 0x12000, scoped, tag = 'internal scratch']
  %s0 = inlined_call_operand.vmem [shape: bf16[16,32], index: 0, kind: input, shape index: {}]
  %s1 = inlined_call_operand.vmem [shape: bf16[32,128], index: 1, kind: input, shape index: {}]
  %s2 = inlined_call_operand.vmem [shape: f32[1,128], index: 2, kind: input, shape index: {}]
  %s3 = inlined_call_operand.vmem [shape: f32[16,128], index: 3, kind: output, shape index: {}]
  %s4 = sld [smem:[#allocation0]]
  $region22: #{transformer_forward.21} parent=0
    _
  %s6 = ssub.s32 1, %s4
  %s7 = scalar_select 0, %s6, %s4
  // Predicated region
  $region2: #{transformer_forward.21} parent=0 // pred_check
    _
  $region3: #{transformer_forward.21} parent=0 // pred_check_branch
    %9 = sbr.rel (0) target = $region5
  $region4: #{transformer_forward.21} parent=0 // pred_region
    _
  $region5: #{transformer_forward.21} parent=0 // pred_fallthru
    _
  // Predicated region
  $region6: #{transformer_forward.21} parent=0 // pred_check
    _
  $region7: #{transformer_forward.21} parent=0 // pred_check_branch
    %11 = sbr.rel (0) target = $region9
  $region8: #{transformer_forward.21} parent=0 // pred_region
    _
  $region9: #{transformer_forward.21} parent=0 // pred_fallthru
    _
  // Predicated region
  $region10: #{transformer_forward.21} parent=0 // pred_check
    _
  $region11: #{transformer_forward.21} parent=0 // pred_check_branch
    %13 = sbr.rel (0) target = $region13
  $region12: #{transformer_forward.21} parent=0 // pred_region
    _
  $region13: #{transformer_forward.21} parent=0 // pred_fallthru
    _
  %v15 = vld [vmem:[%s0] sm:$0xf]
  %v16 = vld [vmem:[%s0 + $0x4] sm:$0xf]
  %v17 = vld [vmem:[%s1] sm:$0xf]
  %v18 = vld [vmem:[%s1 + $0x4] sm:$0xf]
  %v19 = vld [vmem:[%s1 + $0x8] sm:$0xf]
  %v20 = vld [vmem:[%s1 + $0xc] sm:$0xf]
  %v21 = vld [vmem:[%s2] sm:$0x1]
  %v23 = vlaneseq
  %v24 = vshrl.u32 %v23, 7
  %v25 = vsub.s32 0, %v24
  %v26 = vrot.slane %v21, %v25
  %v30 = vunpack.c.l.b16 %v15
  %v31 = vunpack.c.l.b16 %v16
  %v32 = vpack.c.b16 %v31, %v30
  %v37 = vunpack.c.l.b16 %v17
  %v38 = vunpack.c.l.b16 %v18
  %v39 = vunpack.c.l.b16 %v19
  %v40 = vunpack.c.l.b16 %v20
  %v41 = vpack.c.b16 %v38, %v37
  %v42 = vpack.c.b16 %v40, %v39
  %vm45 = vcmask 261120
  %v47 = vsel %vm45, %v32, 0
  %49 = vmatprep.subr.bf16.mxu0 0
  %50 = vmatpush1.bf16.msra.mxu0 %v41
  %51 = vmatprep.subr.bf16.mxu0 0
  %52 = vmatpush1.bf16.msra.mxu0 %v42
  %53 = vmatprep.subr.bf16.mxu0 0
  %54 = vmatpush1.bf16.msra.mxu0 0
  %55 = vmatprep.subr.bf16.mxu0 0
  %56 = vmatpush1.bf16.msra.mxu0 0
  %57 = vmatprep.subr.bf16.mxu0 0
  %58 = vmatpush1.bf16.msra.mxu0 0
  %59 = vmatprep.subr.bf16.mxu0 0
  %60 = vmatpush1.bf16.msra.mxu0 0
  %61 = vmatprep.subr.bf16.mxu0 0
  %62 = vmatpush1.bf16.msra.mxu0 0
  %63 = vmatprep.subr.bf16.mxu0 0
  %64 = vmatpush1.bf16.msra.mxu0 0
  %65 = vmatprep.subr.bf16.mxu0 0
  %66 = vmatpush1.bf16.msra.mxu0 0
  %67 = vmatprep.subr.bf16.mxu0 0
  %68 = vmatpush1.bf16.msra.mxu0 0
  %69 = vmatprep.subr.bf16.mxu0 0
  %70 = vmatpush1.bf16.msra.mxu0 0
  %71 = vmatprep.subr.bf16.mxu0 0
  %72 = vmatpush1.bf16.msra.mxu0 0
  %73 = vmatprep.subr.bf16.mxu0 0
  %74 = vmatpush1.bf16.msra.mxu0 0
  %75 = vmatprep.subr.bf16.mxu0 0
  %76 = vmatpush1.bf16.msra.mxu0 0
  %77 = vmatprep.subr.bf16.mxu0 0
  %78 = vmatpush1.bf16.msra.mxu0 0
  %79 = vmatprep.subr.bf16.mxu0 0
  %80 = vmatpush1.bf16.msra.mxu0 0
  %81 = vmatprep.mubr.bf16.mxu0 0
  %82 = vmatmul.mubr.bf16.gmra.mrb[0].mxu0 %v47
  %v83 = vpop.f32.mrb[0].mxu0
  %v84 = vadd.f32 %v26, %v83
  %v85 = vpop.f32.mrb[0].mxu0
  %v86 = vpop.f32.mrb[0].mxu0
  %v87 = vadd.f32 %v26, %v86
  %v88 = vpop.f32.mrb[0].mxu0
  %89 = vdwg.mxu0
  %90 = vst [vmem:[%s3] sm:$0xff] %v84
  %91 = vst [vmem:[%s3 + $0x8] sm:$0xff] %v87
  // Predicated region
  $region14: #{transformer_forward.21} parent=0 // pred_check
    _
  $region15: #{transformer_forward.21} parent=0 // pred_check_branch
    %93 = sbr.rel (0) target = $region17
  $region16: #{transformer_forward.21} parent=0 // pred_region
    _
  $region17: #{transformer_forward.21} parent=0 // pred_fallthru
    _
  // Predicated region
  $region18: #{transformer_forward.21} parent=0 // pred_check
    _
  $region19: #{transformer_forward.21} parent=0 // pred_check_branch
    %95 = sbr.rel (0) target = $region21
  $region20: #{transformer_forward.21} parent=0 // pred_region
    _
  $region21: #{transformer_forward.21} parent=0 // pred_fallthru
    _

</llo_original>
